<compile_context>
chip_gen: v7x
topology: tpu7x:2x2x1
jax: 0.10.0
libtpu: 0.0.40
codegen_flags: <defaults>
</compile_context>

<pallas_src>
import functools

import jax
import jax.numpy as jnp
from jax import lax
from jax.experimental import pallas as pl
from jax.experimental.pallas import tpu as pltpu


def _round_up(v, m):
    return (v + m - 1) // m * m


# --------------------------------------------------------------------------- kernel
def bottleneck_kernel(x_ref, w1_ref, b1_ref, w2_ref, b2_ref, o_ref,
                      hpad_ref, patch_ref, *, H: int, W: int, shortcut: bool):
    # x_ref    : (1, H*W, Cin)          f32   one image, channels-last, rows flattened
    # w1_ref   : (Cin, Cmid)            bf16  folded 1x1 conv + BN weight
    # b1_ref   : (1, Cmid)              f32   folded 1x1 conv + BN bias
    # w2_ref   : (9*Cmid, Cout)         bf16  folded 3x3 conv + BN weight, row = tap*Cmid + c
    # b2_ref   : (1, Cout)              f32   folded 3x3 conv + BN bias
    # o_ref    : (1, H*W, Cout)         f32
    # hpad_ref : (H*W + 2*F, Cmid)      bf16  flattened, zero-halo-padded SiLU(cv1(x))
    # patch_ref: (H*W, 9*Cmid)          bf16  im2col patches for cv2
    Cmid = w1_ref.shape[-1]
    HW = H * W
    F = _round_up(W + 1, 8)            # front/back zero pad; interior store stays aligned
    L = HW + 2 * F

    x = x_ref[0]                                          # (HW, Cin) f32

    # ---- cv1: 1x1 conv == channel matmul (bf16 MXU operands, f32 accumulate) + SiLU
    h = jnp.dot(x.astype(jnp.bfloat16), w1_ref[...],
                preferred_element_type=jnp.float32)       # (HW, Cmid) f32
    h = h + b1_ref[...]
    h = h * jax.nn.sigmoid(h)                             # SiLU in f32 (EUP)

    # ---- zero only the O(W) halo rows; sublane-aligned interior store (F % 8 == 0)
    hpad_ref[0:F, :] = jnp.zeros((F, Cmid), jnp.bfloat16)
    hpad_ref[F + HW:L, :] = jnp.zeros((F, Cmid), jnp.bfloat16)
    hpad_ref[F:F + HW, :] = h.astype(jnp.bfloat16)

    # ---- column masks for taps that would wrap across image rows in flattened layout
    col = lax.broadcasted_iota(jnp.int32, (HW, 1), 0) % W
    not_left = col != 0                                   # apply to kx == 0 taps
    not_right = col != (W - 1)                            # apply to kx == 2 taps

    # ---- im2col: each tap is a contiguous row-slice of the flattened padded buffer
    for k in range(9):
        ky, kx = divmod(k, 3)
        start = F - (W + 1) + ky * W + kx                 # static Python int
        tap = hpad_ref[start:start + HW, :]               # (HW, Cmid) bf16, contiguous
        if kx == 0:
            tap = jnp.where(not_left, tap, jnp.zeros_like(tap))
        elif kx == 2:
            tap = jnp.where(not_right, tap, jnp.zeros_like(tap))
        patch_ref[:, k * Cmid:(k + 1) * Cmid] = tap

    # ---- cv2: one MXU matmul with K = 9*Cmid, then bias + SiLU in f32
    y = jnp.dot(patch_ref[...], w2_ref[...],
                preferred_element_type=jnp.float32)       # (HW, Cout) f32
    y = y + b2_ref[...]
    y = y * jax.nn.sigmoid(y)

    if shortcut:                                          # only emitted when Cin == Cout
        y = y + x

    o_ref[0] = y.astype(o_ref.dtype)


# --------------------------------------------------------------------------- wrapper
def bottleneck_forward(x_nchw, w1, b1, w2, b2, *, shortcut: bool):
    """x_nchw: (N, Cin, H, W) float32; returns (N, Cout, H, W) float32."""
    N, Cin, H, W = x_nchw.shape
    Cmid = w1.shape[1]
    Cout = w2.shape[2]
    # Module semantics: residual only when shortcut and in_dim == out_dim.
    use_shortcut = bool(shortcut) and (Cin == Cout)

    F = _round_up(W + 1, 8)
    L = H * W + 2 * F

    # NCHW -> NHWC -> (N, H*W, C): channels on the lane axis, rows as the matmul M dim.
    # TODO(synk): in an NHWC end-to-end model these boundary transposes disappear.
    x = jnp.transpose(x_nchw, (0, 2, 3, 1)).reshape(N, H * W, Cin)

    # One-time weight repack: bf16 MXU operands; 3x3 taps flattened for the im2col matmul.
    w1b = w1.astype(jnp.bfloat16)                          # (Cin, Cmid)
    w2b = w2.reshape(9 * Cmid, Cout).astype(jnp.bfloat16)  # (9*Cmid, Cout)
    b1f = b1.astype(jnp.float32)
    b2f = b2.astype(jnp.float32)

    kern = functools.partial(bottleneck_kernel, H=H, W=W, shortcut=use_shortcut)

    flops = 2 * N * H * W * (Cin * Cmid + 9 * Cmid * Cout)
    transcendentals = N * H * W * (Cmid + Cout)
    bytes_accessed = (4 * N * H * W * (Cin + Cout)
                      + 2 * (Cin * Cmid + 9 * Cmid * Cout)
                      + 4 * (Cmid + Cout))

    out = pl.pallas_call(
        kern,
        out_shape=jax.ShapeDtypeStruct((N, H * W, Cout), jnp.float32),
        grid=(N,),
        in_specs=[
            pl.BlockSpec((1, H * W, Cin), lambda n: (n, 0, 0)),
            pl.BlockSpec((Cin, Cmid), lambda n: (0, 0)),
            pl.BlockSpec((1, Cmid), lambda n: (0, 0)),
            pl.BlockSpec((9 * Cmid, Cout), lambda n: (0, 0)),
            pl.BlockSpec((1, Cout), lambda n: (0, 0)),
        ],
        out_specs=pl.BlockSpec((1, H * W, Cout), lambda n: (n, 0, 0)),
        scratch_shapes=[
            pltpu.VMEM((L, Cmid), jnp.bfloat16),          # flattened padded SiLU(cv1) tile
            pltpu.VMEM((H * W, 9 * Cmid), jnp.bfloat16),  # im2col patch buffer
        ],
        compiler_params=pltpu.CompilerParams(
            dimension_semantics=("parallel",)),
        cost_estimate=pl.CostEstimate(
            flops=flops, transcendentals=transcendentals,
            bytes_accessed=bytes_accessed),
    )(x, w1b, b1f, w2b, b2f)

    return jnp.transpose(out.reshape(N, H, W, Cout), (0, 3, 1, 2))


# --------------------------------------------------------------------------- params
def fold_bn(w_last_is_out, gamma, beta, mean, var, eps=1e-5):
    """Fold BatchNorm into a conv whose LAST axis is the output-channel axis."""
    scale = gamma / jnp.sqrt(var + eps)
    return w_last_is_out * scale, beta - mean * scale


def make_params(key, in_dim, out_dim, expand_ratio=0.5):
    inter_dim = int(out_dim * expand_ratio)
    k1, k2, k3, k4, k5, k6 = jax.random.split(key, 6)

    # cv1: Conv1x1(in->inter), PyTorch weight (inter, in, 1, 1) -> (in, inter)
    w1_t = jax.random.normal(k1, (inter_dim, in_dim, 1, 1), jnp.float32) * 0.3
    w1 = jnp.transpose(w1_t[:, :, 0, 0], (1, 0))                      # (Cin, Cmid)
    g1 = 1.0 + 0.1 * jax.random.normal(k2, (inter_dim,), jnp.float32)
    b1bn = 0.1 * jax.random.normal(k3, (inter_dim,), jnp.float32)
    m1 = 0.05 * jnp.arange(inter_dim, dtype=jnp.float32)
    v1 = 1.0 + 0.02 * jnp.arange(inter_dim, dtype=jnp.float32)
    w1f, b1f = fold_bn(w1, g1, b1bn, m1, v1)

    # cv2: Conv3x3(inter->out, pad=1), PyTorch weight (out, inter, 3, 3)
    w2_t = jax.random.normal(k4, (out_dim, inter_dim, 3, 3), jnp.float32) * 0.3
    # reorganize to taps: (9, Cmid, Cout), tap k = ky*3 + kx
    w2 = jnp.stack([jnp.transpose(w2_t[:, :, ky, kx], (1, 0))
                    for ky in range(3) for kx in range(3)], axis=0)
    g2 = 1.0 + 0.1 * jax.random.normal(k5, (out_dim,), jnp.float32)
    b2bn = 0.1 * jax.random.normal(k6, (out_dim,), jnp.float32)
    m2 = 0.03 * jnp.arange(out_dim, dtype=jnp.float32)
    v2 = 1.0 + 0.01 * jnp.arange(out_dim, dtype=jnp.float32)
    w2f, b2f = fold_bn(w2, g2, b2bn, m2, v2)

    return (w1f.astype(jnp.float32), b1f.reshape(1, -1).astype(jnp.float32),
            w2f.astype(jnp.float32), b2f.reshape(1, -1).astype(jnp.float32))


# --------------------------------------------------------------------------- reference
def bottleneck_reference(x_nchw, w1, b1, w2, b2, *, shortcut: bool, bf16_matmul: bool):
    """Pure-JAX reference. bf16_matmul=True mirrors the kernel's mixed precision."""
    N, Cin, H, W = x_nchw.shape
    Cout = w2.shape[2]
    use_shortcut = bool(shortcut) and (Cin == Cout)
    x = jnp.transpose(x_nchw, (0, 2, 3, 1))                 # NHWC, f32

    def mm(a, b):
        if bf16_matmul:
            a = a.astype(jnp.bfloat16)
            b = b.astype(jnp.bfloat16)
        return jnp.einsum('nhwc,cd->nhwd', a, b, preferred_element_type=jnp.float32)

    h = mm(x, w1) + b1.reshape(-1)
    h = h * jax.nn.sigmoid(h)
    if bf16_matmul:
        h = h.astype(jnp.bfloat16).astype(jnp.float32)      # match kernel's bf16 round-trip
    hp = jnp.pad(h, ((0, 0), (1, 1), (1, 1), (0, 0)))
    acc = jnp.zeros((N, H, W, Cout), jnp.float32)
    for k in range(9):
        dy, dx = divmod(k, 3)
        acc = acc + mm(hp[:, dy:dy + H, dx:dx + W, :], w2[k])
    acc = acc + b2.reshape(-1)
    acc = acc * jax.nn.sigmoid(acc)
    if use_shortcut:
        acc = acc + x
    return jnp.transpose(acc, (0, 3, 1, 2))


# --------------------------------------------------------------------------- main
if __name__ == "__main__":
    N, C, H, W = 2, 4, 16, 16           # in_dim == out_dim == 4
    shortcut = True                     # exercises the residual path (in_dim == out_dim)

    key = jax.random.PRNGKey(0)
    kx, kp = jax.random.split(key)
    x = jax.random.normal(kx, (N, C, H, W), jnp.float32)
    w1, b1, w2, b2 = make_params(kp, in_dim=C, out_dim=C, expand_ratio=0.5)

    out = bottleneck_forward(x, w1, b1, w2, b2, shortcut=shortcut)
    out = jax.block_until_ready(out)
    assert out.shape == (N, C, H, W)

    # Tight check against a reference that mirrors the kernel's bf16-matmul / f32-accumulate.
    ref_mixed = bottleneck_reference(x, w1, b1, w2, b2, shortcut=shortcut, bf16_matmul=True)
    assert jnp.max(jnp.abs(out - ref_mixed)) < 2e-3, "Pallas kernel mismatch vs mixed-precision reference"

    # Sanity check against the pure-f32 (PyTorch-equivalent) math.
    ref_f32 = bottleneck_reference(x, w1, b1, w2, b2, shortcut=shortcut, bf16_matmul=False)
    assert jnp.max(jnp.abs(out - ref_f32)) < 1e-1, "Pallas kernel deviates too far from f32 reference"

    print("KERNEL_OK")
</pallas_src>

<mosaic_0001>
module attributes {stable_mosaic.version = 11 : i64} {
  func.func @bottleneck_kernel(%arg0: i32, %arg1: memref<1x256x4xf32, #tpu.memory_space<vmem>>, %arg2: memref<4x2xbf16, #tpu.memory_space<vmem>>, %arg3: memref<1x2xf32, #tpu.memory_space<vmem>>, %arg4: memref<18x4xbf16, #tpu.memory_space<vmem>>, %arg5: memref<1x4xf32, #tpu.memory_space<vmem>>, %arg6: memref<1x256x4xf32, #tpu.memory_space<vmem>>, %arg7: memref<304x2xbf16, #tpu.memory_space<vmem>>, %arg8: memref<256x18xbf16, #tpu.memory_space<vmem>>) attributes {dimension_semantics = [#tpu.dimension_semantics<parallel>], iteration_bounds = array<i64: 2>, scalar_prefetch = 0 : i64, scratch_operands = 2 : i64, tpu.core_type = #tpu.core_type<tc>, window_params = [{transform_indices = @transform_0, window_bounds = array<i64: 1, 256, 4>}, {pipeline_mode = #tpu.pipeline_mode<synchronous>, transform_indices = @transform_1, window_bounds = array<i64: 4, 2>}, {pipeline_mode = #tpu.pipeline_mode<synchronous>, transform_indices = @transform_2, window_bounds = array<i64: 1, 2>}, {pipeline_mode = #tpu.pipeline_mode<synchronous>, transform_indices = @transform_3, window_bounds = array<i64: 18, 4>}, {pipeline_mode = #tpu.pipeline_mode<synchronous>, transform_indices = @transform_4, window_bounds = array<i64: 1, 4>}, {transform_indices = @transform_5, window_bounds = array<i64: 1, 256, 4>}]} {
    %c0 = arith.constant 0 : index
    %c0_0 = arith.constant 0 : index
    %c0_1 = arith.constant 0 : index
    %0 = vector.load %arg1[%c0, %c0_0, %c0_1] : memref<1x256x4xf32, #tpu.memory_space<vmem>>, vector<1x256x4xf32>
    %1 = vector.shape_cast %0 : vector<1x256x4xf32> to vector<256x4xf32>
    %2 = arith.truncf %1 : vector<256x4xf32> to vector<256x4xbf16>
    %c0_2 = arith.constant 0 : index
    %c0_3 = arith.constant 0 : index
    %3 = vector.load %arg2[%c0_2, %c0_3] : memref<4x2xbf16, #tpu.memory_space<vmem>>, vector<4x2xbf16>
    %cst = arith.constant dense<0.000000e+00> : vector<256x2xf32>
    %4 = tpu.matmul %2, %3, %cst {dimension_numbers = #tpu.dot_dimension_numbers<[1], [0], [0], [1], [0, 0, 1, 1], [], []>} : vector<256x4xbf16>, vector<4x2xbf16>, vector<256x2xf32> -> vector<256x2xf32>
    %c0_4 = arith.constant 0 : index
    %c0_5 = arith.constant 0 : index
    %5 = vector.load %arg3[%c0_4, %c0_5] : memref<1x2xf32, #tpu.memory_space<vmem>>, vector<1x2xf32>
    %6 = vector.broadcast %5 : vector<1x2xf32> to vector<256x2xf32>
    %7 = arith.addf %4, %6 : vector<256x2xf32>
    %8 = arith.negf %7 : vector<256x2xf32>
    %9 = math.exp %8 : vector<256x2xf32>
    %cst_6 = arith.constant 1.000000e+00 : f32
    %10 = vector.broadcast %cst_6 : f32 to vector<256x2xf32>
    %11 = arith.addf %10, %9 : vector<256x2xf32>
    %12 = arith.divf %10, %11 : vector<256x2xf32>
    %13 = arith.mulf %7, %12 : vector<256x2xf32>
    %cst_7 = arith.constant 0.000000e+00 : bf16
    %14 = vector.broadcast %cst_7 : bf16 to vector<24x2xbf16>
    %c0_8 = arith.constant 0 : index
    %c0_9 = arith.constant 0 : index
    %15 = vector.load %arg7[%c0_8, %c0_9] : memref<304x2xbf16, #tpu.memory_space<vmem>>, vector<24x2xbf16>
    tpu.vector_store %arg7[%c0_8, %c0_9], %14 {strides = array<i32>} : memref<304x2xbf16, #tpu.memory_space<vmem>>, vector<24x2xbf16>,
    %cst_10 = arith.constant 0.000000e+00 : bf16
    %16 = vector.broadcast %cst_10 : bf16 to vector<24x2xbf16>
    %c280 = arith.constant 280 : index
    %c0_11 = arith.constant 0 : index
    %17 = vector.load %arg7[%c280, %c0_11] : memref<304x2xbf16, #tpu.memory_space<vmem>>, vector<24x2xbf16>
    tpu.vector_store %arg7[%c280, %c0_11], %16 {strides = array<i32>} : memref<304x2xbf16, #tpu.memory_space<vmem>>, vector<24x2xbf16>,
    %18 = arith.truncf %13 : vector<256x2xf32> to vector<256x2xbf16>
    %c24 = arith.constant 24 : index
    %c0_12 = arith.constant 0 : index
    %19 = vector.load %arg7[%c24, %c0_12] : memref<304x2xbf16, #tpu.memory_space<vmem>>, vector<256x2xbf16>
    tpu.vector_store %arg7[%c24, %c0_12], %18 {strides = array<i32>} : memref<304x2xbf16, #tpu.memory_space<vmem>>, vector<256x2xbf16>,
    %20 = tpu.iota {dimensions = array<i32: 0>} : vector<256x1xi32>
    %c16_i32 = arith.constant 16 : i32
    %c0_i32 = arith.constant 0 : i32
    %21 = arith.cmpi eq, %c16_i32, %c0_i32 : i32
    %c1_i32 = arith.constant 1 : i32
    %22 = arith.select %21, %c1_i32, %c16_i32 : i32
    %23 = vector.broadcast %22 : i32 to vector<256x1xi32>
    %24 = arith.remsi %20, %23 : vector<256x1xi32>
    %c0_i32_13 = arith.constant 0 : i32
    %25 = vector.broadcast %c0_i32_13 : i32 to vector<256x1xi32>
    %26 = arith.cmpi ne, %24, %25 : vector<256x1xi32>
    %c0_i32_14 = arith.constant 0 : i32
    %27 = vector.broadcast %c0_i32_14 : i32 to vector<256x1xi32>
    %28 = arith.cmpi slt, %24, %27 : vector<256x1xi32>
    %c0_i32_15 = arith.constant 0 : i32
    %29 = arith.cmpi slt, %22, %c0_i32_15 : i32
    %30 = vector.broadcast %29 : i1 to vector<256x1xi1>
    %31 = vector.broadcast %30 : vector<256x1xi1> to vector<256x1xi1>
    %32 = arith.xori %28, %31 : vector<256x1xi1>
    %33 = arith.andi %32, %26 : vector<256x1xi1>
    %34 = vector.broadcast %22 : i32 to vector<256x1xi32>
    %35 = arith.addi %24, %34 : vector<256x1xi32>
    %36 = arith.select %33, %35, %24 : vector<256x1xi1>, vector<256x1xi32>
    %c0_i32_16 = arith.constant 0 : i32
    %37 = vector.broadcast %c0_i32_16 : i32 to vector<256x1xi32>
    %38 = arith.cmpi ne, %36, %37 : vector<256x1xi32>
    %c15_i32 = arith.constant 15 : i32
    %39 = vector.broadcast %c15_i32 : i32 to vector<256x1xi32>
    %40 = arith.cmpi ne, %36, %39 : vector<256x1xi32>
    %c7 = arith.constant 7 : index
    %c0_17 = arith.constant 0 : index
    %41 = vector.load %arg7[%c7, %c0_17] : memref<304x2xbf16, #tpu.memory_space<vmem>>, vector<256x2xbf16>
    %cst_18 = arith.constant 0.000000e+00 : bf16
    %42 = vector.broadcast %cst_18 : bf16 to vector<256x2xbf16>
    %43 = vector.shape_cast %38 : vector<256x1xi1> to vector<256x1xi1>
    %44 = vector.broadcast %43 : vector<256x1xi1> to vector<256x2xi1>
    %45 = arith.select %44, %41, %42 : vector<256x2xi1>, vector<256x2xbf16>
    %c0_19 = arith.constant 0 : index
    %c0_20 = arith.constant 0 : index
    %46 = vector.load %arg8[%c0_19, %c0_20] : memref<256x18xbf16, #tpu.memory_space<vmem>>, vector<256x2xbf16>
    tpu.vector_store %arg8[%c0_19, %c0_20], %45 {strides = array<i32>} : memref<256x18xbf16, #tpu.memory_space<vmem>>, vector<256x2xbf16>,
    %c8 = arith.constant 8 : index
    %c0_21 = arith.constant 0 : index
    %47 = vector.load %arg7[%c8, %c0_21] : memref<304x2xbf16, #tpu.memory_space<vmem>>, vector<256x2xbf16>
    %c0_22 = arith.constant 0 : index
    %c2 = arith.constant 2 : index
    %48 = vector.load %arg8[%c0_22, %c2] : memref<256x18xbf16, #tpu.memory_space<vmem>>, vector<256x2xbf16>
    tpu.vector_store %arg8[%c0_22, %c2], %47 {strides = array<i32>} : memref<256x18xbf16, #tpu.memory_space<vmem>>, vector<256x2xbf16>,
    %c9 = arith.constant 9 : index
    %c0_23 = arith.constant 0 : index
    %49 = vector.load %arg7[%c9, %c0_23] : memref<304x2xbf16, #tpu.memory_space<vmem>>, vector<256x2xbf16>
    %cst_24 = arith.constant 0.000000e+00 : bf16
    %50 = vector.broadcast %cst_24 : bf16 to vector<256x2xbf16>
    %51 = vector.shape_cast %40 : vector<256x1xi1> to vector<256x1xi1>
    %52 = vector.broadcast %51 : vector<256x1xi1> to vector<256x2xi1>
    %53 = arith.select %52, %49, %50 : vector<256x2xi1>, vector<256x2xbf16>
    %c0_25 = arith.constant 0 : index
    %c4 = arith.constant 4 : index
    %54 = vector.load %arg8[%c0_25, %c4] : memref<256x18xbf16, #tpu.memory_space<vmem>>, vector<256x2xbf16>
    tpu.vector_store %arg8[%c0_25, %c4], %53 {strides = array<i32>} : memref<256x18xbf16, #tpu.memory_space<vmem>>, vector<256x2xbf16>,
    %c23 = arith.constant 23 : index
    %c0_26 = arith.constant 0 : index
    %55 = vector.load %arg7[%c23, %c0_26] : memref<304x2xbf16, #tpu.memory_space<vmem>>, vector<256x2xbf16>
    %cst_27 = arith.constant 0.000000e+00 : bf16
    %56 = vector.broadcast %cst_27 : bf16 to vector<256x2xbf16>
    %57 = vector.shape_cast %38 : vector<256x1xi1> to vector<256x1xi1>
    %58 = vector.broadcast %57 : vector<256x1xi1> to vector<256x2xi1>
    %59 = arith.select %58, %55, %56 : vector<256x2xi1>, vector<256x2xbf16>
    %c0_28 = arith.constant 0 : index
    %c6 = arith.constant 6 : index
    %60 = vector.load %arg8[%c0_28, %c6] : memref<256x18xbf16, #tpu.memory_space<vmem>>, vector<256x2xbf16>
    tpu.vector_store %arg8[%c0_28, %c6], %59 {strides = array<i32>} : memref<256x18xbf16, #tpu.memory_space<vmem>>, vector<256x2xbf16>,
    %c24_29 = arith.constant 24 : index
    %c0_30 = arith.constant 0 : index
    %61 = vector.load %arg7[%c24_29, %c0_30] : memref<304x2xbf16, #tpu.memory_space<vmem>>, vector<256x2xbf16>
    %c0_31 = arith.constant 0 : index
    %c8_32 = arith.constant 8 : index
    %62 = vector.load %arg8[%c0_31, %c8_32] : memref<256x18xbf16, #tpu.memory_space<vmem>>, vector<256x2xbf16>
    tpu.vector_store %arg8[%c0_31, %c8_32], %61 {strides = array<i32>} : memref<256x18xbf16, #tpu.memory_space<vmem>>, vector<256x2xbf16>,
    %c25 = arith.constant 25 : index
    %c0_33 = arith.constant 0 : index
    %63 = vector.load %arg7[%c25, %c0_33] : memref<304x2xbf16, #tpu.memory_space<vmem>>, vector<256x2xbf16>
    %cst_34 = arith.constant 0.000000e+00 : bf16
    %64 = vector.broadcast %cst_34 : bf16 to vector<256x2xbf16>
    %65 = vector.shape_cast %40 : vector<256x1xi1> to vector<256x1xi1>
    %66 = vector.broadcast %65 : vector<256x1xi1> to vector<256x2xi1>
    %67 = arith.select %66, %63, %64 : vector<256x2xi1>, vector<256x2xbf16>
    %c0_35 = arith.constant 0 : index
    %c10 = arith.constant 10 : index
    %68 = vector.load %arg8[%c0_35, %c10] : memref<256x18xbf16, #tpu.memory_space<vmem>>, vector<256x2xbf16>
    tpu.vector_store %arg8[%c0_35, %c10], %67 {strides = array<i32>} : memref<256x18xbf16, #tpu.memory_space<vmem>>, vector<256x2xbf16>,
    %c39 = arith.constant 39 : index
    %c0_36 = arith.constant 0 : index
    %69 = vector.load %arg7[%c39, %c0_36] : memref<304x2xbf16, #tpu.memory_space<vmem>>, vector<256x2xbf16>
    %cst_37 = arith.constant 0.000000e+00 : bf16
    %70 = vector.broadcast %cst_37 : bf16 to vector<256x2xbf16>
    %71 = vector.shape_cast %38 : vector<256x1xi1> to vector<256x1xi1>
    %72 = vector.broadcast %71 : vector<256x1xi1> to vector<256x2xi1>
    %73 = arith.select %72, %69, %70 : vector<256x2xi1>, vector<256x2xbf16>
    %c0_38 = arith.constant 0 : index
    %c12 = arith.constant 12 : index
    %74 = vector.load %arg8[%c0_38, %c12] : memref<256x18xbf16, #tpu.memory_space<vmem>>, vector<256x2xbf16>
    tpu.vector_store %arg8[%c0_38, %c12], %73 {strides = array<i32>} : memref<256x18xbf16, #tpu.memory_space<vmem>>, vector<256x2xbf16>,
    %c40 = arith.constant 40 : index
    %c0_39 = arith.constant 0 : index
    %75 = vector.load %arg7[%c40, %c0_39] : memref<304x2xbf16, #tpu.memory_space<vmem>>, vector<256x2xbf16>
    %c0_40 = arith.constant 0 : index
    %c14 = arith.constant 14 : index
    %76 = vector.load %arg8[%c0_40, %c14] : memref<256x18xbf16, #tpu.memory_space<vmem>>, vector<256x2xbf16>
    tpu.vector_store %arg8[%c0_40, %c14], %75 {strides = array<i32>} : memref<256x18xbf16, #tpu.memory_space<vmem>>, vector<256x2xbf16>,
    %c41 = arith.constant 41 : index
    %c0_41 = arith.constant 0 : index
    %77 = vector.load %arg7[%c41, %c0_41] : memref<304x2xbf16, #tpu.memory_space<vmem>>, vector<256x2xbf16>
    %cst_42 = arith.constant 0.000000e+00 : bf16
    %78 = vector.broadcast %cst_42 : bf16 to vector<256x2xbf16>
    %79 = vector.shape_cast %40 : vector<256x1xi1> to vector<256x1xi1>
    %80 = vector.broadcast %79 : vector<256x1xi1> to vector<256x2xi1>
    %81 = arith.select %80, %77, %78 : vector<256x2xi1>, vector<256x2xbf16>
    %c0_43 = arith.constant 0 : index
    %c16 = arith.constant 16 : index
    %82 = vector.load %arg8[%c0_43, %c16] : memref<256x18xbf16, #tpu.memory_space<vmem>>, vector<256x2xbf16>
    tpu.vector_store %arg8[%c0_43, %c16], %81 {strides = array<i32>} : memref<256x18xbf16, #tpu.memory_space<vmem>>, vector<256x2xbf16>,
    %c0_44 = arith.constant 0 : index
    %c0_45 = arith.constant 0 : index
    %83 = vector.load %arg8[%c0_44, %c0_45] : memref<256x18xbf16, #tpu.memory_space<vmem>>, vector<256x18xbf16>
    %c0_46 = arith.constant 0 : index
    %c0_47 = arith.constant 0 : index
    %84 = vector.load %arg4[%c0_46, %c0_47] : memref<18x4xbf16, #tpu.memory_space<vmem>>, vector<18x4xbf16>
    %cst_48 = arith.constant dense<0.000000e+00> : vector<256x4xf32>
    %85 = tpu.matmul %83, %84, %cst_48 {dimension_numbers = #tpu.dot_dimension_numbers<[1], [0], [0], [1], [0, 0, 1, 1], [], []>} : vector<256x18xbf16>, vector<18x4xbf16>, vector<256x4xf32> -> vector<256x4xf32>
    %c0_49 = arith.constant 0 : index
    %c0_50 = arith.constant 0 : index
    %86 = vector.load %arg5[%c0_49, %c0_50] : memref<1x4xf32, #tpu.memory_space<vmem>>, vector<1x4xf32>
    %87 = vector.broadcast %86 : vector<1x4xf32> to vector<256x4xf32>
    %88 = arith.addf %85, %87 : vector<256x4xf32>
    %89 = arith.negf %88 : vector<256x4xf32>
    %90 = math.exp %89 : vector<256x4xf32>
    %cst_51 = arith.constant 1.000000e+00 : f32
    %91 = vector.broadcast %cst_51 : f32 to vector<256x4xf32>
    %92 = arith.addf %91, %90 : vector<256x4xf32>
    %93 = arith.divf %91, %92 : vector<256x4xf32>
    %94 = arith.mulf %88, %93 : vector<256x4xf32>
    %95 = arith.addf %94, %1 : vector<256x4xf32>
    %c0_52 = arith.constant 0 : index
    %c0_53 = arith.constant 0 : index
    %c0_54 = arith.constant 0 : index
    %96 = vector.load %arg6[%c0_52, %c0_53, %c0_54] : memref<1x256x4xf32, #tpu.memory_space<vmem>>, vector<1x256x4xf32>
    %97 = vector.shape_cast %96 : vector<1x256x4xf32> to vector<256x4xf32>
    %98 = vector.shape_cast %95 : vector<256x4xf32> to vector<1x256x4xf32>
    tpu.vector_store %arg6[%c0_52, %c0_53, %c0_54], %98 {strides = array<i32>} : memref<1x256x4xf32, #tpu.memory_space<vmem>>, vector<1x256x4xf32>,
    return
  }
  func.func @transform_0(%arg0: i32) -> (i32, i32, i32) {
    %c0_i32 = arith.constant 0 : i32
    %c0_i32_0 = arith.constant 0 : i32
    %c0_i32_1 = arith.constant 0 : i32
    return %arg0, %c0_i32, %c0_i32_0 : i32, i32, i32
  }
  func.func @transform_1(%arg0: i32) -> (i32, i32) {
    %c0_i32 = arith.constant 0 : i32
    %c0_i32_0 = arith.constant 0 : i32
    %c0_i32_1 = arith.constant 0 : i32
    return %c0_i32, %c0_i32_0 : i32, i32
  }
  func.func @transform_2(%arg0: i32) -> (i32, i32) {
    %c0_i32 = arith.constant 0 : i32
    %c0_i32_0 = arith.constant 0 : i32
    %c0_i32_1 = arith.constant 0 : i32
    return %c0_i32, %c0_i32_0 : i32, i32
  }
  func.func @transform_3(%arg0: i32) -> (i32, i32) {
    %c0_i32 = arith.constant 0 : i32
    %c0_i32_0 = arith.constant 0 : i32
    %c0_i32_1 = arith.constant 0 : i32
    return %c0_i32, %c0_i32_0 : i32, i32
  }
  func.func @transform_4(%arg0: i32) -> (i32, i32) {
    %c0_i32 = arith.constant 0 : i32
    %c0_i32_0 = arith.constant 0 : i32
    %c0_i32_1 = arith.constant 0 : i32
    return %c0_i32, %c0_i32_0 : i32, i32
  }
  func.func @transform_5(%arg0: i32) -> (i32, i32, i32) {
    %c0_i32 = arith.constant 0 : i32
    %c0_i32_0 = arith.constant 0 : i32
    %c0_i32_1 = arith.constant 0 : i32
    return %arg0, %c0_i32, %c0_i32_0 : i32, i32, i32
  }
}

</mosaic_0001>

<llo_original>
// kernel: tpu_custom_call.1
$region0: #{tpu_custom_call.1}
  #allocation0 [shape = 'u32[]', space=smem, size = 0x4, offset = 0x4, fixed_abs, tag = 'smem constant byte address 0x4 - core index']
  #allocation1 [shape = 'u32[144,128]{1,0:T(1,128)}', space=vmem, size = 0x12000, scoped, tag = 'internal scratch']
  #allocation2 [shape = 'bf16[304,2]{1,0:T(16,128)(2,1)}', space=vmem, size = 0x13000, scoped, tag = 'scratch operand']
  #allocation3 [shape = 'bf16[256,18]{1,0:T(16,128)(2,1)}', space=vmem, size = 0x10000, scoped, tag = 'scratch operand']
  %s0 = inlined_call_operand.vmem [shape: f32[2,256,4], index: 0, kind: input, shape index: {}]
  %s1 = inlined_call_operand.vmem [shape: bf16[4,2], index: 1, kind: input, shape index: {}]
  %s2 = inlined_call_operand.vmem [shape: f32[1,2], index: 2, kind: input, shape index: {}]
  %s3 = inlined_call_operand.vmem [shape: bf16[18,4], index: 3, kind: input, shape index: {}]
  %s4 = inlined_call_operand.vmem [shape: f32[1,4], index: 4, kind: input, shape index: {}]
  %s5 = inlined_call_operand.vmem [shape: f32[2,256,4], index: 5, kind: output, shape index: {}]
  %s6 = sld [smem:[#allocation0]]
  $region53: #{tpu_custom_call.1} parent=0
    _
  %s8 = ssub.s32 1, %s6
  %s9 = scalar_select 0, %s8, %s6
  loop: start=0, step=1, limit=4
  $region2: #{tpu_custom_call.1} parent=0 // loop_pre_header
    _
  $region3: #{tpu_custom_call.1} parent=0 // loop_header
    %s11 = sphi 0, %s15
    %p12 = scmp.ge.s32.totalorder %s11, 4
    %s21 = sphi 0, %s23
    %s24 = sphi 0, %s21
    %s25 = sphi 0, %s24
    %s41 = sphi 0, %s25
    %s45 = sphi 0, %s45
    %s47 = sphi 0, %s45
    %s48 = sphi 0, %s47
    %s62 = sphi 0, %s48
    %s66 = sphi 0, %s66
    %s68 = sphi 0, %s66
    %s69 = sphi 0, %s68
    %s83 = sphi 0, %s69
    %s87 = sphi 0, %s87
    %s89 = sphi 0, %s87
    %s90 = sphi 0, %s89
    %s104 = sphi 0, %s90
    %s108 = sphi 0, %s108
    %s110 = sphi 0, %s108
    %s111 = sphi 0, %s110
    %s125 = sphi 0, %s111
    %s131 = sphi 0, %s133
    %s134 = sphi 0, %s131
    %s135 = sphi 0, %s134
    %s151 = sphi 0, %s135
  $region4: #{tpu_custom_call.1} parent=0 // loop_header_branch
    %14 = sbr.rel (%p12) target = $region8
  $region5: #{tpu_custom_call.1} parent=0 // loop_body
    %s16 = ssub.s32 %s11, 1
    %s17 = ssub.s32 %s11, 2
    %s18 = sadd.s32 %s11, 1
    %s19 = ssub.s32 %s11, %s18
    %p20 = scmp.eq.s32.totalorder %s19, 0
    %s22 = sadd.s32 %s21, 1
    %s23 = scalar_select %p20, %s21, %s22
    %p26 = pneg %p20
    %p27 = scmp.eq.s32.totalorder %s11, 1
    %p28 = por %p26, %p27
    %p29 = scmp.ne.s32.totalorder %s21, %s24
    %p30 = scmp.eq.s32.totalorder %s11, 0
    %p31 = por %p29, %p30
    %p32 = scmp.ne.s32.totalorder %s21, %s24
    %p33 = scmp.eq.s32.totalorder %s16, 1
    %p34 = por %p32, %p33
    %p35 = scmp.ne.s32.totalorder %s24, %s25
    %p36 = scmp.eq.s32.totalorder %s16, 0
    %p37 = por %p35, %p36
    %p38 = scmp.ne.s32.totalorder %s24, %s25
    %p39 = scmp.eq.s32.totalorder %s17, 1
    %p40 = por %p38, %p39
    %p42 = scmp.ne.s32.totalorder %s25, %s41
    %p43 = scmp.eq.s32.totalorder %s17, 0
    %p44 = por %p42, %p43
    %s46 = sadd.s32 %s45, 1
    %p49 = scmp.eq.s32.totalorder %s11, 1
    %p50 = scmp.ne.s32.totalorder %s45, %s47
    %p51 = scmp.eq.s32.totalorder %s11, 0
    %p52 = por %p50, %p51
    %p53 = scmp.ne.s32.totalorder %s45, %s47
    %p54 = scmp.eq.s32.totalorder %s16, 1
    %p55 = por %p53, %p54
    %p56 = scmp.ne.s32.totalorder %s47, %s48
    %p57 = scmp.eq.s32.totalorder %s16, 0
    %p58 = por %p56, %p57
    %p59 = scmp.ne.s32.totalorder %s47, %s48
    %p60 = scmp.eq.s32.totalorder %s17, 1
    %p61 = por %p59, %p60
    %p63 = scmp.ne.s32.totalorder %s48, %s62
    %p64 = scmp.eq.s32.totalorder %s17, 0
    %p65 = por %p63, %p64
    %s67 = sadd.s32 %s66, 1
    %p70 = scmp.eq.s32.totalorder %s11, 1
    %p71 = scmp.ne.s32.totalorder %s66, %s68
    %p72 = scmp.eq.s32.totalorder %s11, 0
    %p73 = por %p71, %p72
    %p74 = scmp.ne.s32.totalorder %s66, %s68
    %p75 = scmp.eq.s32.totalorder %s16, 1
    %p76 = por %p74, %p75
    %p77 = scmp.ne.s32.totalorder %s68, %s69
    %p78 = scmp.eq.s32.totalorder %s16, 0
    %p79 = por %p77, %p78
    %p80 = scmp.ne.s32.totalorder %s68, %s69
    %p81 = scmp.eq.s32.totalorder %s17, 1
    %p82 = por %p80, %p81
    %p84 = scmp.ne.s32.totalorder %s69, %s83
    %p85 = scmp.eq.s32.totalorder %s17, 0
    %p86 = por %p84, %p85
    %s88 = sadd.s32 %s87, 1
    %p91 = scmp.eq.s32.totalorder %s11, 1
    %p92 = scmp.ne.s32.totalorder %s87, %s89
    %p93 = scmp.eq.s32.totalorder %s11, 0
    %p94 = por %p92, %p93
    %p95 = scmp.ne.s32.totalorder %s87, %s89
    %p96 = scmp.eq.s32.totalorder %s16, 1
    %p97 = por %p95, %p96
    %p98 = scmp.ne.s32.totalorder %s89, %s90
    %p99 = scmp.eq.s32.totalorder %s16, 0
    %p100 = por %p98, %p99
    %p101 = scmp.ne.s32.totalorder %s89, %s90
    %p102 = scmp.eq.s32.totalorder %s17, 1
    %p103 = por %p101, %p102
    %p105 = scmp.ne.s32.totalorder %s90, %s104
    %p106 = scmp.eq.s32.totalorder %s17, 0
    %p107 = por %p105, %p106
    %s109 = sadd.s32 %s108, 1
    %p112 = scmp.eq.s32.totalorder %s11, 1
    %p113 = scmp.ne.s32.totalorder %s108, %s110
    %p114 = scmp.eq.s32.totalorder %s11, 0
    %p115 = por %p113, %p114
    %p116 = scmp.ne.s32.totalorder %s108, %s110
    %p117 = scmp.eq.s32.totalorder %s16, 1
    %p118 = por %p116, %p117
    %p119 = scmp.ne.s32.totalorder %s110, %s111
    %p120 = scmp.eq.s32.totalorder %s16, 0
    %p121 = por %p119, %p120
    %p122 = scmp.ne.s32.totalorder %s110, %s111
    %p123 = scmp.eq.s32.totalorder %s17, 1
    %p124 = por %p122, %p123
    %p126 = scmp.ne.s32.totalorder %s111, %s125
    %p127 = scmp.eq.s32.totalorder %s17, 0
    %p128 = por %p126, %p127
    %s129 = ssub.s32 %s11, %s18
    %p130 = scmp.eq.s32.totalorder %s129, 0
    %s132 = sadd.s32 %s131, 1
    %s133 = scalar_select %p130, %s131, %s132
    %p136 = pneg %p130
    %p137 = scmp.eq.s32.totalorder %s11, 1
    %p138 = por %p136, %p137
    %p139 = scmp.ne.s32.totalorder %s131, %s134
    %p140 = scmp.eq.s32.totalorder %s11, 0
    %p141 = por %p139, %p140
    %p142 = scmp.ne.s32.totalorder %s131, %s134
    %p143 = scmp.eq.s32.totalorder %s16, 1
    %p144 = por %p142, %p143
    %p145 = scmp.ne.s32.totalorder %s134, %s135
    %p146 = scmp.eq.s32.totalorder %s16, 0
    %p147 = por %p145, %p146
    %p148 = scmp.ne.s32.totalorder %s134, %s135
    %p149 = scmp.eq.s32.totalorder %s17, 1
    %p150 = por %p148, %p149
    %p152 = scmp.ne.s32.totalorder %s135, %s151
    %p153 = scmp.eq.s32.totalorder %s17, 0
    %p154 = por %p152, %p153
    %p155 = scmp.le.s32.totalorder 1, %s11
    %p156 = scmp.lt.s32.totalorder %s11, 3
    %p157 = pnand %p155, %p156
    %p158 = pneg %p157
    // Predicated region
    $region9: #{tpu_custom_call.1} parent=5 // pred_check
      _
    $region10: #{tpu_custom_call.1} parent=5 // pred_check_branch
      %160 = sbr.rel (%p157) target = $region12
    $region11: #{tpu_custom_call.1} parent=5 // pred_region
      %s161 = ssub.s32 %s11, 1
      // Predicated region
      $region13: #{tpu_custom_call.1} parent=11 // pred_check
        %p162 = pneg %p58
      $region14: #{tpu_custom_call.1} parent=11 // pred_check_branch
        %164 = sbr.rel (%p162) target = $region16
      $region15: #{tpu_custom_call.1} parent=11 // pred_region
        _
      $region16: #{tpu_custom_call.1} parent=11 // pred_fallthru
        _
      // Predicated region
      $region17: #{tpu_custom_call.1} parent=11 // pred_check
        %p165 = pneg %p79
      $region18: #{tpu_custom_call.1} parent=11 // pred_check_branch
        %167 = sbr.rel (%p165) target = $region20
      $region19: #{tpu_custom_call.1} parent=11 // pred_region
        _
      $region20: #{tpu_custom_call.1} parent=11 // pred_fallthru
        _
      // Predicated region
      $region21: #{tpu_custom_call.1} parent=11 // pred_check
        %p168 = pneg %p100
      $region22: #{tpu_custom_call.1} parent=11 // pred_check_branch
        %170 = sbr.rel (%p168) target = $region24
      $region23: #{tpu_custom_call.1} parent=11 // pred_region
        _
      $region24: #{tpu_custom_call.1} parent=11 // pred_fallthru
        _
      // Predicated region
      $region25: #{tpu_custom_call.1} parent=11 // pred_check
        %p171 = pneg %p121
      $region26: #{tpu_custom_call.1} parent=11 // pred_check_branch
        %173 = sbr.rel (%p171) target = $region28
      $region27: #{tpu_custom_call.1} parent=11 // pred_region
        _
      $region28: #{tpu_custom_call.1} parent=11 // pred_fallthru
        _
    $region12: #{tpu_custom_call.1} parent=5 // pred_fallthru
      _
    %p174 = scmp.lt.s32.totalorder %s11, 2
    // Predicated region
    $region29: #{tpu_custom_call.1} parent=5 // pred_check
      %p175 = pneg %p174
    $region30: #{tpu_custom_call.1} parent=5 // pred_check_branch
      %177 = sbr.rel (%p175) target = $region32
    $region31: #{tpu_custom_call.1} parent=5 // pred_region
      // Predicated region
      $region33: #{tpu_custom_call.1} parent=31 // pred_check
        %p178 = pneg %p31
      $region34: #{tpu_custom_call.1} parent=31 // pred_check_branch
        %180 = sbr.rel (%p178) target = $region36
      $region35: #{tpu_custom_call.1} parent=31 // pred_region
        %p181 = scmp.lt.s32.totalorder %s11, 1
        %s182 = scalar_select %p181, %s11, 1
        %s183 = smul.addr %s182, 32
        %s184 = smul.addr %s183, 8
        %s185 = scalar_lea.vmem %s0, %s184
      $region36: #{tpu_custom_call.1} parent=31 // pred_fallthru
        _
    $region32: #{tpu_custom_call.1} parent=5 // pred_fallthru
      _
    %p186 = scmp.le.s32.totalorder 1, %s11
    %p187 = scmp.lt.s32.totalorder %s11, 3
    %p188 = pnand %p186, %p187
    %p189 = pneg %p188
    // Predicated region
    $region37: #{tpu_custom_call.1} parent=5 // pred_check
      _
    $region38: #{tpu_custom_call.1} parent=5 // pred_check_branch
      %191 = sbr.rel (%p188) target = $region40
    $region39: #{tpu_custom_call.1} parent=5 // pred_region
      %s192 = ssub.s32 %s11, 1
      %p193 = scmp.lt.s32.totalorder %s16, 1
      %s194 = scalar_select %p193, %s16, 1
      %s195 = smul.addr %s194, 32
      %s196 = smul.addr %s195, 8
      %s197 = scalar_lea.vmem %s0, %s196
      %p198 = pneg %p37
      %p199 = pneg %p34
      %p200 = pneg %p58
      %p201 = pneg %p55
      %p202 = pneg %p79
      %p203 = pneg %p76
      %p204 = pneg %p100
      %p205 = pneg %p97
      %p206 = pneg %p121
      %p207 = pneg %p118
      %p208 = pneg %p147
      %p209 = pneg %p144
      %p210 = scmp.lt.s32.totalorder %s16, 1
      %s211 = scalar_select %p210, %s16, 1
      %s212 = smul.addr %s211, 32
      %s213 = smul.addr %s212, 8
      %s214 = scalar_lea.vmem %s5, %s213
      %p215 = scmp.lt.s32.totalorder %s16, 1
      %s216 = scalar_select %p215, %s16, 1
      %s217 = smul.addr %s216, 32
      %s218 = smul.addr %s217, 8
      %s219 = scalar_lea.vmem %s0, %s218
      %p220 = scmp.lt.s32.totalorder %s16, 1
      %s221 = scalar_select %p220, %s16, 1
      %s222 = smul.addr %s221, 32
      %s223 = smul.addr %s222, 8
      %s224 = scalar_lea.vmem %s5, %s223
      %v228 = vld [vmem:[%s219] sm:$0xff]
      %v229 = vld [vmem:[%s219 + $0x8] sm:$0xff]
      %v230 = vld [vmem:[%s219 + $0x10] sm:$0xff]
      %v231 = vld [vmem:[%s219 + $0x18] sm:$0xff]
      %v232 = vld [vmem:[%s219 + $0x20] sm:$0xff]
      %v233 = vld [vmem:[%s219 + $0x28] sm:$0xff]
      %v234 = vld [vmem:[%s219 + $0x30] sm:$0xff]
      %v235 = vld [vmem:[%s219 + $0x38] sm:$0xff]
      %v236 = vld [vmem:[%s219 + $0x40] sm:$0xff]
      %v237 = vld [vmem:[%s219 + $0x48] sm:$0xff]
      %v238 = vld [vmem:[%s219 + $0x50] sm:$0xff]
      %v239 = vld [vmem:[%s219 + $0x58] sm:$0xff]
      %v240 = vld [vmem:[%s219 + $0x60] sm:$0xff]
      %v241 = vld [vmem:[%s219 + $0x68] sm:$0xff]
      %v242 = vld [vmem:[%s219 + $0x70] sm:$0xff]
      %v243 = vld [vmem:[%s219 + $0x78] sm:$0xff]
      %v244 = vld [vmem:[%s219 + $0x80] sm:$0xff]
      %v245 = vld [vmem:[%s219 + $0x88] sm:$0xff]
      %v246 = vld [vmem:[%s219 + $0x90] sm:$0xff]
      %v247 = vld [vmem:[%s219 + $0x98] sm:$0xff]
      %v248 = vld [vmem:[%s219 + $0xa0] sm:$0xff]
      %v249 = vld [vmem:[%s219 + $0xa8] sm:$0xff]
      %v250 = vld [vmem:[%s219 + $0xb0] sm:$0xff]
      %v251 = vld [vmem:[%s219 + $0xb8] sm:$0xff]
      %v252 = vld [vmem:[%s219 + $0xc0] sm:$0xff]
      %v253 = vld [vmem:[%s219 + $0xc8] sm:$0xff]
      %v254 = vld [vmem:[%s219 + $0xd0] sm:$0xff]
      %v255 = vld [vmem:[%s219 + $0xd8] sm:$0xff]
      %v256 = vld [vmem:[%s219 + $0xe0] sm:$0xff]
      %v257 = vld [vmem:[%s219 + $0xe8] sm:$0xff]
      %v258 = vld [vmem:[%s219 + $0xf0] sm:$0xff]
      %v259 = vld [vmem:[%s219 + $0xf8] sm:$0xff]
      %v260 = vpack.c.bf16 %v229, %v228
      %v261 = vpack.c.bf16 %v231, %v230
      %v262 = vpack.c.bf16 %v233, %v232
      %v263 = vpack.c.bf16 %v235, %v234
      %v264 = vpack.c.bf16 %v237, %v236
      %v265 = vpack.c.bf16 %v239, %v238
      %v266 = vpack.c.bf16 %v241, %v240
      %v267 = vpack.c.bf16 %v243, %v242
      %v268 = vpack.c.bf16 %v245, %v244
      %v269 = vpack.c.bf16 %v247, %v246
      %v270 = vpack.c.bf16 %v249, %v248
      %v271 = vpack.c.bf16 %v251, %v250
      %v272 = vpack.c.bf16 %v253, %v252
      %v273 = vpack.c.bf16 %v255, %v254
      %v274 = vpack.c.bf16 %v257, %v256
      %v275 = vpack.c.bf16 %v259, %v258
      %v276 = vld [vmem:[%s1] sm:$0x3]
      %v277 = vld [vmem:[%s2] sm:$0x1]
      %v279 = vlaneseq
      %v280 = vshrl.u32 %v279, 7
      %v281 = vsub.s32 0, %v280
      %v282 = vrot.slane %v277, %v281
      %vm284 = vcmask 31744
      %v286 = vsel %vm284, %v260, 0
      %v289 = vsel %vm284, %v261, 0
      %v292 = vsel %vm284, %v262, 0
      %v295 = vsel %vm284, %v263, 0
      %v298 = vsel %vm284, %v264, 0
      %v301 = vsel %vm284, %v265, 0
      %v304 = vsel %vm284, %v266, 0
      %v307 = vsel %vm284, %v267, 0
      %v310 = vsel %vm284, %v268, 0
      %v313 = vsel %vm284, %v269, 0
      %v316 = vsel %vm284, %v270, 0
      %v319 = vsel %vm284, %v271, 0
      %v322 = vsel %vm284, %v272, 0
      %v325 = vsel %vm284, %v273, 0
      %v328 = vsel %vm284, %v274, 0
      %v331 = vsel %vm284, %v275, 0
      %vm333 = vcmask 1041408
      %v335 = vsel %vm333, %v276, 0
      %337 = vmatprep.subr.bf16.mxu0 0
      %338 = vmatpush1.bf16.msra.mxu0 %v335
      %339 = vmatprep.subr.bf16.mxu0 0
      %340 = vmatpush1.bf16.msra.mxu0 0
      %341 = vmatprep.subr.bf16.mxu0 0
      %342 = vmatpush1.bf16.msra.mxu0 0
      %343 = vmatprep.subr.bf16.mxu0 0
      %344 = vmatpush1.bf16.msra.mxu0 0
      %345 = vmatprep.subr.bf16.mxu0 0
      %346 = vmatpush1.bf16.msra.mxu0 0
      %347 = vmatprep.subr.bf16.mxu0 0
      %348 = vmatpush1.bf16.msra.mxu0 0
      %349 = vmatprep.subr.bf16.mxu0 0
      %350 = vmatpush1.bf16.msra.mxu0 0
      %351 = vmatprep.subr.bf16.mxu0 0
      %352 = vmatpush1.bf16.msra.mxu0 0
      %353 = vmatprep.subr.bf16.mxu0 0
      %354 = vmatpush1.bf16.msra.mxu0 0
      %355 = vmatprep.subr.bf16.mxu0 0
      %356 = vmatpush1.bf16.msra.mxu0 0
      %357 = vmatprep.subr.bf16.mxu0 0
      %358 = vmatpush1.bf16.msra.mxu0 0
      %359 = vmatprep.subr.bf16.mxu0 0
      %360 = vmatpush1.bf16.msra.mxu0 0
      %361 = vmatprep.subr.bf16.mxu0 0
      %362 = vmatpush1.bf16.msra.mxu0 0
      %363 = vmatprep.subr.bf16.mxu0 0
      %364 = vmatpush1.bf16.msra.mxu0 0
      %365 = vmatprep.subr.bf16.mxu0 0
      %366 = vmatpush1.bf16.msra.mxu0 0
      %367 = vmatprep.subr.bf16.mxu0 0
      %368 = vmatpush1.bf16.msra.mxu0 0
      %369 = vmatprep.mubr.bf16.mxu0 0
      %370 = vmatmul.mubr.bf16.gmra.mrb[0].mxu0 %v286
      %v371 = vpop.f32.mrb[0].mxu0
      %v372 = vadd.f32 %v282, %v371
      %v373 = vpop.f32.mrb[0].mxu0
      %v374 = vpop.f32.mrb[0].mxu0
      %v375 = vadd.f32 %v282, %v374
      %v376 = vpop.f32.mrb[0].mxu0
      %377 = vmatprep.mubr.bf16.mxu0 0
      %378 = vmatmul.mubr.bf16.gmra.mrb[0].mxu0 %v289
      %v379 = vpop.f32.mrb[0].mxu0
      %v380 = vadd.f32 %v282, %v379
      %v381 = vpop.f32.mrb[0].mxu0
      %v382 = vpop.f32.mrb[0].mxu0
      %v383 = vadd.f32 %v282, %v382
      %v384 = vpop.f32.mrb[0].mxu0
      %385 = vmatprep.mubr.bf16.mxu0 0
      %386 = vmatmul.mubr.bf16.gmra.mrb[0].mxu0 %v292
      %v387 = vpop.f32.mrb[0].mxu0
      %v388 = vadd.f32 %v282, %v387
      %v389 = vpop.f32.mrb[0].mxu0
      %v390 = vpop.f32.mrb[0].mxu0
      %v391 = vadd.f32 %v282, %v390
      %v392 = vpop.f32.mrb[0].mxu0
      %393 = vmatprep.mubr.bf16.mxu0 0
      %394 = vmatmul.mubr.bf16.gmra.mrb[0].mxu0 %v295
      %v395 = vpop.f32.mrb[0].mxu0
      %v396 = vadd.f32 %v282, %v395
      %v397 = vpop.f32.mrb[0].mxu0
      %v398 = vpop.f32.mrb[0].mxu0
      %v399 = vadd.f32 %v282, %v398
      %v400 = vpop.f32.mrb[0].mxu0
      %401 = vmatprep.mubr.bf16.mxu0 0
      %402 = vmatmul.mubr.bf16.gmra.mrb[0].mxu0 %v298
      %v403 = vpop.f32.mrb[0].mxu0
      %v404 = vadd.f32 %v282, %v403
      %v405 = vpop.f32.mrb[0].mxu0
      %v406 = vpop.f32.mrb[0].mxu0
      %v407 = vadd.f32 %v282, %v406
      %v408 = vpop.f32.mrb[0].mxu0
      %409 = vmatprep.mubr.bf16.mxu0 0
      %410 = vmatmul.mubr.bf16.gmra.mrb[0].mxu0 %v301
      %v411 = vpop.f32.mrb[0].mxu0
      %v412 = vadd.f32 %v282, %v411
      %v413 = vpop.f32.mrb[0].mxu0
      %v414 = vpop.f32.mrb[0].mxu0
      %v415 = vadd.f32 %v282, %v414
      %v416 = vpop.f32.mrb[0].mxu0
      %417 = vmatprep.mubr.bf16.mxu0 0
      %418 = vmatmul.mubr.bf16.gmra.mrb[0].mxu0 %v304
      %v419 = vpop.f32.mrb[0].mxu0
      %v420 = vadd.f32 %v282, %v419
      %v421 = vpop.f32.mrb[0].mxu0
      %v422 = vpop.f32.mrb[0].mxu0
      %v423 = vadd.f32 %v282, %v422
      %v424 = vpop.f32.mrb[0].mxu0
      %425 = vmatprep.mubr.bf16.mxu0 0
      %426 = vmatmul.mubr.bf16.gmra.mrb[0].mxu0 %v307
      %v427 = vpop.f32.mrb[0].mxu0
      %v428 = vadd.f32 %v282, %v427
      %v429 = vpop.f32.mrb[0].mxu0
      %v430 = vpop.f32.mrb[0].mxu0
      %v431 = vadd.f32 %v282, %v430
      %v432 = vpop.f32.mrb[0].mxu0
      %433 = vmatprep.mubr.bf16.mxu0 0
      %434 = vmatmul.mubr.bf16.gmra.mrb[0].mxu0 %v310
      %v435 = vpop.f32.mrb[0].mxu0
      %v436 = vadd.f32 %v282, %v435
      %v437 = vpop.f32.mrb[0].mxu0
      %v438 = vpop.f32.mrb[0].mxu0
      %v439 = vadd.f32 %v282, %v438
      %v440 = vpop.f32.mrb[0].mxu0
      %441 = vmatprep.mubr.bf16.mxu0 0
      %442 = vmatmul.mubr.bf16.gmra.mrb[0].mxu0 %v313
      %v443 = vpop.f32.mrb[0].mxu0
      %v444 = vadd.f32 %v282, %v443
      %v445 = vpop.f32.mrb[0].mxu0
      %v446 = vpop.f32.mrb[0].mxu0
      %v447 = vadd.f32 %v282, %v446
      %v448 = vpop.f32.mrb[0].mxu0
      %449 = vmatprep.mubr.bf16.mxu0 0
      %450 = vmatmul.mubr.bf16.gmra.mrb[0].mxu0 %v316
      %v451 = vpop.f32.mrb[0].mxu0
      %v452 = vadd.f32 %v282, %v451
      %v453 = vpop.f32.mrb[0].mxu0
      %v454 = vpop.f32.mrb[0].mxu0
      %v455 = vadd.f32 %v282, %v454
      %v456 = vpop.f32.mrb[0].mxu0
      %457 = vmatprep.mubr.bf16.mxu0 0
      %458 = vmatmul.mubr.bf16.gmra.mrb[0].mxu0 %v319
      %v459 = vpop.f32.mrb[0].mxu0
      %v460 = vadd.f32 %v282, %v459
      %v461 = vpop.f32.mrb[0].mxu0
      %v462 = vpop.f32.mrb[0].mxu0
      %v463 = vadd.f32 %v282, %v462
      %v464 = vpop.f32.mrb[0].mxu0
      %465 = vmatprep.mubr.bf16.mxu0 0
      %466 = vmatmul.mubr.bf16.gmra.mrb[0].mxu0 %v322
      %v467 = vpop.f32.mrb[0].mxu0
      %v468 = vadd.f32 %v282, %v467
      %v469 = vpop.f32.mrb[0].mxu0
      %v470 = vpop.f32.mrb[0].mxu0
      %v471 = vadd.f32 %v282, %v470
      %v472 = vpop.f32.mrb[0].mxu0
      %473 = vmatprep.mubr.bf16.mxu0 0
      %474 = vmatmul.mubr.bf16.gmra.mrb[0].mxu0 %v325
      %v475 = vpop.f32.mrb[0].mxu0
      %v476 = vadd.f32 %v282, %v475
      %v477 = vpop.f32.mrb[0].mxu0
      %v478 = vpop.f32.mrb[0].mxu0
      %v479 = vadd.f32 %v282, %v478
      %v480 = vpop.f32.mrb[0].mxu0
      %481 = vmatprep.mubr.bf16.mxu0 0
      %482 = vmatmul.mubr.bf16.gmra.mrb[0].mxu0 %v328
      %v483 = vpop.f32.mrb[0].mxu0
      %v484 = vadd.f32 %v282, %v483
      %v485 = vpop.f32.mrb[0].mxu0
      %v486 = vpop.f32.mrb[0].mxu0
      %v487 = vadd.f32 %v282, %v486
      %v488 = vpop.f32.mrb[0].mxu0
      %489 = vmatprep.mubr.bf16.mxu0 0
      %490 = vmatmul.mubr.bf16.gmra.mrb[0].mxu0 %v331
      %v491 = vpop.f32.mrb[0].mxu0
      %v492 = vadd.f32 %v282, %v491
      %v493 = vpop.f32.mrb[0].mxu0
      %v494 = vpop.f32.mrb[0].mxu0
      %v495 = vadd.f32 %v282, %v494
      %v496 = vpop.f32.mrb[0].mxu0
      %497 = vdwg.mxu0
      %v498 = vxor.u32 %v372, 2147483648
      %v499 = vxor.u32 %v375, 2147483648
      %v500 = vxor.u32 %v380, 2147483648
      %v501 = vxor.u32 %v383, 2147483648
      %v502 = vxor.u32 %v388, 2147483648
      %v503 = vxor.u32 %v391, 2147483648
      %v504 = vxor.u32 %v396, 2147483648
      %v505 = vxor.u32 %v399, 2147483648
      %v506 = vxor.u32 %v404, 2147483648
      %v507 = vxor.u32 %v407, 2147483648
      %v508 = vxor.u32 %v412, 2147483648
      %v509 = vxor.u32 %v415, 2147483648
      %v510 = vxor.u32 %v420, 2147483648
      %v511 = vxor.u32 %v423, 2147483648
      %v512 = vxor.u32 %v428, 2147483648
      %v513 = vxor.u32 %v431, 2147483648
      %v514 = vxor.u32 %v436, 2147483648
      %v515 = vxor.u32 %v439, 2147483648
      %v516 = vxor.u32 %v444, 2147483648
      %v517 = vxor.u32 %v447, 2147483648
      %v518 = vxor.u32 %v452, 2147483648
      %v519 = vxor.u32 %v455, 2147483648
      %v520 = vxor.u32 %v460, 2147483648
      %v521 = vxor.u32 %v463, 2147483648
      %v522 = vxor.u32 %v468, 2147483648
      %v523 = vxor.u32 %v471, 2147483648
      %v524 = vxor.u32 %v476, 2147483648
      %v525 = vxor.u32 %v479, 2147483648
      %v526 = vxor.u32 %v484, 2147483648
      %v527 = vxor.u32 %v487, 2147483648
      %v528 = vxor.u32 %v492, 2147483648
      %v529 = vxor.u32 %v495, 2147483648
      %v530 = vmul.f32 %v498, 1.442695
      %v531 = vpow.pop %v530
      %v532 = vmul.f32 %v499, 1.442695
      %v533 = vpow.pop %v532
      %v534 = vmul.f32 %v500, 1.442695
      %v535 = vpow.pop %v534
      %v536 = vmul.f32 %v501, 1.442695
      %v537 = vpow.pop %v536
      %v538 = vmul.f32 %v502, 1.442695
      %v539 = vpow.pop %v538
      %v540 = vmul.f32 %v503, 1.442695
      %v541 = vpow.pop %v540
      %v542 = vmul.f32 %v504, 1.442695
      %v543 = vpow.pop %v542
      %v544 = vmul.f32 %v505, 1.442695
      %v545 = vpow.pop %v544
      %v546 = vmul.f32 %v506, 1.442695
      %v547 = vpow.pop %v546
      %v548 = vmul.f32 %v507, 1.442695
      %v549 = vpow.pop %v548
      %v550 = vmul.f32 %v508, 1.442695
      %v551 = vpow.pop %v550
      %v552 = vmul.f32 %v509, 1.442695
      %v553 = vpow.pop %v552
      %v554 = vmul.f32 %v510, 1.442695
      %v555 = vpow.pop %v554
      %v556 = vmul.f32 %v511, 1.442695
      %v557 = vpow.pop %v556
      %v558 = vmul.f32 %v512, 1.442695
      %v559 = vpow.pop %v558
      %v560 = vmul.f32 %v513, 1.442695
      %v561 = vpow.pop %v560
      %v562 = vmul.f32 %v514, 1.442695
      %v563 = vpow.pop %v562
      %v564 = vmul.f32 %v515, 1.442695
      %v565 = vpow.pop %v564
      %v566 = vmul.f32 %v516, 1.442695
      %v567 = vpow.pop %v566
      %v568 = vmul.f32 %v517, 1.442695
      %v569 = vpow.pop %v568
      %v570 = vmul.f32 %v518, 1.442695
      %v571 = vpow.pop %v570
      %v572 = vmul.f32 %v519, 1.442695
      %v573 = vpow.pop %v572
      %v574 = vmul.f32 %v520, 1.442695
      %v575 = vpow.pop %v574
      %v576 = vmul.f32 %v521, 1.442695
      %v577 = vpow.pop %v576
      %v578 = vmul.f32 %v522, 1.442695
      %v579 = vpow.pop %v578
      %v580 = vmul.f32 %v523, 1.442695
      %v581 = vpow.pop %v580
      %v582 = vmul.f32 %v524, 1.442695
      %v583 = vpow.pop %v582
      %v584 = vmul.f32 %v525, 1.442695
      %v585 = vpow.pop %v584
      %v586 = vmul.f32 %v526, 1.442695
      %v587 = vpow.pop %v586
      %v588 = vmul.f32 %v527, 1.442695
      %v589 = vpow.pop %v588
      %v590 = vmul.f32 %v528, 1.442695
      %v591 = vpow.pop %v590
      %v592 = vmul.f32 %v529, 1.442695
      %v593 = vpow.pop %v592
      %v594 = vadd.f32 %v531, 1.0
      %v595 = vadd.f32 %v533, 1.0
      %v596 = vadd.f32 %v535, 1.0
      %v597 = vadd.f32 %v537, 1.0
      %v598 = vadd.f32 %v539, 1.0
      %v599 = vadd.f32 %v541, 1.0
      %v600 = vadd.f32 %v543, 1.0
      %v601 = vadd.f32 %v545, 1.0
      %v602 = vadd.f32 %v547, 1.0
      %v603 = vadd.f32 %v549, 1.0
      %v604 = vadd.f32 %v551, 1.0
      %v605 = vadd.f32 %v553, 1.0
      %v606 = vadd.f32 %v555, 1.0
      %v607 = vadd.f32 %v557, 1.0
      %v608 = vadd.f32 %v559, 1.0
      %v609 = vadd.f32 %v561, 1.0
      %v610 = vadd.f32 %v563, 1.0
      %v611 = vadd.f32 %v565, 1.0
      %v612 = vadd.f32 %v567, 1.0
      %v613 = vadd.f32 %v569, 1.0
      %v614 = vadd.f32 %v571, 1.0
      %v615 = vadd.f32 %v573, 1.0
      %v616 = vadd.f32 %v575, 1.0
      %v617 = vadd.f32 %v577, 1.0
      %v618 = vadd.f32 %v579, 1.0
      %v619 = vadd.f32 %v581, 1.0
      %v620 = vadd.f32 %v583, 1.0
      %v621 = vadd.f32 %v585, 1.0
      %v622 = vadd.f32 %v587, 1.0
      %v623 = vadd.f32 %v589, 1.0
      %v624 = vadd.f32 %v591, 1.0
      %v625 = vadd.f32 %v593, 1.0
      %v626 = vrcp.pop %v594
      %v627 = vmul.f32 1.0, %v626
      %v628 = vrcp.pop %v595
      %v629 = vmul.f32 1.0, %v628
      %v630 = vrcp.pop %v596
      %v631 = vmul.f32 1.0, %v630
      %v632 = vrcp.pop %v597
      %v633 = vmul.f32 1.0, %v632
      %v634 = vrcp.pop %v598
      %v635 = vmul.f32 1.0, %v634
      %v636 = vrcp.pop %v599
      %v637 = vmul.f32 1.0, %v636
      %v638 = vrcp.pop %v600
      %v639 = vmul.f32 1.0, %v638
      %v640 = vrcp.pop %v601
      %v641 = vmul.f32 1.0, %v640
      %v642 = vrcp.pop %v602
      %v643 = vmul.f32 1.0, %v642
      %v644 = vrcp.pop %v603
      %v645 = vmul.f32 1.0, %v644
      %v646 = vrcp.pop %v604
      %v647 = vmul.f32 1.0, %v646
      %v648 = vrcp.pop %v605
      %v649 = vmul.f32 1.0, %v648
      %v650 = vrcp.pop %v606
      %v651 = vmul.f32 1.0, %v650
      %v652 = vrcp.pop %v607
      %v653 = vmul.f32 1.0, %v652
      %v654 = vrcp.pop %v608
      %v655 = vmul.f32 1.0, %v654
      %v656 = vrcp.pop %v609
      %v657 = vmul.f32 1.0, %v656
      %v658 = vrcp.pop %v610
      %v659 = vmul.f32 1.0, %v658
      %v660 = vrcp.pop %v611
      %v661 = vmul.f32 1.0, %v660
      %v662 = vrcp.pop %v612
      %v663 = vmul.f32 1.0, %v662
      %v664 = vrcp.pop %v613
      %v665 = vmul.f32 1.0, %v664
      %v666 = vrcp.pop %v614
      %v667 = vmul.f32 1.0, %v666
      %v668 = vrcp.pop %v615
      %v669 = vmul.f32 1.0, %v668
      %v670 = vrcp.pop %v616
      %v671 = vmul.f32 1.0, %v670
      %v672 = vrcp.pop %v617
      %v673 = vmul.f32 1.0, %v672
      %v674 = vrcp.pop %v618
      %v675 = vmul.f32 1.0, %v674
      %v676 = vrcp.pop %v619
      %v677 = vmul.f32 1.0, %v676
      %v678 = vrcp.pop %v620
      %v679 = vmul.f32 1.0, %v678
      %v680 = vrcp.pop %v621
      %v681 = vmul.f32 1.0, %v680
      %v682 = vrcp.pop %v622
      %v683 = vmul.f32 1.0, %v682
      %v684 = vrcp.pop %v623
      %v685 = vmul.f32 1.0, %v684
      %v686 = vrcp.pop %v624
      %v687 = vmul.f32 1.0, %v686
      %v688 = vrcp.pop %v625
      %v689 = vmul.f32 1.0, %v688
      %v690 = vmul.f32 %v372, %v627
      %v691 = vmul.f32 %v375, %v629
      %v692 = vmul.f32 %v380, %v631
      %v693 = vmul.f32 %v383, %v633
      %v694 = vmul.f32 %v388, %v635
      %v695 = vmul.f32 %v391, %v637
      %v696 = vmul.f32 %v396, %v639
      %v697 = vmul.f32 %v399, %v641
      %v698 = vmul.f32 %v404, %v643
      %v699 = vmul.f32 %v407, %v645
      %v700 = vmul.f32 %v412, %v647
      %v701 = vmul.f32 %v415, %v649
      %v702 = vmul.f32 %v420, %v651
      %v703 = vmul.f32 %v423, %v653
      %v704 = vmul.f32 %v428, %v655
      %v705 = vmul.f32 %v431, %v657
      %v706 = vmul.f32 %v436, %v659
      %v707 = vmul.f32 %v439, %v661
      %v708 = vmul.f32 %v444, %v663
      %v709 = vmul.f32 %v447, %v665
      %v710 = vmul.f32 %v452, %v667
      %v711 = vmul.f32 %v455, %v669
      %v712 = vmul.f32 %v460, %v671
      %v713 = vmul.f32 %v463, %v673
      %v714 = vmul.f32 %v468, %v675
      %v715 = vmul.f32 %v471, %v677
      %v716 = vmul.f32 %v476, %v679
      %v717 = vmul.f32 %v479, %v681
      %v718 = vmul.f32 %v484, %v683
      %v719 = vmul.f32 %v487, %v685
      %v720 = vmul.f32 %v492, %v687
      %v721 = vmul.f32 %v495, %v689
      %vm722 = vcmask 15360
      %723 = vst.msk [vmem:[#allocation2] sm:$0xff] %vm722, 0
      %vm724 = vcmask 11264
      %725 = vst.msk [vmem:[#allocation2 + $0x8] sm:$0xf] %vm724, 0
      %vm726 = vcmask 15364
      %727 = vst.msk [vmem:[#allocation2 + $0x88] sm:$0xf0] %vm726, 0
      %728 = vst.msk [vmem:[#allocation2 + $0x90] sm:$0xff] %vm722, 0
      %v729 = vpack.c.bf16 %v691, %v690
      %v730 = vpack.c.bf16 %v693, %v692
      %v731 = vpack.c.bf16 %v695, %v694
      %v732 = vpack.c.bf16 %v697, %v696
      %v733 = vpack.c.bf16 %v699, %v698
      %v734 = vpack.c.bf16 %v701, %v700
      %v735 = vpack.c.bf16 %v703, %v702
      %v736 = vpack.c.bf16 %v705, %v704
      %v737 = vpack.c.bf16 %v707, %v706
      %v738 = vpack.c.bf16 %v709, %v708
      %v739 = vpack.c.bf16 %v711, %v710
      %v740 = vpack.c.bf16 %v713, %v712
      %v741 = vpack.c.bf16 %v715, %v714
      %v742 = vpack.c.bf16 %v717, %v716
      %v743 = vpack.c.bf16 %v719, %v718
      %v744 = vpack.c.bf16 %v721, %v720
      %vm761 = vcmask 1043456
      %v762 = vrot.slane %v729, 4
      %v763 = vrot.slane %v730, 4
      %v764 = vsel %vm761, %v762, %v763
      %v765 = vrot.slane %v731, 4
      %v766 = vsel %vm761, %v763, %v765
      %v767 = vrot.slane %v732, 4
      %v768 = vsel %vm761, %v765, %v767
      %v769 = vrot.slane %v733, 4
      %v770 = vsel %vm761, %v767, %v769
      %v771 = vrot.slane %v734, 4
      %v772 = vsel %vm761, %v769, %v771
      %v773 = vrot.slane %v735, 4
      %v774 = vsel %vm761, %v771, %v773
      %v775 = vrot.slane %v736, 4
      %v776 = vsel %vm761, %v773, %v775
      %v777 = vrot.slane %v737, 4
      %v778 = vsel %vm761, %v775, %v777
      %v779 = vrot.slane %v738, 4
      %v780 = vsel %vm761, %v777, %v779
      %v781 = vrot.slane %v739, 4
      %v782 = vsel %vm761, %v779, %v781
      %v783 = vrot.slane %v740, 4
      %v784 = vsel %vm761, %v781, %v783
      %v785 = vrot.slane %v741, 4
      %v786 = vsel %vm761, %v783, %v785
      %v787 = vrot.slane %v742, 4
      %v788 = vsel %vm761, %v785, %v787
      %v789 = vrot.slane %v743, 4
      %v790 = vsel %vm761, %v787, %v789
      %v791 = vrot.slane %v744, 4
      %v792 = vsel %vm761, %v789, %v791
      %810 = vst.msk [vmem:[#allocation2 + $0x8] sm:$0xf0] %vm726, %v762
      %811 = vst.msk [vmem:[#allocation2 + $0x10] sm:$0xff] %vm722, %v764
      %812 = vst.msk [vmem:[#allocation2 + $0x18] sm:$0xff] %vm722, %v766
      %813 = vst.msk [vmem:[#allocation2 + $0x20] sm:$0xff] %vm722, %v768
      %814 = vst.msk [vmem:[#allocation2 + $0x28] sm:$0xff] %vm722, %v770
      %815 = vst.msk [vmem:[#allocation2 + $0x30] sm:$0xff] %vm722, %v772
      %816 = vst.msk [vmem:[#allocation2 + $0x38] sm:$0xff] %vm722, %v774
      %817 = vst.msk [vmem:[#allocation2 + $0x40] sm:$0xff] %vm722, %v776
      %818 = vst.msk [vmem:[#allocation2 + $0x48] sm:$0xff] %vm722, %v778
      %819 = vst.msk [vmem:[#allocation2 + $0x50] sm:$0xff] %vm722, %v780
      %820 = vst.msk [vmem:[#allocation2 + $0x58] sm:$0xff] %vm722, %v782
      %821 = vst.msk [vmem:[#allocation2 + $0x60] sm:$0xff] %vm722, %v784
      %822 = vst.msk [vmem:[#allocation2 + $0x68] sm:$0xff] %vm722, %v786
      %823 = vst.msk [vmem:[#allocation2 + $0x70] sm:$0xff] %vm722, %v788
      %824 = vst.msk [vmem:[#allocation2 + $0x78] sm:$0xff] %vm722, %v790
      %825 = vst.msk [vmem:[#allocation2 + $0x80] sm:$0xff] %vm722, %v792
      %826 = vst.msk [vmem:[#allocation2 + $0x88] sm:$0xf] %vm724, %v791
      %v827 = vlaneseq
      %v828 = vshrl.u32 %v827, 7
      %v829 = vadd.s32 %v828, 8
      %v830 = vadd.s32 %v828, 16
      %v831 = vadd.s32 %v828, 24
      %v832 = vadd.s32 %v828, 32
      %v833 = vadd.s32 %v828, 40
      %v834 = vadd.s32 %v828, 48
      %v835 = vadd.s32 %v828, 56
      %v836 = vadd.s32 %v828, 64
      %v837 = vadd.s32 %v828, 72
      %v838 = vadd.s32 %v828, 80
      %v839 = vadd.s32 %v828, 88
      %v840 = vadd.s32 %v828, 96
      %v841 = vadd.s32 %v828, 104
      %v842 = vadd.s32 %v828, 112
      %v843 = vadd.s32 %v828, 120
      %v844 = vadd.s32 %v828, 128
      %v845 = vadd.s32 %v828, 136
      %v846 = vadd.s32 %v828, 144
      %v847 = vadd.s32 %v828, 152
      %v848 = vadd.s32 %v828, 160
      %v849 = vadd.s32 %v828, 168
      %v850 = vadd.s32 %v828, 176
      %v851 = vadd.s32 %v828, 184
      %v852 = vadd.s32 %v828, 192
      %v853 = vadd.s32 %v828, 200
      %v854 = vadd.s32 %v828, 208
      %v855 = vadd.s32 %v828, 216
      %v856 = vadd.s32 %v828, 224
      %v857 = vadd.s32 %v828, 232
      %v858 = vadd.s32 %v828, 240
      %v859 = vadd.s32 %v828, 248
      %vm860 = vcmp.lt.s32.totalorder %v828, 0
      %v861 = vsub.s32 0, %v828
      %v862 = vsel %vm860, %v861, %v828
      %v863 = vshrl.u32 %v862, 4
      %v864 = vand.u32 %v862, 15
      %v865 = vsub.s32 0, %v864
      %v866 = vsel %vm860, %v865, %v864
      %vm867 = vcmp.lt.s32.totalorder %v829, 0
      %v868 = vsub.s32 0, %v829
      %v869 = vsel %vm867, %v868, %v829
      %v870 = vshrl.u32 %v869, 4
      %v871 = vand.u32 %v869, 15
      %v872 = vsub.s32 0, %v871
      %v873 = vsel %vm867, %v872, %v871
      %vm874 = vcmp.lt.s32.totalorder %v830, 0
      %v875 = vsub.s32 0, %v830
      %v876 = vsel %vm874, %v875, %v830
      %v877 = vshrl.u32 %v876, 4
      %v878 = vand.u32 %v876, 15
      %v879 = vsub.s32 0, %v878
      %v880 = vsel %vm874, %v879, %v878
      %vm881 = vcmp.lt.s32.totalorder %v831, 0
      %v882 = vsub.s32 0, %v831
      %v883 = vsel %vm881, %v882, %v831
      %v884 = vshrl.u32 %v883, 4
      %v885 = vand.u32 %v883, 15
      %v886 = vsub.s32 0, %v885
      %v887 = vsel %vm881, %v886, %v885
      %vm888 = vcmp.lt.s32.totalorder %v832, 0
      %v889 = vsub.s32 0, %v832
      %v890 = vsel %vm888, %v889, %v832
      %v891 = vshrl.u32 %v890, 4
      %v892 = vand.u32 %v890, 15
      %v893 = vsub.s32 0, %v892
      %v894 = vsel %vm888, %v893, %v892
      %vm895 = vcmp.lt.s32.totalorder %v833, 0
      %v896 = vsub.s32 0, %v833
      %v897 = vsel %vm895, %v896, %v833
      %v898 = vshrl.u32 %v897, 4
      %v899 = vand.u32 %v897, 15
      %v900 = vsub.s32 0, %v899
      %v901 = vsel %vm895, %v900, %v899
      %vm902 = vcmp.lt.s32.totalorder %v834, 0
      %v903 = vsub.s32 0, %v834
      %v904 = vsel %vm902, %v903, %v834
      %v905 = vshrl.u32 %v904, 4
      %v906 = vand.u32 %v904, 15
      %v907 = vsub.s32 0, %v906
      %v908 = vsel %vm902, %v907, %v906
      %vm909 = vcmp.lt.s32.totalorder %v835, 0
      %v910 = vsub.s32 0, %v835
      %v911 = vsel %vm909, %v910, %v835
      %v912 = vshrl.u32 %v911, 4
      %v913 = vand.u32 %v911, 15
      %v914 = vsub.s32 0, %v913
      %v915 = vsel %vm909, %v914, %v913
      %vm916 = vcmp.lt.s32.totalorder %v836, 0
      %v917 = vsub.s32 0, %v836
      %v918 = vsel %vm916, %v917, %v836
      %v919 = vshrl.u32 %v918, 4
      %v920 = vand.u32 %v918, 15
      %v921 = vsub.s32 0, %v920
      %v922 = vsel %vm916, %v921, %v920
      %vm923 = vcmp.lt.s32.totalorder %v837, 0
      %v924 = vsub.s32 0, %v837
      %v925 = vsel %vm923, %v924, %v837
      %v926 = vshrl.u32 %v925, 4
      %v927 = vand.u32 %v925, 15
      %v928 = vsub.s32 0, %v927
      %v929 = vsel %vm923, %v928, %v927
      %vm930 = vcmp.lt.s32.totalorder %v838, 0
      %v931 = vsub.s32 0, %v838
      %v932 = vsel %vm930, %v931, %v838
      %v933 = vshrl.u32 %v932, 4
      %v934 = vand.u32 %v932, 15
      %v935 = vsub.s32 0, %v934
      %v936 = vsel %vm930, %v935, %v934
      %vm937 = vcmp.lt.s32.totalorder %v839, 0
      %v938 = vsub.s32 0, %v839
      %v939 = vsel %vm937, %v938, %v839
      %v940 = vshrl.u32 %v939, 4
      %v941 = vand.u32 %v939, 15
      %v942 = vsub.s32 0, %v941
      %v943 = vsel %vm937, %v942, %v941
      %vm944 = vcmp.lt.s32.totalorder %v840, 0
      %v945 = vsub.s32 0, %v840
      %v946 = vsel %vm944, %v945, %v840
      %v947 = vshrl.u32 %v946, 4
      %v948 = vand.u32 %v946, 15
      %v949 = vsub.s32 0, %v948
      %v950 = vsel %vm944, %v949, %v948
      %vm951 = vcmp.lt.s32.totalorder %v841, 0
      %v952 = vsub.s32 0, %v841
      %v953 = vsel %vm951, %v952, %v841
      %v954 = vshrl.u32 %v953, 4
      %v955 = vand.u32 %v953, 15
      %v956 = vsub.s32 0, %v955
      %v957 = vsel %vm951, %v956, %v955
      %vm958 = vcmp.lt.s32.totalorder %v842, 0
      %v959 = vsub.s32 0, %v842
      %v960 = vsel %vm958, %v959, %v842
      %v961 = vshrl.u32 %v960, 4
      %v962 = vand.u32 %v960, 15
      %v963 = vsub.s32 0, %v962
      %v964 = vsel %vm958, %v963, %v962
      %vm965 = vcmp.lt.s32.totalorder %v843, 0
      %v966 = vsub.s32 0, %v843
      %v967 = vsel %vm965, %v966, %v843
      %v968 = vshrl.u32 %v967, 4
      %v969 = vand.u32 %v967, 15
      %v970 = vsub.s32 0, %v969
      %v971 = vsel %vm965, %v970, %v969
      %vm972 = vcmp.lt.s32.totalorder %v844, 0
      %v973 = vsub.s32 0, %v844
      %v974 = vsel %vm972, %v973, %v844
      %v975 = vshrl.u32 %v974, 4
      %v976 = vand.u32 %v974, 15
      %v977 = vsub.s32 0, %v976
      %v978 = vsel %vm972, %v977, %v976
      %vm979 = vcmp.lt.s32.totalorder %v845, 0
      %v980 = vsub.s32 0, %v845
      %v981 = vsel %vm979, %v980, %v845
      %v982 = vshrl.u32 %v981, 4
      %v983 = vand.u32 %v981, 15
      %v984 = vsub.s32 0, %v983
      %v985 = vsel %vm979, %v984, %v983
      %vm986 = vcmp.lt.s32.totalorder %v846, 0
      %v987 = vsub.s32 0, %v846
      %v988 = vsel %vm986, %v987, %v846
      %v989 = vshrl.u32 %v988, 4
      %v990 = vand.u32 %v988, 15
      %v991 = vsub.s32 0, %v990
      %v992 = vsel %vm986, %v991, %v990
      %vm993 = vcmp.lt.s32.totalorder %v847, 0
      %v994 = vsub.s32 0, %v847
      %v995 = vsel %vm993, %v994, %v847
      %v996 = vshrl.u32 %v995, 4
      %v997 = vand.u32 %v995, 15
      %v998 = vsub.s32 0, %v997
      %v999 = vsel %vm993, %v998, %v997
      %vm1000 = vcmp.lt.s32.totalorder %v848, 0
      %v1001 = vsub.s32 0, %v848
      %v1002 = vsel %vm1000, %v1001, %v848
      %v1003 = vshrl.u32 %v1002, 4
      %v1004 = vand.u32 %v1002, 15
      %v1005 = vsub.s32 0, %v1004
      %v1006 = vsel %vm1000, %v1005, %v1004
      %vm1007 = vcmp.lt.s32.totalorder %v849, 0
      %v1008 = vsub.s32 0, %v849
      %v1009 = vsel %vm1007, %v1008, %v849
      %v1010 = vshrl.u32 %v1009, 4
      %v1011 = vand.u32 %v1009, 15
      %v1012 = vsub.s32 0, %v1011
      %v1013 = vsel %vm1007, %v1012, %v1011
      %vm1014 = vcmp.lt.s32.totalorder %v850, 0
      %v1015 = vsub.s32 0, %v850
      %v1016 = vsel %vm1014, %v1015, %v850
      %v1017 = vshrl.u32 %v1016, 4
      %v1018 = vand.u32 %v1016, 15
      %v1019 = vsub.s32 0, %v1018
      %v1020 = vsel %vm1014, %v1019, %v1018
      %vm1021 = vcmp.lt.s32.totalorder %v851, 0
      %v1022 = vsub.s32 0, %v851
      %v1023 = vsel %vm1021, %v1022, %v851
      %v1024 = vshrl.u32 %v1023, 4
      %v1025 = vand.u32 %v1023, 15
      %v1026 = vsub.s32 0, %v1025
      %v1027 = vsel %vm1021, %v1026, %v1025
      %vm1028 = vcmp.lt.s32.totalorder %v852, 0
      %v1029 = vsub.s32 0, %v852
      %v1030 = vsel %vm1028, %v1029, %v852
      %v1031 = vshrl.u32 %v1030, 4
      %v1032 = vand.u32 %v1030, 15
      %v1033 = vsub.s32 0, %v1032
      %v1034 = vsel %vm1028, %v1033, %v1032
      %vm1035 = vcmp.lt.s32.totalorder %v853, 0
      %v1036 = vsub.s32 0, %v853
      %v1037 = vsel %vm1035, %v1036, %v853
      %v1038 = vshrl.u32 %v1037, 4
      %v1039 = vand.u32 %v1037, 15
      %v1040 = vsub.s32 0, %v1039
      %v1041 = vsel %vm1035, %v1040, %v1039
      %vm1042 = vcmp.lt.s32.totalorder %v854, 0
      %v1043 = vsub.s32 0, %v854
      %v1044 = vsel %vm1042, %v1043, %v854
      %v1045 = vshrl.u32 %v1044, 4
      %v1046 = vand.u32 %v1044, 15
      %v1047 = vsub.s32 0, %v1046
      %v1048 = vsel %vm1042, %v1047, %v1046
      %vm1049 = vcmp.lt.s32.totalorder %v855, 0
      %v1050 = vsub.s32 0, %v855
      %v1051 = vsel %vm1049, %v1050, %v855
      %v1052 = vshrl.u32 %v1051, 4
      %v1053 = vand.u32 %v1051, 15
      %v1054 = vsub.s32 0, %v1053
      %v1055 = vsel %vm1049, %v1054, %v1053
      %vm1056 = vcmp.lt.s32.totalorder %v856, 0
      %v1057 = vsub.s32 0, %v856
      %v1058 = vsel %vm1056, %v1057, %v856
      %v1059 = vshrl.u32 %v1058, 4
      %v1060 = vand.u32 %v1058, 15
      %v1061 = vsub.s32 0, %v1060
      %v1062 = vsel %vm1056, %v1061, %v1060
      %vm1063 = vcmp.lt.s32.totalorder %v857, 0
      %v1064 = vsub.s32 0, %v857
      %v1065 = vsel %vm1063, %v1064, %v857
      %v1066 = vshrl.u32 %v1065, 4
      %v1067 = vand.u32 %v1065, 15
      %v1068 = vsub.s32 0, %v1067
      %v1069 = vsel %vm1063, %v1068, %v1067
      %vm1070 = vcmp.lt.s32.totalorder %v858, 0
      %v1071 = vsub.s32 0, %v858
      %v1072 = vsel %vm1070, %v1071, %v858
      %v1073 = vshrl.u32 %v1072, 4
      %v1074 = vand.u32 %v1072, 15
      %v1075 = vsub.s32 0, %v1074
      %v1076 = vsel %vm1070, %v1075, %v1074
      %vm1077 = vcmp.lt.s32.totalorder %v859, 0
      %v1078 = vsub.s32 0, %v859
      %v1079 = vsel %vm1077, %v1078, %v859
      %v1080 = vshrl.u32 %v1079, 4
      %v1081 = vand.u32 %v1079, 15
      %v1082 = vsub.s32 0, %v1081
      %v1083 = vsel %vm1077, %v1082, %v1081
      %vm1084 = vcmp.ne.s32.totalorder %v866, 0
      %vm1085 = vcmp.ne.s32.totalorder %v873, 0
      %vm1086 = vcmp.ne.s32.totalorder %v880, 0
      %vm1087 = vcmp.ne.s32.totalorder %v887, 0
      %vm1088 = vcmp.ne.s32.totalorder %v894, 0
      %vm1089 = vcmp.ne.s32.totalorder %v901, 0
      %vm1090 = vcmp.ne.s32.totalorder %v908, 0
      %vm1091 = vcmp.ne.s32.totalorder %v915, 0
      %vm1092 = vcmp.ne.s32.totalorder %v922, 0
      %vm1093 = vcmp.ne.s32.totalorder %v929, 0
      %vm1094 = vcmp.ne.s32.totalorder %v936, 0
      %vm1095 = vcmp.ne.s32.totalorder %v943, 0
      %vm1096 = vcmp.ne.s32.totalorder %v950, 0
      %vm1097 = vcmp.ne.s32.totalorder %v957, 0
      %vm1098 = vcmp.ne.s32.totalorder %v964, 0
      %vm1099 = vcmp.ne.s32.totalorder %v971, 0
      %vm1100 = vcmp.ne.s32.totalorder %v978, 0
      %vm1101 = vcmp.ne.s32.totalorder %v985, 0
      %vm1102 = vcmp.ne.s32.totalorder %v992, 0
      %vm1103 = vcmp.ne.s32.totalorder %v999, 0
      %vm1104 = vcmp.ne.s32.totalorder %v1006, 0
      %vm1105 = vcmp.ne.s32.totalorder %v1013, 0
      %vm1106 = vcmp.ne.s32.totalorder %v1020, 0
      %vm1107 = vcmp.ne.s32.totalorder %v1027, 0
      %vm1108 = vcmp.ne.s32.totalorder %v1034, 0
      %vm1109 = vcmp.ne.s32.totalorder %v1041, 0
      %vm1110 = vcmp.ne.s32.totalorder %v1048, 0
      %vm1111 = vcmp.ne.s32.totalorder %v1055, 0
      %vm1112 = vcmp.ne.s32.totalorder %v1062, 0
      %vm1113 = vcmp.ne.s32.totalorder %v1069, 0
      %vm1114 = vcmp.ne.s32.totalorder %v1076, 0
      %vm1115 = vcmp.ne.s32.totalorder %v1083, 0
      %vm1116 = vcmp.lt.s32.totalorder %v866, 0
      %vm1117 = vcmp.lt.s32.totalorder %v873, 0
      %vm1118 = vcmp.lt.s32.totalorder %v880, 0
      %vm1119 = vcmp.lt.s32.totalorder %v887, 0
      %vm1120 = vcmp.lt.s32.totalorder %v894, 0
      %vm1121 = vcmp.lt.s32.totalorder %v901, 0
      %vm1122 = vcmp.lt.s32.totalorder %v908, 0
      %vm1123 = vcmp.lt.s32.totalorder %v915, 0
      %vm1124 = vcmp.lt.s32.totalorder %v922, 0
      %vm1125 = vcmp.lt.s32.totalorder %v929, 0
      %vm1126 = vcmp.lt.s32.totalorder %v936, 0
      %vm1127 = vcmp.lt.s32.totalorder %v943, 0
      %vm1128 = vcmp.lt.s32.totalorder %v950, 0
      %vm1129 = vcmp.lt.s32.totalorder %v957, 0
      %vm1130 = vcmp.lt.s32.totalorder %v964, 0
      %vm1131 = vcmp.lt.s32.totalorder %v971, 0
      %vm1132 = vcmp.lt.s32.totalorder %v978, 0
      %vm1133 = vcmp.lt.s32.totalorder %v985, 0
      %vm1134 = vcmp.lt.s32.totalorder %v992, 0
      %vm1135 = vcmp.lt.s32.totalorder %v999, 0
      %vm1136 = vcmp.lt.s32.totalorder %v1006, 0
      %vm1137 = vcmp.lt.s32.totalorder %v1013, 0
      %vm1138 = vcmp.lt.s32.totalorder %v1020, 0
      %vm1139 = vcmp.lt.s32.totalorder %v1027, 0
      %vm1140 = vcmp.lt.s32.totalorder %v1034, 0
      %vm1141 = vcmp.lt.s32.totalorder %v1041, 0
      %vm1142 = vcmp.lt.s32.totalorder %v1048, 0
      %vm1143 = vcmp.lt.s32.totalorder %v1055, 0
      %vm1144 = vcmp.lt.s32.totalorder %v1062, 0
      %vm1145 = vcmp.lt.s32.totalorder %v1069, 0
      %vm1146 = vcmp.lt.s32.totalorder %v1076, 0
      %vm1147 = vcmp.lt.s32.totalorder %v1083, 0
      %vm1148 = vmand %vm1116, %vm1084
      %vm1149 = vmand %vm1117, %vm1085
      %vm1150 = vmand %vm1118, %vm1086
      %vm1151 = vmand %vm1119, %vm1087
      %vm1152 = vmand %vm1120, %vm1088
      %vm1153 = vmand %vm1121, %vm1089
      %vm1154 = vmand %vm1122, %vm1090
      %vm1155 = vmand %vm1123, %vm1091
      %vm1156 = vmand %vm1124, %vm1092
      %vm1157 = vmand %vm1125, %vm1093
      %vm1158 = vmand %vm1126, %vm1094
      %vm1159 = vmand %vm1127, %vm1095
      %vm1160 = vmand %vm1128, %vm1096
      %vm1161 = vmand %vm1129, %vm1097
      %vm1162 = vmand %vm1130, %vm1098
      %vm1163 = vmand %vm1131, %vm1099
      %vm1164 = vmand %vm1132, %vm1100
      %vm1165 = vmand %vm1133, %vm1101
      %vm1166 = vmand %vm1134, %vm1102
      %vm1167 = vmand %vm1135, %vm1103
      %vm1168 = vmand %vm1136, %vm1104
      %vm1169 = vmand %vm1137, %vm1105
      %vm1170 = vmand %vm1138, %vm1106
      %vm1171 = vmand %vm1139, %vm1107
      %vm1172 = vmand %vm1140, %vm1108
      %vm1173 = vmand %vm1141, %vm1109
      %vm1174 = vmand %vm1142, %vm1110
      %vm1175 = vmand %vm1143, %vm1111
      %vm1176 = vmand %vm1144, %vm1112
      %vm1177 = vmand %vm1145, %vm1113
      %vm1178 = vmand %vm1146, %vm1114
      %vm1179 = vmand %vm1147, %vm1115
      %v1180 = vadd.s32 %v866, 16
      %v1181 = vadd.s32 %v873, 16
      %v1182 = vadd.s32 %v880, 16
      %v1183 = vadd.s32 %v887, 16
      %v1184 = vadd.s32 %v894, 16
      %v1185 = vadd.s32 %v901, 16
      %v1186 = vadd.s32 %v908, 16
      %v1187 = vadd.s32 %v915, 16
      %v1188 = vadd.s32 %v922, 16
      %v1189 = vadd.s32 %v929, 16
      %v1190 = vadd.s32 %v936, 16
      %v1191 = vadd.s32 %v943, 16
      %v1192 = vadd.s32 %v950, 16
      %v1193 = vadd.s32 %v957, 16
      %v1194 = vadd.s32 %v964, 16
      %v1195 = vadd.s32 %v971, 16
      %v1196 = vadd.s32 %v978, 16
      %v1197 = vadd.s32 %v985, 16
      %v1198 = vadd.s32 %v992, 16
      %v1199 = vadd.s32 %v999, 16
      %v1200 = vadd.s32 %v1006, 16
      %v1201 = vadd.s32 %v1013, 16
      %v1202 = vadd.s32 %v1020, 16
      %v1203 = vadd.s32 %v1027, 16
      %v1204 = vadd.s32 %v1034, 16
      %v1205 = vadd.s32 %v1041, 16
      %v1206 = vadd.s32 %v1048, 16
      %v1207 = vadd.s32 %v1055, 16
      %v1208 = vadd.s32 %v1062, 16
      %v1209 = vadd.s32 %v1069, 16
      %v1210 = vadd.s32 %v1076, 16
      %v1211 = vadd.s32 %v1083, 16
      %v1212 = vsel %vm1148, %v1180, %v866
      %v1213 = vsel %vm1149, %v1181, %v873
      %v1214 = vsel %vm1150, %v1182, %v880
      %v1215 = vsel %vm1151, %v1183, %v887
      %v1216 = vsel %vm1152, %v1184, %v894
      %v1217 = vsel %vm1153, %v1185, %v901
      %v1218 = vsel %vm1154, %v1186, %v908
      %v1219 = vsel %vm1155, %v1187, %v915
      %v1220 = vsel %vm1156, %v1188, %v922
      %v1221 = vsel %vm1157, %v1189, %v929
      %v1222 = vsel %vm1158, %v1190, %v936
      %v1223 = vsel %vm1159, %v1191, %v943
      %v1224 = vsel %vm1160, %v1192, %v950
      %v1225 = vsel %vm1161, %v1193, %v957
      %v1226 = vsel %vm1162, %v1194, %v964
      %v1227 = vsel %vm1163, %v1195, %v971
      %v1228 = vsel %vm1164, %v1196, %v978
      %v1229 = vsel %vm1165, %v1197, %v985
      %v1230 = vsel %vm1166, %v1198, %v992
      %v1231 = vsel %vm1167, %v1199, %v999
      %v1232 = vsel %vm1168, %v1200, %v1006
      %v1233 = vsel %vm1169, %v1201, %v1013
      %v1234 = vsel %vm1170, %v1202, %v1020
      %v1235 = vsel %vm1171, %v1203, %v1027
      %v1236 = vsel %vm1172, %v1204, %v1034
      %v1237 = vsel %vm1173, %v1205, %v1041
      %v1238 = vsel %vm1174, %v1206, %v1048
      %v1239 = vsel %vm1175, %v1207, %v1055
      %v1240 = vsel %vm1176, %v1208, %v1062
      %v1241 = vsel %vm1177, %v1209, %v1069
      %v1242 = vsel %vm1178, %v1210, %v1076
      %v1243 = vsel %vm1179, %v1211, %v1083
      %vm1244 = vcmp.ne.s32.totalorder %v1212, 0
      %vm1245 = vcmp.ne.s32.totalorder %v1213, 0
      %vm1246 = vcmp.ne.s32.totalorder %v1214, 0
      %vm1247 = vcmp.ne.s32.totalorder %v1215, 0
      %vm1248 = vcmp.ne.s32.totalorder %v1216, 0
      %vm1249 = vcmp.ne.s32.totalorder %v1217, 0
      %vm1250 = vcmp.ne.s32.totalorder %v1218, 0
      %vm1251 = vcmp.ne.s32.totalorder %v1219, 0
      %vm1252 = vcmp.ne.s32.totalorder %v1220, 0
      %vm1253 = vcmp.ne.s32.totalorder %v1221, 0
      %vm1254 = vcmp.ne.s32.totalorder %v1222, 0
      %vm1255 = vcmp.ne.s32.totalorder %v1223, 0
      %vm1256 = vcmp.ne.s32.totalorder %v1224, 0
      %vm1257 = vcmp.ne.s32.totalorder %v1225, 0
      %vm1258 = vcmp.ne.s32.totalorder %v1226, 0
      %vm1259 = vcmp.ne.s32.totalorder %v1227, 0
      %vm1260 = vcmp.ne.s32.totalorder %v1228, 0
      %vm1261 = vcmp.ne.s32.totalorder %v1229, 0
      %vm1262 = vcmp.ne.s32.totalorder %v1230, 0
      %vm1263 = vcmp.ne.s32.totalorder %v1231, 0
      %vm1264 = vcmp.ne.s32.totalorder %v1232, 0
      %vm1265 = vcmp.ne.s32.totalorder %v1233, 0
      %vm1266 = vcmp.ne.s32.totalorder %v1234, 0
      %vm1267 = vcmp.ne.s32.totalorder %v1235, 0
      %vm1268 = vcmp.ne.s32.totalorder %v1236, 0
      %vm1269 = vcmp.ne.s32.totalorder %v1237, 0
      %vm1270 = vcmp.ne.s32.totalorder %v1238, 0
      %vm1271 = vcmp.ne.s32.totalorder %v1239, 0
      %vm1272 = vcmp.ne.s32.totalorder %v1240, 0
      %vm1273 = vcmp.ne.s32.totalorder %v1241, 0
      %vm1274 = vcmp.ne.s32.totalorder %v1242, 0
      %vm1275 = vcmp.ne.s32.totalorder %v1243, 0
      %vm1276 = vcmp.ne.s32.totalorder %v1212, 15
      %vm1277 = vcmp.ne.s32.totalorder %v1213, 15
      %vm1278 = vcmp.ne.s32.totalorder %v1214, 15
      %vm1279 = vcmp.ne.s32.totalorder %v1215, 15
      %vm1280 = vcmp.ne.s32.totalorder %v1216, 15
      %vm1281 = vcmp.ne.s32.totalorder %v1217, 15
      %vm1282 = vcmp.ne.s32.totalorder %v1218, 15
      %vm1283 = vcmp.ne.s32.totalorder %v1219, 15
      %vm1284 = vcmp.ne.s32.totalorder %v1220, 15
      %vm1285 = vcmp.ne.s32.totalorder %v1221, 15
      %vm1286 = vcmp.ne.s32.totalorder %v1222, 15
      %vm1287 = vcmp.ne.s32.totalorder %v1223, 15
      %vm1288 = vcmp.ne.s32.totalorder %v1224, 15
      %vm1289 = vcmp.ne.s32.totalorder %v1225, 15
      %vm1290 = vcmp.ne.s32.totalorder %v1226, 15
      %vm1291 = vcmp.ne.s32.totalorder %v1227, 15
      %vm1292 = vcmp.ne.s32.totalorder %v1228, 15
      %vm1293 = vcmp.ne.s32.totalorder %v1229, 15
      %vm1294 = vcmp.ne.s32.totalorder %v1230, 15
      %vm1295 = vcmp.ne.s32.totalorder %v1231, 15
      %vm1296 = vcmp.ne.s32.totalorder %v1232, 15
      %vm1297 = vcmp.ne.s32.totalorder %v1233, 15
      %vm1298 = vcmp.ne.s32.totalorder %v1234, 15
      %vm1299 = vcmp.ne.s32.totalorder %v1235, 15
      %vm1300 = vcmp.ne.s32.totalorder %v1236, 15
      %vm1301 = vcmp.ne.s32.totalorder %v1237, 15
      %vm1302 = vcmp.ne.s32.totalorder %v1238, 15
      %vm1303 = vcmp.ne.s32.totalorder %v1239, 15
      %vm1304 = vcmp.ne.s32.totalorder %v1240, 15
      %vm1305 = vcmp.ne.s32.totalorder %v1241, 15
      %vm1306 = vcmp.ne.s32.totalorder %v1242, 15
      %vm1307 = vcmp.ne.s32.totalorder %v1243, 15
      %v1308 = vld [vmem:[#allocation2] sm:$0xf8]
      %v1309 = vld [vmem:[#allocation2 + $0x8] sm:$0xff]
      %v1310 = vld [vmem:[#allocation2 + $0x10] sm:$0xff]
      %v1311 = vld [vmem:[#allocation2 + $0x18] sm:$0xff]
      %v1312 = vld [vmem:[#allocation2 + $0x20] sm:$0xff]
      %v1313 = vld [vmem:[#allocation2 + $0x28] sm:$0xff]
      %v1314 = vld [vmem:[#allocation2 + $0x30] sm:$0xff]
      %v1315 = vld [vmem:[#allocation2 + $0x38] sm:$0xff]
      %v1316 = vld [vmem:[#allocation2 + $0x40] sm:$0xff]
      %v1317 = vld [vmem:[#allocation2 + $0x48] sm:$0xff]
      %v1318 = vld [vmem:[#allocation2 + $0x50] sm:$0xff]
      %v1319 = vld [vmem:[#allocation2 + $0x58] sm:$0xff]
      %v1320 = vld [vmem:[#allocation2 + $0x60] sm:$0xff]
      %v1321 = vld [vmem:[#allocation2 + $0x68] sm:$0xff]
      %v1322 = vld [vmem:[#allocation2 + $0x70] sm:$0xff]
      %v1323 = vld [vmem:[#allocation2 + $0x78] sm:$0xff]
      %v1324 = vld [vmem:[#allocation2 + $0x80] sm:$0xf]
      %v1325 = vsel %vm1244, 1, 0
      %v1326 = vsel %vm1245, 1, 0
      %v1327 = vsel %vm1246, 1, 0
      %v1328 = vsel %vm1247, 1, 0
      %v1329 = vsel %vm1248, 1, 0
      %v1330 = vsel %vm1249, 1, 0
      %v1331 = vsel %vm1250, 1, 0
      %v1332 = vsel %vm1251, 1, 0
      %v1333 = vsel %vm1252, 1, 0
      %v1334 = vsel %vm1253, 1, 0
      %v1335 = vsel %vm1254, 1, 0
      %v1336 = vsel %vm1255, 1, 0
      %v1337 = vsel %vm1256, 1, 0
      %v1338 = vsel %vm1257, 1, 0
      %v1339 = vsel %vm1258, 1, 0
      %v1340 = vsel %vm1259, 1, 0
      %v1341 = vsel %vm1260, 1, 0
      %v1342 = vsel %vm1261, 1, 0
      %v1343 = vsel %vm1262, 1, 0
      %v1344 = vsel %vm1263, 1, 0
      %v1345 = vsel %vm1264, 1, 0
      %v1346 = vsel %vm1265, 1, 0
      %v1347 = vsel %vm1266, 1, 0
      %v1348 = vsel %vm1267, 1, 0
      %v1349 = vsel %vm1268, 1, 0
      %v1350 = vsel %vm1269, 1, 0
      %v1351 = vsel %vm1270, 1, 0
      %v1352 = vsel %vm1271, 1, 0
      %v1353 = vsel %vm1272, 1, 0
      %v1354 = vsel %vm1273, 1, 0
      %v1355 = vsel %vm1274, 1, 0
      %v1356 = vsel %vm1275, 1, 0
      %vm1357 = vcmp.eq.s32.totalorder %v1325, 1
      %vm1358 = vcmp.eq.s32.totalorder %v1326, 1
      %vm1359 = vcmp.eq.s32.totalorder %v1327, 1
      %vm1360 = vcmp.eq.s32.totalorder %v1328, 1
      %vm1361 = vcmp.eq.s32.totalorder %v1329, 1
      %vm1362 = vcmp.eq.s32.totalorder %v1330, 1
      %vm1363 = vcmp.eq.s32.totalorder %v1331, 1
      %vm1364 = vcmp.eq.s32.totalorder %v1332, 1
      %vm1365 = vcmp.eq.s32.totalorder %v1333, 1
      %vm1366 = vcmp.eq.s32.totalorder %v1334, 1
      %vm1367 = vcmp.eq.s32.totalorder %v1335, 1
      %vm1368 = vcmp.eq.s32.totalorder %v1336, 1
      %vm1369 = vcmp.eq.s32.totalorder %v1337, 1
      %vm1370 = vcmp.eq.s32.totalorder %v1338, 1
      %vm1371 = vcmp.eq.s32.totalorder %v1339, 1
      %vm1372 = vcmp.eq.s32.totalorder %v1340, 1
      %vm1373 = vcmp.eq.s32.totalorder %v1341, 1
      %vm1374 = vcmp.eq.s32.totalorder %v1342, 1
      %vm1375 = vcmp.eq.s32.totalorder %v1343, 1
      %vm1376 = vcmp.eq.s32.totalorder %v1344, 1
      %vm1377 = vcmp.eq.s32.totalorder %v1345, 1
      %vm1378 = vcmp.eq.s32.totalorder %v1346, 1
      %vm1379 = vcmp.eq.s32.totalorder %v1347, 1
      %vm1380 = vcmp.eq.s32.totalorder %v1348, 1
      %vm1381 = vcmp.eq.s32.totalorder %v1349, 1
      %vm1382 = vcmp.eq.s32.totalorder %v1350, 1
      %vm1383 = vcmp.eq.s32.totalorder %v1351, 1
      %vm1384 = vcmp.eq.s32.totalorder %v1352, 1
      %vm1385 = vcmp.eq.s32.totalorder %v1353, 1
      %vm1386 = vcmp.eq.s32.totalorder %v1354, 1
      %vm1387 = vcmp.eq.s32.totalorder %v1355, 1
      %vm1388 = vcmp.eq.s32.totalorder %v1356, 1
      %vm1389 = vmpackc.low %vm1357, %vm1357
      %vm1390 = vmpackc.low %vm1358, %vm1358
      %vm1391 = vmpackc.low %vm1359, %vm1359
      %vm1392 = vmpackc.low %vm1360, %vm1360
      %vm1393 = vmpackc.low %vm1361, %vm1361
      %vm1394 = vmpackc.low %vm1362, %vm1362
      %vm1395 = vmpackc.low %vm1363, %vm1363
      %vm1396 = vmpackc.low %vm1364, %vm1364
      %vm1397 = vmpackc.low %vm1365, %vm1365
      %vm1398 = vmpackc.low %vm1366, %vm1366
      %vm1399 = vmpackc.low %vm1367, %vm1367
      %vm1400 = vmpackc.low %vm1368, %vm1368
      %vm1401 = vmpackc.low %vm1369, %vm1369
      %vm1402 = vmpackc.low %vm1370, %vm1370
      %vm1403 = vmpackc.low %vm1371, %vm1371
      %vm1404 = vmpackc.low %vm1372, %vm1372
      %vm1405 = vmpackc.low %vm1373, %vm1373
      %vm1406 = vmpackc.low %vm1374, %vm1374
      %vm1407 = vmpackc.low %vm1375, %vm1375
      %vm1408 = vmpackc.low %vm1376, %vm1376
      %vm1409 = vmpackc.low %vm1377, %vm1377
      %vm1410 = vmpackc.low %vm1378, %vm1378
      %vm1411 = vmpackc.low %vm1379, %vm1379
      %vm1412 = vmpackc.low %vm1380, %vm1380
      %vm1413 = vmpackc.low %vm1381, %vm1381
      %vm1414 = vmpackc.low %vm1382, %vm1382
      %vm1415 = vmpackc.low %vm1383, %vm1383
      %vm1416 = vmpackc.low %vm1384, %vm1384
      %vm1417 = vmpackc.low %vm1385, %vm1385
      %vm1418 = vmpackc.low %vm1386, %vm1386
      %vm1419 = vmpackc.low %vm1387, %vm1387
      %vm1420 = vmpackc.low %vm1388, %vm1388
      %v1421 = vsel %vm1389, 65537, 0
      %v1422 = vsel %vm1390, 65537, 0
      %v1423 = vsel %vm1391, 65537, 0
      %v1424 = vsel %vm1392, 65537, 0
      %v1425 = vsel %vm1393, 65537, 0
      %v1426 = vsel %vm1394, 65537, 0
      %v1427 = vsel %vm1395, 65537, 0
      %v1428 = vsel %vm1396, 65537, 0
      %v1429 = vsel %vm1397, 65537, 0
      %v1430 = vsel %vm1398, 65537, 0
      %v1431 = vsel %vm1399, 65537, 0
      %v1432 = vsel %vm1400, 65537, 0
      %v1433 = vsel %vm1401, 65537, 0
      %v1434 = vsel %vm1402, 65537, 0
      %v1435 = vsel %vm1403, 65537, 0
      %v1436 = vsel %vm1404, 65537, 0
      %v1437 = vsel %vm1405, 65537, 0
      %v1438 = vsel %vm1406, 65537, 0
      %v1439 = vsel %vm1407, 65537, 0
      %v1440 = vsel %vm1408, 65537, 0
      %v1441 = vsel %vm1409, 65537, 0
      %v1442 = vsel %vm1410, 65537, 0
      %v1443 = vsel %vm1411, 65537, 0
      %v1444 = vsel %vm1412, 65537, 0
      %v1445 = vsel %vm1413, 65537, 0
      %v1446 = vsel %vm1414, 65537, 0
      %v1447 = vsel %vm1415, 65537, 0
      %v1448 = vsel %vm1416, 65537, 0
      %v1449 = vsel %vm1417, 65537, 0
      %v1450 = vsel %vm1418, 65537, 0
      %v1451 = vsel %vm1419, 65537, 0
      %v1452 = vsel %vm1420, 65537, 0
      %v1453 = vunpack.c.l.b16 %v1421
      %v1454 = vunpack.c.l.b16 %v1422
      %v1455 = vunpack.c.l.b16 %v1423
      %v1456 = vunpack.c.l.b16 %v1424
      %v1457 = vunpack.c.l.b16 %v1425
      %v1458 = vunpack.c.l.b16 %v1426
      %v1459 = vunpack.c.l.b16 %v1427
      %v1460 = vunpack.c.l.b16 %v1428
      %v1461 = vunpack.c.l.b16 %v1429
      %v1462 = vunpack.c.l.b16 %v1430
      %v1463 = vunpack.c.l.b16 %v1431
      %v1464 = vunpack.c.l.b16 %v1432
      %v1465 = vunpack.c.l.b16 %v1433
      %v1466 = vunpack.c.l.b16 %v1434
      %v1467 = vunpack.c.l.b16 %v1435
      %v1468 = vunpack.c.l.b16 %v1436
      %v1469 = vunpack.c.l.b16 %v1437
      %v1470 = vunpack.c.l.b16 %v1438
      %v1471 = vunpack.c.l.b16 %v1439
      %v1472 = vunpack.c.l.b16 %v1440
      %v1473 = vunpack.c.l.b16 %v1441
      %v1474 = vunpack.c.l.b16 %v1442
      %v1475 = vunpack.c.l.b16 %v1443
      %v1476 = vunpack.c.l.b16 %v1444
      %v1477 = vunpack.c.l.b16 %v1445
      %v1478 = vunpack.c.l.b16 %v1446
      %v1479 = vunpack.c.l.b16 %v1447
      %v1480 = vunpack.c.l.b16 %v1448
      %v1481 = vunpack.c.l.b16 %v1449
      %v1482 = vunpack.c.l.b16 %v1450
      %v1483 = vunpack.c.l.b16 %v1451
      %v1484 = vunpack.c.l.b16 %v1452
      %v1485 = vpack.c.b16 %v1454, %v1453
      %v1486 = vpack.c.b16 %v1456, %v1455
      %v1487 = vpack.c.b16 %v1458, %v1457
      %v1488 = vpack.c.b16 %v1460, %v1459
      %v1489 = vpack.c.b16 %v1462, %v1461
      %v1490 = vpack.c.b16 %v1464, %v1463
      %v1491 = vpack.c.b16 %v1466, %v1465
      %v1492 = vpack.c.b16 %v1468, %v1467
      %v1493 = vpack.c.b16 %v1470, %v1469
      %v1494 = vpack.c.b16 %v1472, %v1471
      %v1495 = vpack.c.b16 %v1474, %v1473
      %v1496 = vpack.c.b16 %v1476, %v1475
      %v1497 = vpack.c.b16 %v1478, %v1477
      %v1498 = vpack.c.b16 %v1480, %v1479
      %v1499 = vpack.c.b16 %v1482, %v1481
      %v1500 = vpack.c.b16 %v1484, %v1483
      %vm1501 = vsmask.f32 3328
      %v1503 = vshrl.u32 %v1485, 16
      %v1505 = vrot.slane %v1503, 4
      %v1506 = vshll.u32 %v1485, 16
      %v1508 = vrot.slane %v1506, 5
      %v1509 = vor.u32 %v1505, %v1508
      %v1511 = vshrl.u32 %v1486, 16
      %v1513 = vrot.slane %v1511, 4
      %v1514 = vshll.u32 %v1486, 16
      %v1516 = vrot.slane %v1514, 5
      %v1517 = vor.u32 %v1513, %v1516
      %v1518 = vsel %vm1501, %v1509, %v1517
      %v1520 = vshrl.u32 %v1487, 16
      %v1522 = vrot.slane %v1520, 4
      %v1523 = vshll.u32 %v1487, 16
      %v1525 = vrot.slane %v1523, 5
      %v1526 = vor.u32 %v1522, %v1525
      %v1527 = vsel %vm1501, %v1517, %v1526
      %v1529 = vshrl.u32 %v1488, 16
      %v1531 = vrot.slane %v1529, 4
      %v1532 = vshll.u32 %v1488, 16
      %v1534 = vrot.slane %v1532, 5
      %v1535 = vor.u32 %v1531, %v1534
      %v1536 = vsel %vm1501, %v1526, %v1535
      %v1538 = vshrl.u32 %v1489, 16
      %v1540 = vrot.slane %v1538, 4
      %v1541 = vshll.u32 %v1489, 16
      %v1543 = vrot.slane %v1541, 5
      %v1544 = vor.u32 %v1540, %v1543
      %v1545 = vsel %vm1501, %v1535, %v1544
      %v1547 = vshrl.u32 %v1490, 16
      %v1549 = vrot.slane %v1547, 4
      %v1550 = vshll.u32 %v1490, 16
      %v1552 = vrot.slane %v1550, 5
      %v1553 = vor.u32 %v1549, %v1552
      %v1554 = vsel %vm1501, %v1544, %v1553
      %v1556 = vshrl.u32 %v1491, 16
      %v1558 = vrot.slane %v1556, 4
      %v1559 = vshll.u32 %v1491, 16
      %v1561 = vrot.slane %v1559, 5
      %v1562 = vor.u32 %v1558, %v1561
      %v1563 = vsel %vm1501, %v1553, %v1562
      %v1565 = vshrl.u32 %v1492, 16
      %v1567 = vrot.slane %v1565, 4
      %v1568 = vshll.u32 %v1492, 16
      %v1570 = vrot.slane %v1568, 5
      %v1571 = vor.u32 %v1567, %v1570
      %v1572 = vsel %vm1501, %v1562, %v1571
      %v1574 = vshrl.u32 %v1493, 16
      %v1576 = vrot.slane %v1574, 4
      %v1577 = vshll.u32 %v1493, 16
      %v1579 = vrot.slane %v1577, 5
      %v1580 = vor.u32 %v1576, %v1579
      %v1581 = vsel %vm1501, %v1571, %v1580
      %v1583 = vshrl.u32 %v1494, 16
      %v1585 = vrot.slane %v1583, 4
      %v1586 = vshll.u32 %v1494, 16
      %v1588 = vrot.slane %v1586, 5
      %v1589 = vor.u32 %v1585, %v1588
      %v1590 = vsel %vm1501, %v1580, %v1589
      %v1592 = vshrl.u32 %v1495, 16
      %v1594 = vrot.slane %v1592, 4
      %v1595 = vshll.u32 %v1495, 16
      %v1597 = vrot.slane %v1595, 5
      %v1598 = vor.u32 %v1594, %v1597
      %v1599 = vsel %vm1501, %v1589, %v1598
      %v1601 = vshrl.u32 %v1496, 16
      %v1603 = vrot.slane %v1601, 4
      %v1604 = vshll.u32 %v1496, 16
      %v1606 = vrot.slane %v1604, 5
      %v1607 = vor.u32 %v1603, %v1606
      %v1608 = vsel %vm1501, %v1598, %v1607
      %v1610 = vshrl.u32 %v1497, 16
      %v1612 = vrot.slane %v1610, 4
      %v1613 = vshll.u32 %v1497, 16
      %v1615 = vrot.slane %v1613, 5
      %v1616 = vor.u32 %v1612, %v1615
      %v1617 = vsel %vm1501, %v1607, %v1616
      %v1619 = vshrl.u32 %v1498, 16
      %v1621 = vrot.slane %v1619, 4
      %v1622 = vshll.u32 %v1498, 16
      %v1624 = vrot.slane %v1622, 5
      %v1625 = vor.u32 %v1621, %v1624
      %v1626 = vsel %vm1501, %v1616, %v1625
      %v1628 = vshrl.u32 %v1499, 16
      %v1630 = vrot.slane %v1628, 4
      %v1631 = vshll.u32 %v1499, 16
      %v1633 = vrot.slane %v1631, 5
      %v1634 = vor.u32 %v1630, %v1633
      %v1635 = vsel %vm1501, %v1625, %v1634
      %v1637 = vshrl.u32 %v1500, 16
      %v1639 = vrot.slane %v1637, 4
      %v1640 = vshll.u32 %v1500, 16
      %v1642 = vrot.slane %v1640, 5
      %v1643 = vor.u32 %v1639, %v1642
      %v1644 = vsel %vm1501, %v1634, %v1643
      %vm1645 = vcmp.ne.s16.totalorder %v1509, 0
      %vm1646 = vcmp.ne.s16.totalorder %v1518, 0
      %vm1647 = vcmp.ne.s16.totalorder %v1527, 0
      %vm1648 = vcmp.ne.s16.totalorder %v1536, 0
      %vm1649 = vcmp.ne.s16.totalorder %v1545, 0
      %vm1650 = vcmp.ne.s16.totalorder %v1554, 0
      %vm1651 = vcmp.ne.s16.totalorder %v1563, 0
      %vm1652 = vcmp.ne.s16.totalorder %v1572, 0
      %vm1653 = vcmp.ne.s16.totalorder %v1581, 0
      %vm1654 = vcmp.ne.s16.totalorder %v1590, 0
      %vm1655 = vcmp.ne.s16.totalorder %v1599, 0
      %vm1656 = vcmp.ne.s16.totalorder %v1608, 0
      %vm1657 = vcmp.ne.s16.totalorder %v1617, 0
      %vm1658 = vcmp.ne.s16.totalorder %v1626, 0
      %vm1659 = vcmp.ne.s16.totalorder %v1635, 0
      %vm1660 = vcmp.ne.s16.totalorder %v1644, 0
      %vm1661 = vcmp.ne.s16.totalorder %v1643, 0
      %v1662 = vsel %vm1645, %v1308, 0
      %v1663 = vsel %vm1646, %v1309, 0
      %v1664 = vsel %vm1647, %v1310, 0
      %v1665 = vsel %vm1648, %v1311, 0
      %v1666 = vsel %vm1649, %v1312, 0
      %v1667 = vsel %vm1650, %v1313, 0
      %v1668 = vsel %vm1651, %v1314, 0
      %v1669 = vsel %vm1652, %v1315, 0
      %v1670 = vsel %vm1653, %v1316, 0
      %v1671 = vsel %vm1654, %v1317, 0
      %v1672 = vsel %vm1655, %v1318, 0
      %v1673 = vsel %vm1656, %v1319, 0
      %v1674 = vsel %vm1657, %v1320, 0
      %v1675 = vsel %vm1658, %v1321, 0
      %v1676 = vsel %vm1659, %v1322, 0
      %v1677 = vsel %vm1660, %v1323, 0
      %v1678 = vsel %vm1661, %v1324, 0
      %vm1679 = vsmask.f32 4352
      %v1681 = vshrl.u32 %v1662, 16
      %v1683 = vrot.slane %v1681, 3
      %v1684 = vshll.u32 %v1662, 16
      %v1686 = vrot.slane %v1684, 4
      %v1687 = vor.u32 %v1683, %v1686
      %v1689 = vshrl.u32 %v1663, 16
      %v1691 = vrot.slane %v1689, 3
      %v1692 = vshll.u32 %v1663, 16
      %v1694 = vrot.slane %v1692, 4
      %v1695 = vor.u32 %v1691, %v1694
      %v1696 = vsel %vm1679, %v1687, %v1695
      %v1698 = vshrl.u32 %v1664, 16
      %v1700 = vrot.slane %v1698, 3
      %v1701 = vshll.u32 %v1664, 16
      %v1703 = vrot.slane %v1701, 4
      %v1704 = vor.u32 %v1700, %v1703
      %v1705 = vsel %vm1679, %v1695, %v1704
      %v1707 = vshrl.u32 %v1665, 16
      %v1709 = vrot.slane %v1707, 3
      %v1710 = vshll.u32 %v1665, 16
      %v1712 = vrot.slane %v1710, 4
      %v1713 = vor.u32 %v1709, %v1712
      %v1714 = vsel %vm1679, %v1704, %v1713
      %v1716 = vshrl.u32 %v1666, 16
      %v1718 = vrot.slane %v1716, 3
      %v1719 = vshll.u32 %v1666, 16
      %v1721 = vrot.slane %v1719, 4
      %v1722 = vor.u32 %v1718, %v1721
      %v1723 = vsel %vm1679, %v1713, %v1722
      %v1725 = vshrl.u32 %v1667, 16
      %v1727 = vrot.slane %v1725, 3
      %v1728 = vshll.u32 %v1667, 16
      %v1730 = vrot.slane %v1728, 4
      %v1731 = vor.u32 %v1727, %v1730
      %v1732 = vsel %vm1679, %v1722, %v1731
      %v1734 = vshrl.u32 %v1668, 16
      %v1736 = vrot.slane %v1734, 3
      %v1737 = vshll.u32 %v1668, 16
      %v1739 = vrot.slane %v1737, 4
      %v1740 = vor.u32 %v1736, %v1739
      %v1741 = vsel %vm1679, %v1731, %v1740
      %v1743 = vshrl.u32 %v1669, 16
      %v1745 = vrot.slane %v1743, 3
      %v1746 = vshll.u32 %v1669, 16
      %v1748 = vrot.slane %v1746, 4
      %v1749 = vor.u32 %v1745, %v1748
      %v1750 = vsel %vm1679, %v1740, %v1749
      %v1752 = vshrl.u32 %v1670, 16
      %v1754 = vrot.slane %v1752, 3
      %v1755 = vshll.u32 %v1670, 16
      %v1757 = vrot.slane %v1755, 4
      %v1758 = vor.u32 %v1754, %v1757
      %v1759 = vsel %vm1679, %v1749, %v1758
      %v1761 = vshrl.u32 %v1671, 16
      %v1763 = vrot.slane %v1761, 3
      %v1764 = vshll.u32 %v1671, 16
      %v1766 = vrot.slane %v1764, 4
      %v1767 = vor.u32 %v1763, %v1766
      %v1768 = vsel %vm1679, %v1758, %v1767
      %v1770 = vshrl.u32 %v1672, 16
      %v1772 = vrot.slane %v1770, 3
      %v1773 = vshll.u32 %v1672, 16
      %v1775 = vrot.slane %v1773, 4
      %v1776 = vor.u32 %v1772, %v1775
      %v1777 = vsel %vm1679, %v1767, %v1776
      %v1779 = vshrl.u32 %v1673, 16
      %v1781 = vrot.slane %v1779, 3
      %v1782 = vshll.u32 %v1673, 16
      %v1784 = vrot.slane %v1782, 4
      %v1785 = vor.u32 %v1781, %v1784
      %v1786 = vsel %vm1679, %v1776, %v1785
      %v1788 = vshrl.u32 %v1674, 16
      %v1790 = vrot.slane %v1788, 3
      %v1791 = vshll.u32 %v1674, 16
      %v1793 = vrot.slane %v1791, 4
      %v1794 = vor.u32 %v1790, %v1793
      %v1795 = vsel %vm1679, %v1785, %v1794
      %v1797 = vshrl.u32 %v1675, 16
      %v1799 = vrot.slane %v1797, 3
      %v1800 = vshll.u32 %v1675, 16
      %v1802 = vrot.slane %v1800, 4
      %v1803 = vor.u32 %v1799, %v1802
      %v1804 = vsel %vm1679, %v1794, %v1803
      %v1806 = vshrl.u32 %v1676, 16
      %v1808 = vrot.slane %v1806, 3
      %v1809 = vshll.u32 %v1676, 16
      %v1811 = vrot.slane %v1809, 4
      %v1812 = vor.u32 %v1808, %v1811
      %v1813 = vsel %vm1679, %v1803, %v1812
      %v1815 = vshrl.u32 %v1677, 16
      %v1817 = vrot.slane %v1815, 3
      %v1818 = vshll.u32 %v1677, 16
      %v1820 = vrot.slane %v1818, 4
      %v1821 = vor.u32 %v1817, %v1820
      %v1822 = vsel %vm1679, %v1812, %v1821
      %v1824 = vshrl.u32 %v1678, 16
      %v1826 = vrot.slane %v1824, 3
      %v1827 = vshll.u32 %v1678, 16
      %v1829 = vrot.slane %v1827, 4
      %v1830 = vor.u32 %v1826, %v1829
      %v1831 = vsel %vm1679, %v1821, %v1830
      %1848 = vst.msk [vmem:[#allocation3] sm:$0xff] %vm722, %v1696
      %1849 = vst.msk [vmem:[#allocation3 + $0x8] sm:$0xff] %vm722, %v1705
      %1850 = vst.msk [vmem:[#allocation3 + $0x10] sm:$0xff] %vm722, %v1714
      %1851 = vst.msk [vmem:[#allocation3 + $0x18] sm:$0xff] %vm722, %v1723
      %1852 = vst.msk [vmem:[#allocation3 + $0x20] sm:$0xff] %vm722, %v1732
      %1853 = vst.msk [vmem:[#allocation3 + $0x28] sm:$0xff] %vm722, %v1741
      %1854 = vst.msk [vmem:[#allocation3 + $0x30] sm:$0xff] %vm722, %v1750
      %1855 = vst.msk [vmem:[#allocation3 + $0x38] sm:$0xff] %vm722, %v1759
      %1856 = vst.msk [vmem:[#allocation3 + $0x40] sm:$0xff] %vm722, %v1768
      %1857 = vst.msk [vmem:[#allocation3 + $0x48] sm:$0xff] %vm722, %v1777
      %1858 = vst.msk [vmem:[#allocation3 + $0x50] sm:$0xff] %vm722, %v1786
      %1859 = vst.msk [vmem:[#allocation3 + $0x58] sm:$0xff] %vm722, %v1795
      %1860 = vst.msk [vmem:[#allocation3 + $0x60] sm:$0xff] %vm722, %v1804
      %1861 = vst.msk [vmem:[#allocation3 + $0x68] sm:$0xff] %vm722, %v1813
      %1862 = vst.msk [vmem:[#allocation3 + $0x70] sm:$0xff] %vm722, %v1822
      %1863 = vst.msk [vmem:[#allocation3 + $0x78] sm:$0xff] %vm722, %v1831
      %v1864 = vld [vmem:[#allocation2] sm:$0xf0]
      %v1865 = vld [vmem:[#allocation2 + $0x8] sm:$0xff]
      %v1866 = vld [vmem:[#allocation2 + $0x10] sm:$0xff]
      %v1867 = vld [vmem:[#allocation2 + $0x18] sm:$0xff]
      %v1868 = vld [vmem:[#allocation2 + $0x20] sm:$0xff]
      %v1869 = vld [vmem:[#allocation2 + $0x28] sm:$0xff]
      %v1870 = vld [vmem:[#allocation2 + $0x30] sm:$0xff]
      %v1871 = vld [vmem:[#allocation2 + $0x38] sm:$0xff]
      %v1872 = vld [vmem:[#allocation2 + $0x40] sm:$0xff]
      %v1873 = vld [vmem:[#allocation2 + $0x48] sm:$0xff]
      %v1874 = vld [vmem:[#allocation2 + $0x50] sm:$0xff]
      %v1875 = vld [vmem:[#allocation2 + $0x58] sm:$0xff]
      %v1876 = vld [vmem:[#allocation2 + $0x60] sm:$0xff]
      %v1877 = vld [vmem:[#allocation2 + $0x68] sm:$0xff]
      %v1878 = vld [vmem:[#allocation2 + $0x70] sm:$0xff]
      %v1879 = vld [vmem:[#allocation2 + $0x78] sm:$0xff]
      %v1880 = vld [vmem:[#allocation2 + $0x80] sm:$0xf]
      %v1898 = vrot.slane %v1864, 4
      %v1899 = vrot.slane %v1865, 4
      %v1900 = vsel %vm761, %v1898, %v1899
      %v1901 = vrot.slane %v1866, 4
      %v1902 = vsel %vm761, %v1899, %v1901
      %v1903 = vrot.slane %v1867, 4
      %v1904 = vsel %vm761, %v1901, %v1903
      %v1905 = vrot.slane %v1868, 4
      %v1906 = vsel %vm761, %v1903, %v1905
      %v1907 = vrot.slane %v1869, 4
      %v1908 = vsel %vm761, %v1905, %v1907
      %v1909 = vrot.slane %v1870, 4
      %v1910 = vsel %vm761, %v1907, %v1909
      %v1911 = vrot.slane %v1871, 4
      %v1912 = vsel %vm761, %v1909, %v1911
      %v1913 = vrot.slane %v1872, 4
      %v1914 = vsel %vm761, %v1911, %v1913
      %v1915 = vrot.slane %v1873, 4
      %v1916 = vsel %vm761, %v1913, %v1915
      %v1917 = vrot.slane %v1874, 4
      %v1918 = vsel %vm761, %v1915, %v1917
      %v1919 = vrot.slane %v1875, 4
      %v1920 = vsel %vm761, %v1917, %v1919
      %v1921 = vrot.slane %v1876, 4
      %v1922 = vsel %vm761, %v1919, %v1921
      %v1923 = vrot.slane %v1877, 4
      %v1924 = vsel %vm761, %v1921, %v1923
      %v1925 = vrot.slane %v1878, 4
      %v1926 = vsel %vm761, %v1923, %v1925
      %v1927 = vrot.slane %v1879, 4
      %v1928 = vsel %vm761, %v1925, %v1927
      %v1929 = vrot.slane %v1880, 4
      %v1930 = vsel %vm761, %v1927, %v1929
      %1931 = vrot.lane.b32.xlu0 %v1900, 2
      %v1932 = vpop.permute.xlu0 %1931
      %1933 = vrot.lane.b32.xlu0 %v1902, 2
      %v1934 = vpop.permute.xlu0 %1933
      %1935 = vrot.lane.b32.xlu0 %v1904, 2
      %v1936 = vpop.permute.xlu0 %1935
      %1937 = vrot.lane.b32.xlu0 %v1906, 2
      %v1938 = vpop.permute.xlu0 %1937
      %1939 = vrot.lane.b32.xlu0 %v1908, 2
      %v1940 = vpop.permute.xlu0 %1939
      %1941 = vrot.lane.b32.xlu0 %v1910, 2
      %v1942 = vpop.permute.xlu0 %1941
      %1943 = vrot.lane.b32.xlu0 %v1912, 2
      %v1944 = vpop.permute.xlu0 %1943
      %1945 = vrot.lane.b32.xlu0 %v1914, 2
      %v1946 = vpop.permute.xlu0 %1945
      %1947 = vrot.lane.b32.xlu0 %v1916, 2
      %v1948 = vpop.permute.xlu0 %1947
      %1949 = vrot.lane.b32.xlu0 %v1918, 2
      %v1950 = vpop.permute.xlu0 %1949
      %1951 = vrot.lane.b32.xlu0 %v1920, 2
      %v1952 = vpop.permute.xlu0 %1951
      %1953 = vrot.lane.b32.xlu0 %v1922, 2
      %v1954 = vpop.permute.xlu0 %1953
      %1955 = vrot.lane.b32.xlu0 %v1924, 2
      %v1956 = vpop.permute.xlu0 %1955
      %1957 = vrot.lane.b32.xlu0 %v1926, 2
      %v1958 = vpop.permute.xlu0 %1957
      %1959 = vrot.lane.b32.xlu0 %v1928, 2
      %v1960 = vpop.permute.xlu0 %1959
      %1961 = vrot.lane.b32.xlu0 %v1930, 2
      %v1962 = vpop.permute.xlu0 %1961
      %vm1979 = vcmask 31760
      %1980 = vst.msk [vmem:[#allocation3] sm:$0xff] %vm1979, %v1932
      %1981 = vst.msk [vmem:[#allocation3 + $0x8] sm:$0xff] %vm1979, %v1934
      %1982 = vst.msk [vmem:[#allocation3 + $0x10] sm:$0xff] %vm1979, %v1936
      %1983 = vst.msk [vmem:[#allocation3 + $0x18] sm:$0xff] %vm1979, %v1938
      %1984 = vst.msk [vmem:[#allocation3 + $0x20] sm:$0xff] %vm1979, %v1940
      %1985 = vst.msk [vmem:[#allocation3 + $0x28] sm:$0xff] %vm1979, %v1942
      %1986 = vst.msk [vmem:[#allocation3 + $0x30] sm:$0xff] %vm1979, %v1944
      %1987 = vst.msk [vmem:[#allocation3 + $0x38] sm:$0xff] %vm1979, %v1946
      %1988 = vst.msk [vmem:[#allocation3 + $0x40] sm:$0xff] %vm1979, %v1948
      %1989 = vst.msk [vmem:[#allocation3 + $0x48] sm:$0xff] %vm1979, %v1950
      %1990 = vst.msk [vmem:[#allocation3 + $0x50] sm:$0xff] %vm1979, %v1952
      %1991 = vst.msk [vmem:[#allocation3 + $0x58] sm:$0xff] %vm1979, %v1954
      %1992 = vst.msk [vmem:[#allocation3 + $0x60] sm:$0xff] %vm1979, %v1956
      %1993 = vst.msk [vmem:[#allocation3 + $0x68] sm:$0xff] %vm1979, %v1958
      %1994 = vst.msk [vmem:[#allocation3 + $0x70] sm:$0xff] %vm1979, %v1960
      %1995 = vst.msk [vmem:[#allocation3 + $0x78] sm:$0xff] %vm1979, %v1962
      %v1996 = vld [vmem:[#allocation2] sm:$0xf0]
      %v1997 = vld [vmem:[#allocation2 + $0x8] sm:$0xff]
      %v1998 = vld [vmem:[#allocation2 + $0x10] sm:$0xff]
      %v1999 = vld [vmem:[#allocation2 + $0x18] sm:$0xff]
      %v2000 = vld [vmem:[#allocation2 + $0x20] sm:$0xff]
      %v2001 = vld [vmem:[#allocation2 + $0x28] sm:$0xff]
      %v2002 = vld [vmem:[#allocation2 + $0x30] sm:$0xff]
      %v2003 = vld [vmem:[#allocation2 + $0x38] sm:$0xff]
      %v2004 = vld [vmem:[#allocation2 + $0x40] sm:$0xff]
      %v2005 = vld [vmem:[#allocation2 + $0x48] sm:$0xff]
      %v2006 = vld [vmem:[#allocation2 + $0x50] sm:$0xff]
      %v2007 = vld [vmem:[#allocation2 + $0x58] sm:$0xff]
      %v2008 = vld [vmem:[#allocation2 + $0x60] sm:$0xff]
      %v2009 = vld [vmem:[#allocation2 + $0x68] sm:$0xff]
      %v2010 = vld [vmem:[#allocation2 + $0x70] sm:$0xff]
      %v2011 = vld [vmem:[#allocation2 + $0x78] sm:$0xff]
      %v2012 = vld [vmem:[#allocation2 + $0x80] sm:$0x1f]
      %v2013 = vsel %vm1276, 1, 0
      %v2014 = vsel %vm1277, 1, 0
      %v2015 = vsel %vm1278, 1, 0
      %v2016 = vsel %vm1279, 1, 0
      %v2017 = vsel %vm1280, 1, 0
      %v2018 = vsel %vm1281, 1, 0
      %v2019 = vsel %vm1282, 1, 0
      %v2020 = vsel %vm1283, 1, 0
      %v2021 = vsel %vm1284, 1, 0
      %v2022 = vsel %vm1285, 1, 0
      %v2023 = vsel %vm1286, 1, 0
      %v2024 = vsel %vm1287, 1, 0
      %v2025 = vsel %vm1288, 1, 0
      %v2026 = vsel %vm1289, 1, 0
      %v2027 = vsel %vm1290, 1, 0
      %v2028 = vsel %vm1291, 1, 0
      %v2029 = vsel %vm1292, 1, 0
      %v2030 = vsel %vm1293, 1, 0
      %v2031 = vsel %vm1294, 1, 0
      %v2032 = vsel %vm1295, 1, 0
      %v2033 = vsel %vm1296, 1, 0
      %v2034 = vsel %vm1297, 1, 0
      %v2035 = vsel %vm1298, 1, 0
      %v2036 = vsel %vm1299, 1, 0
      %v2037 = vsel %vm1300, 1, 0
      %v2038 = vsel %vm1301, 1, 0
      %v2039 = vsel %vm1302, 1, 0
      %v2040 = vsel %vm1303, 1, 0
      %v2041 = vsel %vm1304, 1, 0
      %v2042 = vsel %vm1305, 1, 0
      %v2043 = vsel %vm1306, 1, 0
      %v2044 = vsel %vm1307, 1, 0
      %vm2045 = vcmp.eq.s32.totalorder %v2013, 1
      %vm2046 = vcmp.eq.s32.totalorder %v2014, 1
      %vm2047 = vcmp.eq.s32.totalorder %v2015, 1
      %vm2048 = vcmp.eq.s32.totalorder %v2016, 1
      %vm2049 = vcmp.eq.s32.totalorder %v2017, 1
      %vm2050 = vcmp.eq.s32.totalorder %v2018, 1
      %vm2051 = vcmp.eq.s32.totalorder %v2019, 1
      %vm2052 = vcmp.eq.s32.totalorder %v2020, 1
      %vm2053 = vcmp.eq.s32.totalorder %v2021, 1
      %vm2054 = vcmp.eq.s32.totalorder %v2022, 1
      %vm2055 = vcmp.eq.s32.totalorder %v2023, 1
      %vm2056 = vcmp.eq.s32.totalorder %v2024, 1
      %vm2057 = vcmp.eq.s32.totalorder %v2025, 1
      %vm2058 = vcmp.eq.s32.totalorder %v2026, 1
      %vm2059 = vcmp.eq.s32.totalorder %v2027, 1
      %vm2060 = vcmp.eq.s32.totalorder %v2028, 1
      %vm2061 = vcmp.eq.s32.totalorder %v2029, 1
      %vm2062 = vcmp.eq.s32.totalorder %v2030, 1
      %vm2063 = vcmp.eq.s32.totalorder %v2031, 1
      %vm2064 = vcmp.eq.s32.totalorder %v2032, 1
      %vm2065 = vcmp.eq.s32.totalorder %v2033, 1
      %vm2066 = vcmp.eq.s32.totalorder %v2034, 1
      %vm2067 = vcmp.eq.s32.totalorder %v2035, 1
      %vm2068 = vcmp.eq.s32.totalorder %v2036, 1
      %vm2069 = vcmp.eq.s32.totalorder %v2037, 1
      %vm2070 = vcmp.eq.s32.totalorder %v2038, 1
      %vm2071 = vcmp.eq.s32.totalorder %v2039, 1
      %vm2072 = vcmp.eq.s32.totalorder %v2040, 1
      %vm2073 = vcmp.eq.s32.totalorder %v2041, 1
      %vm2074 = vcmp.eq.s32.totalorder %v2042, 1
      %vm2075 = vcmp.eq.s32.totalorder %v2043, 1
      %vm2076 = vcmp.eq.s32.totalorder %v2044, 1
      %vm2077 = vmpackc.low %vm2045, %vm2045
      %vm2078 = vmpackc.low %vm2046, %vm2046
      %vm2079 = vmpackc.low %vm2047, %vm2047
      %vm2080 = vmpackc.low %vm2048, %vm2048
      %vm2081 = vmpackc.low %vm2049, %vm2049
      %vm2082 = vmpackc.low %vm2050, %vm2050
      %vm2083 = vmpackc.low %vm2051, %vm2051
      %vm2084 = vmpackc.low %vm2052, %vm2052
      %vm2085 = vmpackc.low %vm2053, %vm2053
      %vm2086 = vmpackc.low %vm2054, %vm2054
      %vm2087 = vmpackc.low %vm2055, %vm2055
      %vm2088 = vmpackc.low %vm2056, %vm2056
      %vm2089 = vmpackc.low %vm2057, %vm2057
      %vm2090 = vmpackc.low %vm2058, %vm2058
      %vm2091 = vmpackc.low %vm2059, %vm2059
      %vm2092 = vmpackc.low %vm2060, %vm2060
      %vm2093 = vmpackc.low %vm2061, %vm2061
      %vm2094 = vmpackc.low %vm2062, %vm2062
      %vm2095 = vmpackc.low %vm2063, %vm2063
      %vm2096 = vmpackc.low %vm2064, %vm2064
      %vm2097 = vmpackc.low %vm2065, %vm2065
      %vm2098 = vmpackc.low %vm2066, %vm2066
      %vm2099 = vmpackc.low %vm2067, %vm2067
      %vm2100 = vmpackc.low %vm2068, %vm2068
      %vm2101 = vmpackc.low %vm2069, %vm2069
      %vm2102 = vmpackc.low %vm2070, %vm2070
      %vm2103 = vmpackc.low %vm2071, %vm2071
      %vm2104 = vmpackc.low %vm2072, %vm2072
      %vm2105 = vmpackc.low %vm2073, %vm2073
      %vm2106 = vmpackc.low %vm2074, %vm2074
      %vm2107 = vmpackc.low %vm2075, %vm2075
      %vm2108 = vmpackc.low %vm2076, %vm2076
      %v2109 = vsel %vm2077, 65537, 0
      %v2110 = vsel %vm2078, 65537, 0
      %v2111 = vsel %vm2079, 65537, 0
      %v2112 = vsel %vm2080, 65537, 0
      %v2113 = vsel %vm2081, 65537, 0
      %v2114 = vsel %vm2082, 65537, 0
      %v2115 = vsel %vm2083, 65537, 0
      %v2116 = vsel %vm2084, 65537, 0
      %v2117 = vsel %vm2085, 65537, 0
      %v2118 = vsel %vm2086, 65537, 0
      %v2119 = vsel %vm2087, 65537, 0
      %v2120 = vsel %vm2088, 65537, 0
      %v2121 = vsel %vm2089, 65537, 0
      %v2122 = vsel %vm2090, 65537, 0
      %v2123 = vsel %vm2091, 65537, 0
      %v2124 = vsel %vm2092, 65537, 0
      %v2125 = vsel %vm2093, 65537, 0
      %v2126 = vsel %vm2094, 65537, 0
      %v2127 = vsel %vm2095, 65537, 0
      %v2128 = vsel %vm2096, 65537, 0
      %v2129 = vsel %vm2097, 65537, 0
      %v2130 = vsel %vm2098, 65537, 0
      %v2131 = vsel %vm2099, 65537, 0
      %v2132 = vsel %vm2100, 65537, 0
      %v2133 = vsel %vm2101, 65537, 0
      %v2134 = vsel %vm2102, 65537, 0
      %v2135 = vsel %vm2103, 65537, 0
      %v2136 = vsel %vm2104, 65537, 0
      %v2137 = vsel %vm2105, 65537, 0
      %v2138 = vsel %vm2106, 65537, 0
      %v2139 = vsel %vm2107, 65537, 0
      %v2140 = vsel %vm2108, 65537, 0
      %v2141 = vunpack.c.l.b16 %v2109
      %v2142 = vunpack.c.l.b16 %v2110
      %v2143 = vunpack.c.l.b16 %v2111
      %v2144 = vunpack.c.l.b16 %v2112
      %v2145 = vunpack.c.l.b16 %v2113
      %v2146 = vunpack.c.l.b16 %v2114
      %v2147 = vunpack.c.l.b16 %v2115
      %v2148 = vunpack.c.l.b16 %v2116
      %v2149 = vunpack.c.l.b16 %v2117
      %v2150 = vunpack.c.l.b16 %v2118
      %v2151 = vunpack.c.l.b16 %v2119
      %v2152 = vunpack.c.l.b16 %v2120
      %v2153 = vunpack.c.l.b16 %v2121
      %v2154 = vunpack.c.l.b16 %v2122
      %v2155 = vunpack.c.l.b16 %v2123
      %v2156 = vunpack.c.l.b16 %v2124
      %v2157 = vunpack.c.l.b16 %v2125
      %v2158 = vunpack.c.l.b16 %v2126
      %v2159 = vunpack.c.l.b16 %v2127
      %v2160 = vunpack.c.l.b16 %v2128
      %v2161 = vunpack.c.l.b16 %v2129
      %v2162 = vunpack.c.l.b16 %v2130
      %v2163 = vunpack.c.l.b16 %v2131
      %v2164 = vunpack.c.l.b16 %v2132
      %v2165 = vunpack.c.l.b16 %v2133
      %v2166 = vunpack.c.l.b16 %v2134
      %v2167 = vunpack.c.l.b16 %v2135
      %v2168 = vunpack.c.l.b16 %v2136
      %v2169 = vunpack.c.l.b16 %v2137
      %v2170 = vunpack.c.l.b16 %v2138
      %v2171 = vunpack.c.l.b16 %v2139
      %v2172 = vunpack.c.l.b16 %v2140
      %v2173 = vpack.c.b16 %v2142, %v2141
      %v2174 = vpack.c.b16 %v2144, %v2143
      %v2175 = vpack.c.b16 %v2146, %v2145
      %v2176 = vpack.c.b16 %v2148, %v2147
      %v2177 = vpack.c.b16 %v2150, %v2149
      %v2178 = vpack.c.b16 %v2152, %v2151
      %v2179 = vpack.c.b16 %v2154, %v2153
      %v2180 = vpack.c.b16 %v2156, %v2155
      %v2181 = vpack.c.b16 %v2158, %v2157
      %v2182 = vpack.c.b16 %v2160, %v2159
      %v2183 = vpack.c.b16 %v2162, %v2161
      %v2184 = vpack.c.b16 %v2164, %v2163
      %v2185 = vpack.c.b16 %v2166, %v2165
      %v2186 = vpack.c.b16 %v2168, %v2167
      %v2187 = vpack.c.b16 %v2170, %v2169
      %v2188 = vpack.c.b16 %v2172, %v2171
      %v2190 = vshrl.u32 %v2173, 16
      %v2192 = vrot.slane %v2190, 3
      %v2193 = vshll.u32 %v2173, 16
      %v2195 = vrot.slane %v2193, 4
      %v2196 = vor.u32 %v2192, %v2195
      %v2198 = vshrl.u32 %v2174, 16
      %v2200 = vrot.slane %v2198, 3
      %v2201 = vshll.u32 %v2174, 16
      %v2203 = vrot.slane %v2201, 4
      %v2204 = vor.u32 %v2200, %v2203
      %v2205 = vsel %vm1679, %v2196, %v2204
      %v2207 = vshrl.u32 %v2175, 16
      %v2209 = vrot.slane %v2207, 3
      %v2210 = vshll.u32 %v2175, 16
      %v2212 = vrot.slane %v2210, 4
      %v2213 = vor.u32 %v2209, %v2212
      %v2214 = vsel %vm1679, %v2204, %v2213
      %v2216 = vshrl.u32 %v2176, 16
      %v2218 = vrot.slane %v2216, 3
      %v2219 = vshll.u32 %v2176, 16
      %v2221 = vrot.slane %v2219, 4
      %v2222 = vor.u32 %v2218, %v2221
      %v2223 = vsel %vm1679, %v2213, %v2222
      %v2225 = vshrl.u32 %v2177, 16
      %v2227 = vrot.slane %v2225, 3
      %v2228 = vshll.u32 %v2177, 16
      %v2230 = vrot.slane %v2228, 4
      %v2231 = vor.u32 %v2227, %v2230
      %v2232 = vsel %vm1679, %v2222, %v2231
      %v2234 = vshrl.u32 %v2178, 16
      %v2236 = vrot.slane %v2234, 3
      %v2237 = vshll.u32 %v2178, 16
      %v2239 = vrot.slane %v2237, 4
      %v2240 = vor.u32 %v2236, %v2239
      %v2241 = vsel %vm1679, %v2231, %v2240
      %v2243 = vshrl.u32 %v2179, 16
      %v2245 = vrot.slane %v2243, 3
      %v2246 = vshll.u32 %v2179, 16
      %v2248 = vrot.slane %v2246, 4
      %v2249 = vor.u32 %v2245, %v2248
      %v2250 = vsel %vm1679, %v2240, %v2249
      %v2252 = vshrl.u32 %v2180, 16
      %v2254 = vrot.slane %v2252, 3
      %v2255 = vshll.u32 %v2180, 16
      %v2257 = vrot.slane %v2255, 4
      %v2258 = vor.u32 %v2254, %v2257
      %v2259 = vsel %vm1679, %v2249, %v2258
      %v2261 = vshrl.u32 %v2181, 16
      %v2263 = vrot.slane %v2261, 3
      %v2264 = vshll.u32 %v2181, 16
      %v2266 = vrot.slane %v2264, 4
      %v2267 = vor.u32 %v2263, %v2266
      %v2268 = vsel %vm1679, %v2258, %v2267
      %v2270 = vshrl.u32 %v2182, 16
      %v2272 = vrot.slane %v2270, 3
      %v2273 = vshll.u32 %v2182, 16
      %v2275 = vrot.slane %v2273, 4
      %v2276 = vor.u32 %v2272, %v2275
      %v2277 = vsel %vm1679, %v2267, %v2276
      %v2279 = vshrl.u32 %v2183, 16
      %v2281 = vrot.slane %v2279, 3
      %v2282 = vshll.u32 %v2183, 16
      %v2284 = vrot.slane %v2282, 4
      %v2285 = vor.u32 %v2281, %v2284
      %v2286 = vsel %vm1679, %v2276, %v2285
      %v2288 = vshrl.u32 %v2184, 16
      %v2290 = vrot.slane %v2288, 3
      %v2291 = vshll.u32 %v2184, 16
      %v2293 = vrot.slane %v2291, 4
      %v2294 = vor.u32 %v2290, %v2293
      %v2295 = vsel %vm1679, %v2285, %v2294
      %v2297 = vshrl.u32 %v2185, 16
      %v2299 = vrot.slane %v2297, 3
      %v2300 = vshll.u32 %v2185, 16
      %v2302 = vrot.slane %v2300, 4
      %v2303 = vor.u32 %v2299, %v2302
      %v2304 = vsel %vm1679, %v2294, %v2303
      %v2306 = vshrl.u32 %v2186, 16
      %v2308 = vrot.slane %v2306, 3
      %v2309 = vshll.u32 %v2186, 16
      %v2311 = vrot.slane %v2309, 4
      %v2312 = vor.u32 %v2308, %v2311
      %v2313 = vsel %vm1679, %v2303, %v2312
      %v2315 = vshrl.u32 %v2187, 16
      %v2317 = vrot.slane %v2315, 3
      %v2318 = vshll.u32 %v2187, 16
      %v2320 = vrot.slane %v2318, 4
      %v2321 = vor.u32 %v2317, %v2320
      %v2322 = vsel %vm1679, %v2312, %v2321
      %v2324 = vshrl.u32 %v2188, 16
      %v2326 = vrot.slane %v2324, 3
      %v2327 = vshll.u32 %v2188, 16
      %v2329 = vrot.slane %v2327, 4
      %v2330 = vor.u32 %v2326, %v2329
      %v2331 = vsel %vm1679, %v2321, %v2330
      %vm2332 = vcmp.ne.s16.totalorder %v2196, 0
      %vm2333 = vcmp.ne.s16.totalorder %v2205, 0
      %vm2334 = vcmp.ne.s16.totalorder %v2214, 0
      %vm2335 = vcmp.ne.s16.totalorder %v2223, 0
      %vm2336 = vcmp.ne.s16.totalorder %v2232, 0
      %vm2337 = vcmp.ne.s16.totalorder %v2241, 0
      %vm2338 = vcmp.ne.s16.totalorder %v2250, 0
      %vm2339 = vcmp.ne.s16.totalorder %v2259, 0
      %vm2340 = vcmp.ne.s16.totalorder %v2268, 0
      %vm2341 = vcmp.ne.s16.totalorder %v2277, 0
      %vm2342 = vcmp.ne.s16.totalorder %v2286, 0
      %vm2343 = vcmp.ne.s16.totalorder %v2295, 0
      %vm2344 = vcmp.ne.s16.totalorder %v2304, 0
      %vm2345 = vcmp.ne.s16.totalorder %v2313, 0
      %vm2346 = vcmp.ne.s16.totalorder %v2322, 0
      %vm2347 = vcmp.ne.s16.totalorder %v2331, 0
      %vm2348 = vcmp.ne.s16.totalorder %v2330, 0
      %v2349 = vsel %vm2332, %v1996, 0
      %v2350 = vsel %vm2333, %v1997, 0
      %v2351 = vsel %vm2334, %v1998, 0
      %v2352 = vsel %vm2335, %v1999, 0
      %v2353 = vsel %vm2336, %v2000, 0
      %v2354 = vsel %vm2337, %v2001, 0
      %v2355 = vsel %vm2338, %v2002, 0
      %v2356 = vsel %vm2339, %v2003, 0
      %v2357 = vsel %vm2340, %v2004, 0
      %v2358 = vsel %vm2341, %v2005, 0
      %v2359 = vsel %vm2342, %v2006, 0
      %v2360 = vsel %vm2343, %v2007, 0
      %v2361 = vsel %vm2344, %v2008, 0
      %v2362 = vsel %vm2345, %v2009, 0
      %v2363 = vsel %vm2346, %v2010, 0
      %v2364 = vsel %vm2347, %v2011, 0
      %v2365 = vsel %vm2348, %v2012, 0
      %v2367 = vshrl.u32 %v2349, 16
      %v2369 = vrot.slane %v2367, 4
      %v2370 = vshll.u32 %v2349, 16
      %v2372 = vrot.slane %v2370, 5
      %v2373 = vor.u32 %v2369, %v2372
      %v2375 = vshrl.u32 %v2350, 16
      %v2377 = vrot.slane %v2375, 4
      %v2378 = vshll.u32 %v2350, 16
      %v2380 = vrot.slane %v2378, 5
      %v2381 = vor.u32 %v2377, %v2380
      %v2382 = vsel %vm1501, %v2373, %v2381
      %v2384 = vshrl.u32 %v2351, 16
      %v2386 = vrot.slane %v2384, 4
      %v2387 = vshll.u32 %v2351, 16
      %v2389 = vrot.slane %v2387, 5
      %v2390 = vor.u32 %v2386, %v2389
      %v2391 = vsel %vm1501, %v2381, %v2390
      %v2393 = vshrl.u32 %v2352, 16
      %v2395 = vrot.slane %v2393, 4
      %v2396 = vshll.u32 %v2352, 16
      %v2398 = vrot.slane %v2396, 5
      %v2399 = vor.u32 %v2395, %v2398
      %v2400 = vsel %vm1501, %v2390, %v2399
      %v2402 = vshrl.u32 %v2353, 16
      %v2404 = vrot.slane %v2402, 4
      %v2405 = vshll.u32 %v2353, 16
      %v2407 = vrot.slane %v2405, 5
      %v2408 = vor.u32 %v2404, %v2407
      %v2409 = vsel %vm1501, %v2399, %v2408
      %v2411 = vshrl.u32 %v2354, 16
      %v2413 = vrot.slane %v2411, 4
      %v2414 = vshll.u32 %v2354, 16
      %v2416 = vrot.slane %v2414, 5
      %v2417 = vor.u32 %v2413, %v2416
      %v2418 = vsel %vm1501, %v2408, %v2417
      %v2420 = vshrl.u32 %v2355, 16
      %v2422 = vrot.slane %v2420, 4
      %v2423 = vshll.u32 %v2355, 16
      %v2425 = vrot.slane %v2423, 5
      %v2426 = vor.u32 %v2422, %v2425
      %v2427 = vsel %vm1501, %v2417, %v2426
      %v2429 = vshrl.u32 %v2356, 16
      %v2431 = vrot.slane %v2429, 4
      %v2432 = vshll.u32 %v2356, 16
      %v2434 = vrot.slane %v2432, 5
      %v2435 = vor.u32 %v2431, %v2434
      %v2436 = vsel %vm1501, %v2426, %v2435
      %v2438 = vshrl.u32 %v2357, 16
      %v2440 = vrot.slane %v2438, 4
      %v2441 = vshll.u32 %v2357, 16
      %v2443 = vrot.slane %v2441, 5
      %v2444 = vor.u32 %v2440, %v2443
      %v2445 = vsel %vm1501, %v2435, %v2444
      %v2447 = vshrl.u32 %v2358, 16
      %v2449 = vrot.slane %v2447, 4
      %v2450 = vshll.u32 %v2358, 16
      %v2452 = vrot.slane %v2450, 5
      %v2453 = vor.u32 %v2449, %v2452
      %v2454 = vsel %vm1501, %v2444, %v2453
      %v2456 = vshrl.u32 %v2359, 16
      %v2458 = vrot.slane %v2456, 4
      %v2459 = vshll.u32 %v2359, 16
      %v2461 = vrot.slane %v2459, 5
      %v2462 = vor.u32 %v2458, %v2461
      %v2463 = vsel %vm1501, %v2453, %v2462
      %v2465 = vshrl.u32 %v2360, 16
      %v2467 = vrot.slane %v2465, 4
      %v2468 = vshll.u32 %v2360, 16
      %v2470 = vrot.slane %v2468, 5
      %v2471 = vor.u32 %v2467, %v2470
      %v2472 = vsel %vm1501, %v2462, %v2471
      %v2474 = vshrl.u32 %v2361, 16
      %v2476 = vrot.slane %v2474, 4
      %v2477 = vshll.u32 %v2361, 16
      %v2479 = vrot.slane %v2477, 5
      %v2480 = vor.u32 %v2476, %v2479
      %v2481 = vsel %vm1501, %v2471, %v2480
      %v2483 = vshrl.u32 %v2362, 16
      %v2485 = vrot.slane %v2483, 4
      %v2486 = vshll.u32 %v2362, 16
      %v2488 = vrot.slane %v2486, 5
      %v2489 = vor.u32 %v2485, %v2488
      %v2490 = vsel %vm1501, %v2480, %v2489
      %v2492 = vshrl.u32 %v2363, 16
      %v2494 = vrot.slane %v2492, 4
      %v2495 = vshll.u32 %v2363, 16
      %v2497 = vrot.slane %v2495, 5
      %v2498 = vor.u32 %v2494, %v2497
      %v2499 = vsel %vm1501, %v2489, %v2498
      %v2501 = vshrl.u32 %v2364, 16
      %v2503 = vrot.slane %v2501, 4
      %v2504 = vshll.u32 %v2364, 16
      %v2506 = vrot.slane %v2504, 5
      %v2507 = vor.u32 %v2503, %v2506
      %v2508 = vsel %vm1501, %v2498, %v2507
      %v2510 = vshrl.u32 %v2365, 16
      %v2512 = vrot.slane %v2510, 4
      %v2513 = vshll.u32 %v2365, 16
      %v2515 = vrot.slane %v2513, 5
      %v2516 = vor.u32 %v2512, %v2515
      %v2517 = vsel %vm1501, %v2507, %v2516
      %2518 = vrot.lane.b32.xlu0 %v2382, 4
      %v2519 = vpop.permute.xlu0 %2518
      %2520 = vrot.lane.b32.xlu0 %v2391, 4
      %v2521 = vpop.permute.xlu0 %2520
      %2522 = vrot.lane.b32.xlu0 %v2400, 4
      %v2523 = vpop.permute.xlu0 %2522
      %2524 = vrot.lane.b32.xlu0 %v2409, 4
      %v2525 = vpop.permute.xlu0 %2524
      %2526 = vrot.lane.b32.xlu0 %v2418, 4
      %v2527 = vpop.permute.xlu0 %2526
      %2528 = vrot.lane.b32.xlu0 %v2427, 4
      %v2529 = vpop.permute.xlu0 %2528
      %2530 = vrot.lane.b32.xlu0 %v2436, 4
      %v2531 = vpop.permute.xlu0 %2530
      %2532 = vrot.lane.b32.xlu0 %v2445, 4
      %v2533 = vpop.permute.xlu0 %2532
      %2534 = vrot.lane.b32.xlu0 %v2454, 4
      %v2535 = vpop.permute.xlu0 %2534
      %2536 = vrot.lane.b32.xlu0 %v2463, 4
      %v2537 = vpop.permute.xlu0 %2536
      %2538 = vrot.lane.b32.xlu0 %v2472, 4
      %v2539 = vpop.permute.xlu0 %2538
      %2540 = vrot.lane.b32.xlu0 %v2481, 4
      %v2541 = vpop.permute.xlu0 %2540
      %2542 = vrot.lane.b32.xlu0 %v2490, 4
      %v2543 = vpop.permute.xlu0 %2542
      %2544 = vrot.lane.b32.xlu0 %v2499, 4
      %v2545 = vpop.permute.xlu0 %2544
      %2546 = vrot.lane.b32.xlu0 %v2508, 4
      %v2547 = vpop.permute.xlu0 %2546
      %2548 = vrot.lane.b32.xlu0 %v2517, 4
      %v2549 = vpop.permute.xlu0 %2548
      %vm2566 = vcmask 48160
      %2567 = vst.msk [vmem:[#allocation3] sm:$0xff] %vm2566, %v2519
      %2568 = vst.msk [vmem:[#allocation3 + $0x8] sm:$0xff] %vm2566, %v2521
      %2569 = vst.msk [vmem:[#allocation3 + $0x10] sm:$0xff] %vm2566, %v2523
      %2570 = vst.msk [vmem:[#allocation3 + $0x18] sm:$0xff] %vm2566, %v2525
      %2571 = vst.msk [vmem:[#allocation3 + $0x20] sm:$0xff] %vm2566, %v2527
      %2572 = vst.msk [vmem:[#allocation3 + $0x28] sm:$0xff] %vm2566, %v2529
      %2573 = vst.msk [vmem:[#allocation3 + $0x30] sm:$0xff] %vm2566, %v2531
      %2574 = vst.msk [vmem:[#allocation3 + $0x38] sm:$0xff] %vm2566, %v2533
      %2575 = vst.msk [vmem:[#allocation3 + $0x40] sm:$0xff] %vm2566, %v2535
      %2576 = vst.msk [vmem:[#allocation3 + $0x48] sm:$0xff] %vm2566, %v2537
      %2577 = vst.msk [vmem:[#allocation3 + $0x50] sm:$0xff] %vm2566, %v2539
      %2578 = vst.msk [vmem:[#allocation3 + $0x58] sm:$0xff] %vm2566, %v2541
      %2579 = vst.msk [vmem:[#allocation3 + $0x60] sm:$0xff] %vm2566, %v2543
      %2580 = vst.msk [vmem:[#allocation3 + $0x68] sm:$0xff] %vm2566, %v2545
      %2581 = vst.msk [vmem:[#allocation3 + $0x70] sm:$0xff] %vm2566, %v2547
      %2582 = vst.msk [vmem:[#allocation3 + $0x78] sm:$0xff] %vm2566, %v2549
      %v2583 = vld [vmem:[#allocation2 + $0x8] sm:$0xf8]
      %v2584 = vld [vmem:[#allocation2 + $0x10] sm:$0xff]
      %v2585 = vld [vmem:[#allocation2 + $0x18] sm:$0xff]
      %v2586 = vld [vmem:[#allocation2 + $0x20] sm:$0xff]
      %v2587 = vld [vmem:[#allocation2 + $0x28] sm:$0xff]
      %v2588 = vld [vmem:[#allocation2 + $0x30] sm:$0xff]
      %v2589 = vld [vmem:[#allocation2 + $0x38] sm:$0xff]
      %v2590 = vld [vmem:[#allocation2 + $0x40] sm:$0xff]
      %v2591 = vld [vmem:[#allocation2 + $0x48] sm:$0xff]
      %v2592 = vld [vmem:[#allocation2 + $0x50] sm:$0xff]
      %v2593 = vld [vmem:[#allocation2 + $0x58] sm:$0xff]
      %v2594 = vld [vmem:[#allocation2 + $0x60] sm:$0xff]
      %v2595 = vld [vmem:[#allocation2 + $0x68] sm:$0xff]
      %v2596 = vld [vmem:[#allocation2 + $0x70] sm:$0xff]
      %v2597 = vld [vmem:[#allocation2 + $0x78] sm:$0xff]
      %v2598 = vld [vmem:[#allocation2 + $0x80] sm:$0xff]
      %v2599 = vld [vmem:[#allocation2 + $0x88] sm:$0xf]
      %v2600 = vsel %vm1645, %v2583, 0
      %v2601 = vsel %vm1646, %v2584, 0
      %v2602 = vsel %vm1647, %v2585, 0
      %v2603 = vsel %vm1648, %v2586, 0
      %v2604 = vsel %vm1649, %v2587, 0
      %v2605 = vsel %vm1650, %v2588, 0
      %v2606 = vsel %vm1651, %v2589, 0
      %v2607 = vsel %vm1652, %v2590, 0
      %v2608 = vsel %vm1653, %v2591, 0
      %v2609 = vsel %vm1654, %v2592, 0
      %v2610 = vsel %vm1655, %v2593, 0
      %v2611 = vsel %vm1656, %v2594, 0
      %v2612 = vsel %vm1657, %v2595, 0
      %v2613 = vsel %vm1658, %v2596, 0
      %v2614 = vsel %vm1659, %v2597, 0
      %v2615 = vsel %vm1660, %v2598, 0
      %v2616 = vsel %vm1661, %v2599, 0
      %v2618 = vshrl.u32 %v2600, 16
      %v2620 = vrot.slane %v2618, 3
      %v2621 = vshll.u32 %v2600, 16
      %v2623 = vrot.slane %v2621, 4
      %v2624 = vor.u32 %v2620, %v2623
      %v2626 = vshrl.u32 %v2601, 16
      %v2628 = vrot.slane %v2626, 3
      %v2629 = vshll.u32 %v2601, 16
      %v2631 = vrot.slane %v2629, 4
      %v2632 = vor.u32 %v2628, %v2631
      %v2633 = vsel %vm1679, %v2624, %v2632
      %v2635 = vshrl.u32 %v2602, 16
      %v2637 = vrot.slane %v2635, 3
      %v2638 = vshll.u32 %v2602, 16
      %v2640 = vrot.slane %v2638, 4
      %v2641 = vor.u32 %v2637, %v2640
      %v2642 = vsel %vm1679, %v2632, %v2641
      %v2644 = vshrl.u32 %v2603, 16
      %v2646 = vrot.slane %v2644, 3
      %v2647 = vshll.u32 %v2603, 16
      %v2649 = vrot.slane %v2647, 4
      %v2650 = vor.u32 %v2646, %v2649
      %v2651 = vsel %vm1679, %v2641, %v2650
      %v2653 = vshrl.u32 %v2604, 16
      %v2655 = vrot.slane %v2653, 3
      %v2656 = vshll.u32 %v2604, 16
      %v2658 = vrot.slane %v2656, 4
      %v2659 = vor.u32 %v2655, %v2658
      %v2660 = vsel %vm1679, %v2650, %v2659
      %v2662 = vshrl.u32 %v2605, 16
      %v2664 = vrot.slane %v2662, 3
      %v2665 = vshll.u32 %v2605, 16
      %v2667 = vrot.slane %v2665, 4
      %v2668 = vor.u32 %v2664, %v2667
      %v2669 = vsel %vm1679, %v2659, %v2668
      %v2671 = vshrl.u32 %v2606, 16
      %v2673 = vrot.slane %v2671, 3
      %v2674 = vshll.u32 %v2606, 16
      %v2676 = vrot.slane %v2674, 4
      %v2677 = vor.u32 %v2673, %v2676
      %v2678 = vsel %vm1679, %v2668, %v2677
      %v2680 = vshrl.u32 %v2607, 16
      %v2682 = vrot.slane %v2680, 3
      %v2683 = vshll.u32 %v2607, 16
      %v2685 = vrot.slane %v2683, 4
      %v2686 = vor.u32 %v2682, %v2685
      %v2687 = vsel %vm1679, %v2677, %v2686
      %v2689 = vshrl.u32 %v2608, 16
      %v2691 = vrot.slane %v2689, 3
      %v2692 = vshll.u32 %v2608, 16
      %v2694 = vrot.slane %v2692, 4
      %v2695 = vor.u32 %v2691, %v2694
      %v2696 = vsel %vm1679, %v2686, %v2695
      %v2698 = vshrl.u32 %v2609, 16
      %v2700 = vrot.slane %v2698, 3
      %v2701 = vshll.u32 %v2609, 16
      %v2703 = vrot.slane %v2701, 4
      %v2704 = vor.u32 %v2700, %v2703
      %v2705 = vsel %vm1679, %v2695, %v2704
      %v2707 = vshrl.u32 %v2610, 16
      %v2709 = vrot.slane %v2707, 3
      %v2710 = vshll.u32 %v2610, 16
      %v2712 = vrot.slane %v2710, 4
      %v2713 = vor.u32 %v2709, %v2712
      %v2714 = vsel %vm1679, %v2704, %v2713
      %v2716 = vshrl.u32 %v2611, 16
      %v2718 = vrot.slane %v2716, 3
      %v2719 = vshll.u32 %v2611, 16
      %v2721 = vrot.slane %v2719, 4
      %v2722 = vor.u32 %v2718, %v2721
      %v2723 = vsel %vm1679, %v2713, %v2722
      %v2725 = vshrl.u32 %v2612, 16
      %v2727 = vrot.slane %v2725, 3
      %v2728 = vshll.u32 %v2612, 16
      %v2730 = vrot.slane %v2728, 4
      %v2731 = vor.u32 %v2727, %v2730
      %v2732 = vsel %vm1679, %v2722, %v2731
      %v2734 = vshrl.u32 %v2613, 16
      %v2736 = vrot.slane %v2734, 3
      %v2737 = vshll.u32 %v2613, 16
      %v2739 = vrot.slane %v2737, 4
      %v2740 = vor.u32 %v2736, %v2739
      %v2741 = vsel %vm1679, %v2731, %v2740
      %v2743 = vshrl.u32 %v2614, 16
      %v2745 = vrot.slane %v2743, 3
      %v2746 = vshll.u32 %v2614, 16
      %v2748 = vrot.slane %v2746, 4
      %v2749 = vor.u32 %v2745, %v2748
      %v2750 = vsel %vm1679, %v2740, %v2749
      %v2752 = vshrl.u32 %v2615, 16
      %v2754 = vrot.slane %v2752, 3
      %v2755 = vshll.u32 %v2615, 16
      %v2757 = vrot.slane %v2755, 4
      %v2758 = vor.u32 %v2754, %v2757
      %v2759 = vsel %vm1679, %v2749, %v2758
      %v2761 = vshrl.u32 %v2616, 16
      %v2763 = vrot.slane %v2761, 3
      %v2764 = vshll.u32 %v2616, 16
      %v2766 = vrot.slane %v2764, 4
      %v2767 = vor.u32 %v2763, %v2766
      %v2768 = vsel %vm1679, %v2758, %v2767
      %2769 = vrot.lane.b32.xlu0 %v2633, 6
      %v2770 = vpop.permute.xlu0 %2769
      %2771 = vrot.lane.b32.xlu0 %v2642, 6
      %v2772 = vpop.permute.xlu0 %2771
      %2773 = vrot.lane.b32.xlu0 %v2651, 6
      %v2774 = vpop.permute.xlu0 %2773
      %2775 = vrot.lane.b32.xlu0 %v2660, 6
      %v2776 = vpop.permute.xlu0 %2775
      %2777 = vrot.lane.b32.xlu0 %v2669, 6
      %v2778 = vpop.permute.xlu0 %2777
      %2779 = vrot.lane.b32.xlu0 %v2678, 6
      %v2780 = vpop.permute.xlu0 %2779
      %2781 = vrot.lane.b32.xlu0 %v2687, 6
      %v2782 = vpop.permute.xlu0 %2781
      %2783 = vrot.lane.b32.xlu0 %v2696, 6
      %v2784 = vpop.permute.xlu0 %2783
      %2785 = vrot.lane.b32.xlu0 %v2705, 6
      %v2786 = vpop.permute.xlu0 %2785
      %2787 = vrot.lane.b32.xlu0 %v2714, 6
      %v2788 = vpop.permute.xlu0 %2787
      %2789 = vrot.lane.b32.xlu0 %v2723, 6
      %v2790 = vpop.permute.xlu0 %2789
      %2791 = vrot.lane.b32.xlu0 %v2732, 6
      %v2792 = vpop.permute.xlu0 %2791
      %2793 = vrot.lane.b32.xlu0 %v2741, 6
      %v2794 = vpop.permute.xlu0 %2793
      %2795 = vrot.lane.b32.xlu0 %v2750, 6
      %v2796 = vpop.permute.xlu0 %2795
      %2797 = vrot.lane.b32.xlu0 %v2759, 6
      %v2798 = vpop.permute.xlu0 %2797
      %2799 = vrot.lane.b32.xlu0 %v2768, 6
      %v2800 = vpop.permute.xlu0 %2799
      %vm2817 = vcmask 64560
      %2818 = vst.msk [vmem:[#allocation3] sm:$0xff] %vm2817, %v2770
      %2819 = vst.msk [vmem:[#allocation3 + $0x8] sm:$0xff] %vm2817, %v2772
      %2820 = vst.msk [vmem:[#allocation3 + $0x10] sm:$0xff] %vm2817, %v2774
      %2821 = vst.msk [vmem:[#allocation3 + $0x18] sm:$0xff] %vm2817, %v2776
      %2822 = vst.msk [vmem:[#allocation3 + $0x20] sm:$0xff] %vm2817, %v2778
      %2823 = vst.msk [vmem:[#allocation3 + $0x28] sm:$0xff] %vm2817, %v2780
      %2824 = vst.msk [vmem:[#allocation3 + $0x30] sm:$0xff] %vm2817, %v2782
      %2825 = vst.msk [vmem:[#allocation3 + $0x38] sm:$0xff] %vm2817, %v2784
      %2826 = vst.msk [vmem:[#allocation3 + $0x40] sm:$0xff] %vm2817, %v2786
      %2827 = vst.msk [vmem:[#allocation3 + $0x48] sm:$0xff] %vm2817, %v2788
      %2828 = vst.msk [vmem:[#allocation3 + $0x50] sm:$0xff] %vm2817, %v2790
      %2829 = vst.msk [vmem:[#allocation3 + $0x58] sm:$0xff] %vm2817, %v2792
      %2830 = vst.msk [vmem:[#allocation3 + $0x60] sm:$0xff] %vm2817, %v2794
      %2831 = vst.msk [vmem:[#allocation3 + $0x68] sm:$0xff] %vm2817, %v2796
      %2832 = vst.msk [vmem:[#allocation3 + $0x70] sm:$0xff] %vm2817, %v2798
      %2833 = vst.msk [vmem:[#allocation3 + $0x78] sm:$0xff] %vm2817, %v2800
      %v2834 = vld [vmem:[#allocation2 + $0x8] sm:$0xf0]
      %v2835 = vld [vmem:[#allocation2 + $0x10] sm:$0xff]
      %v2836 = vld [vmem:[#allocation2 + $0x18] sm:$0xff]
      %v2837 = vld [vmem:[#allocation2 + $0x20] sm:$0xff]
      %v2838 = vld [vmem:[#allocation2 + $0x28] sm:$0xff]
      %v2839 = vld [vmem:[#allocation2 + $0x30] sm:$0xff]
      %v2840 = vld [vmem:[#allocation2 + $0x38] sm:$0xff]
      %v2841 = vld [vmem:[#allocation2 + $0x40] sm:$0xff]
      %v2842 = vld [vmem:[#allocation2 + $0x48] sm:$0xff]
      %v2843 = vld [vmem:[#allocation2 + $0x50] sm:$0xff]
      %v2844 = vld [vmem:[#allocation2 + $0x58] sm:$0xff]
      %v2845 = vld [vmem:[#allocation2 + $0x60] sm:$0xff]
      %v2846 = vld [vmem:[#allocation2 + $0x68] sm:$0xff]
      %v2847 = vld [vmem:[#allocation2 + $0x70] sm:$0xff]
      %v2848 = vld [vmem:[#allocation2 + $0x78] sm:$0xff]
      %v2849 = vld [vmem:[#allocation2 + $0x80] sm:$0xff]
      %v2850 = vld [vmem:[#allocation2 + $0x88] sm:$0xf]
      %v2868 = vrot.slane %v2834, 4
      %v2869 = vrot.slane %v2835, 4
      %v2870 = vsel %vm761, %v2868, %v2869
      %v2871 = vrot.slane %v2836, 4
      %v2872 = vsel %vm761, %v2869, %v2871
      %v2873 = vrot.slane %v2837, 4
      %v2874 = vsel %vm761, %v2871, %v2873
      %v2875 = vrot.slane %v2838, 4
      %v2876 = vsel %vm761, %v2873, %v2875
      %v2877 = vrot.slane %v2839, 4
      %v2878 = vsel %vm761, %v2875, %v2877
      %v2879 = vrot.slane %v2840, 4
      %v2880 = vsel %vm761, %v2877, %v2879
      %v2881 = vrot.slane %v2841, 4
      %v2882 = vsel %vm761, %v2879, %v2881
      %v2883 = vrot.slane %v2842, 4
      %v2884 = vsel %vm761, %v2881, %v2883
      %v2885 = vrot.slane %v2843, 4
      %v2886 = vsel %vm761, %v2883, %v2885
      %v2887 = vrot.slane %v2844, 4
      %v2888 = vsel %vm761, %v2885, %v2887
      %v2889 = vrot.slane %v2845, 4
      %v2890 = vsel %vm761, %v2887, %v2889
      %v2891 = vrot.slane %v2846, 4
      %v2892 = vsel %vm761, %v2889, %v2891
      %v2893 = vrot.slane %v2847, 4
      %v2894 = vsel %vm761, %v2891, %v2893
      %v2895 = vrot.slane %v2848, 4
      %v2896 = vsel %vm761, %v2893, %v2895
      %v2897 = vrot.slane %v2849, 4
      %v2898 = vsel %vm761, %v2895, %v2897
      %v2899 = vrot.slane %v2850, 4
      %v2900 = vsel %vm761, %v2897, %v2899
      %2901 = vrot.lane.b32.xlu0 %v2870, 8
      %v2902 = vpop.permute.xlu0 %2901
      %2903 = vrot.lane.b32.xlu0 %v2872, 8
      %v2904 = vpop.permute.xlu0 %2903
      %2905 = vrot.lane.b32.xlu0 %v2874, 8
      %v2906 = vpop.permute.xlu0 %2905
      %2907 = vrot.lane.b32.xlu0 %v2876, 8
      %v2908 = vpop.permute.xlu0 %2907
      %2909 = vrot.lane.b32.xlu0 %v2878, 8
      %v2910 = vpop.permute.xlu0 %2909
      %2911 = vrot.lane.b32.xlu0 %v2880, 8
      %v2912 = vpop.permute.xlu0 %2911
      %2913 = vrot.lane.b32.xlu0 %v2882, 8
      %v2914 = vpop.permute.xlu0 %2913
      %2915 = vrot.lane.b32.xlu0 %v2884, 8
      %v2916 = vpop.permute.xlu0 %2915
      %2917 = vrot.lane.b32.xlu0 %v2886, 8
      %v2918 = vpop.permute.xlu0 %2917
      %2919 = vrot.lane.b32.xlu0 %v2888, 8
      %v2920 = vpop.permute.xlu0 %2919
      %2921 = vrot.lane.b32.xlu0 %v2890, 8
      %v2922 = vpop.permute.xlu0 %2921
      %2923 = vrot.lane.b32.xlu0 %v2892, 8
      %v2924 = vpop.permute.xlu0 %2923
      %2925 = vrot.lane.b32.xlu0 %v2894, 8
      %v2926 = vpop.permute.xlu0 %2925
      %2927 = vrot.lane.b32.xlu0 %v2896, 8
      %v2928 = vpop.permute.xlu0 %2927
      %2929 = vrot.lane.b32.xlu0 %v2898, 8
      %v2930 = vpop.permute.xlu0 %2929
      %2931 = vrot.lane.b32.xlu0 %v2900, 8
      %v2932 = vpop.permute.xlu0 %2931
      %vm2949 = vcmask 80960
      %2950 = vst.msk [vmem:[#allocation3] sm:$0xff] %vm2949, %v2902
      %2951 = vst.msk [vmem:[#allocation3 + $0x8] sm:$0xff] %vm2949, %v2904
      %2952 = vst.msk [vmem:[#allocation3 + $0x10] sm:$0xff] %vm2949, %v2906
      %2953 = vst.msk [vmem:[#allocation3 + $0x18] sm:$0xff] %vm2949, %v2908
      %2954 = vst.msk [vmem:[#allocation3 + $0x20] sm:$0xff] %vm2949, %v2910
      %2955 = vst.msk [vmem:[#allocation3 + $0x28] sm:$0xff] %vm2949, %v2912
      %2956 = vst.msk [vmem:[#allocation3 + $0x30] sm:$0xff] %vm2949, %v2914
      %2957 = vst.msk [vmem:[#allocation3 + $0x38] sm:$0xff] %vm2949, %v2916
      %2958 = vst.msk [vmem:[#allocation3 + $0x40] sm:$0xff] %vm2949, %v2918
      %2959 = vst.msk [vmem:[#allocation3 + $0x48] sm:$0xff] %vm2949, %v2920
      %2960 = vst.msk [vmem:[#allocation3 + $0x50] sm:$0xff] %vm2949, %v2922
      %2961 = vst.msk [vmem:[#allocation3 + $0x58] sm:$0xff] %vm2949, %v2924
      %2962 = vst.msk [vmem:[#allocation3 + $0x60] sm:$0xff] %vm2949, %v2926
      %2963 = vst.msk [vmem:[#allocation3 + $0x68] sm:$0xff] %vm2949, %v2928
      %2964 = vst.msk [vmem:[#allocation3 + $0x70] sm:$0xff] %vm2949, %v2930
      %2965 = vst.msk [vmem:[#allocation3 + $0x78] sm:$0xff] %vm2949, %v2932
      %v2966 = vld [vmem:[#allocation2 + $0x8] sm:$0xf0]
      %v2967 = vld [vmem:[#allocation2 + $0x10] sm:$0xff]
      %v2968 = vld [vmem:[#allocation2 + $0x18] sm:$0xff]
      %v2969 = vld [vmem:[#allocation2 + $0x20] sm:$0xff]
      %v2970 = vld [vmem:[#allocation2 + $0x28] sm:$0xff]
      %v2971 = vld [vmem:[#allocation2 + $0x30] sm:$0xff]
      %v2972 = vld [vmem:[#allocation2 + $0x38] sm:$0xff]
      %v2973 = vld [vmem:[#allocation2 + $0x40] sm:$0xff]
      %v2974 = vld [vmem:[#allocation2 + $0x48] sm:$0xff]
      %v2975 = vld [vmem:[#allocation2 + $0x50] sm:$0xff]
      %v2976 = vld [vmem:[#allocation2 + $0x58] sm:$0xff]
      %v2977 = vld [vmem:[#allocation2 + $0x60] sm:$0xff]
      %v2978 = vld [vmem:[#allocation2 + $0x68] sm:$0xff]
      %v2979 = vld [vmem:[#allocation2 + $0x70] sm:$0xff]
      %v2980 = vld [vmem:[#allocation2 + $0x78] sm:$0xff]
      %v2981 = vld [vmem:[#allocation2 + $0x80] sm:$0xff]
      %v2982 = vld [vmem:[#allocation2 + $0x88] sm:$0x1f]
      %v2983 = vsel %vm2332, %v2966, 0
      %v2984 = vsel %vm2333, %v2967, 0
      %v2985 = vsel %vm2334, %v2968, 0
      %v2986 = vsel %vm2335, %v2969, 0
      %v2987 = vsel %vm2336, %v2970, 0
      %v2988 = vsel %vm2337, %v2971, 0
      %v2989 = vsel %vm2338, %v2972, 0
      %v2990 = vsel %vm2339, %v2973, 0
      %v2991 = vsel %vm2340, %v2974, 0
      %v2992 = vsel %vm2341, %v2975, 0
      %v2993 = vsel %vm2342, %v2976, 0
      %v2994 = vsel %vm2343, %v2977, 0
      %v2995 = vsel %vm2344, %v2978, 0
      %v2996 = vsel %vm2345, %v2979, 0
      %v2997 = vsel %vm2346, %v2980, 0
      %v2998 = vsel %vm2347, %v2981, 0
      %v2999 = vsel %vm2348, %v2982, 0
      %v3001 = vshrl.u32 %v2983, 16
      %v3003 = vrot.slane %v3001, 4
      %v3004 = vshll.u32 %v2983, 16
      %v3006 = vrot.slane %v3004, 5
      %v3007 = vor.u32 %v3003, %v3006
      %v3009 = vshrl.u32 %v2984, 16
      %v3011 = vrot.slane %v3009, 4
      %v3012 = vshll.u32 %v2984, 16
      %v3014 = vrot.slane %v3012, 5
      %v3015 = vor.u32 %v3011, %v3014
      %v3016 = vsel %vm1501, %v3007, %v3015
      %v3018 = vshrl.u32 %v2985, 16
      %v3020 = vrot.slane %v3018, 4
      %v3021 = vshll.u32 %v2985, 16
      %v3023 = vrot.slane %v3021, 5
      %v3024 = vor.u32 %v3020, %v3023
      %v3025 = vsel %vm1501, %v3015, %v3024
      %v3027 = vshrl.u32 %v2986, 16
      %v3029 = vrot.slane %v3027, 4
      %v3030 = vshll.u32 %v2986, 16
      %v3032 = vrot.slane %v3030, 5
      %v3033 = vor.u32 %v3029, %v3032
      %v3034 = vsel %vm1501, %v3024, %v3033
      %v3036 = vshrl.u32 %v2987, 16
      %v3038 = vrot.slane %v3036, 4
      %v3039 = vshll.u32 %v2987, 16
      %v3041 = vrot.slane %v3039, 5
      %v3042 = vor.u32 %v3038, %v3041
      %v3043 = vsel %vm1501, %v3033, %v3042
      %v3045 = vshrl.u32 %v2988, 16
      %v3047 = vrot.slane %v3045, 4
      %v3048 = vshll.u32 %v2988, 16
      %v3050 = vrot.slane %v3048, 5
      %v3051 = vor.u32 %v3047, %v3050
      %v3052 = vsel %vm1501, %v3042, %v3051
      %v3054 = vshrl.u32 %v2989, 16
      %v3056 = vrot.slane %v3054, 4
      %v3057 = vshll.u32 %v2989, 16
      %v3059 = vrot.slane %v3057, 5
      %v3060 = vor.u32 %v3056, %v3059
      %v3061 = vsel %vm1501, %v3051, %v3060
      %v3063 = vshrl.u32 %v2990, 16
      %v3065 = vrot.slane %v3063, 4
      %v3066 = vshll.u32 %v2990, 16
      %v3068 = vrot.slane %v3066, 5
      %v3069 = vor.u32 %v3065, %v3068
      %v3070 = vsel %vm1501, %v3060, %v3069
      %v3072 = vshrl.u32 %v2991, 16
      %v3074 = vrot.slane %v3072, 4
      %v3075 = vshll.u32 %v2991, 16
      %v3077 = vrot.slane %v3075, 5
      %v3078 = vor.u32 %v3074, %v3077
      %v3079 = vsel %vm1501, %v3069, %v3078
      %v3081 = vshrl.u32 %v2992, 16
      %v3083 = vrot.slane %v3081, 4
      %v3084 = vshll.u32 %v2992, 16
      %v3086 = vrot.slane %v3084, 5
      %v3087 = vor.u32 %v3083, %v3086
      %v3088 = vsel %vm1501, %v3078, %v3087
      %v3090 = vshrl.u32 %v2993, 16
      %v3092 = vrot.slane %v3090, 4
      %v3093 = vshll.u32 %v2993, 16
      %v3095 = vrot.slane %v3093, 5
      %v3096 = vor.u32 %v3092, %v3095
      %v3097 = vsel %vm1501, %v3087, %v3096
      %v3099 = vshrl.u32 %v2994, 16
      %v3101 = vrot.slane %v3099, 4
      %v3102 = vshll.u32 %v2994, 16
      %v3104 = vrot.slane %v3102, 5
      %v3105 = vor.u32 %v3101, %v3104
      %v3106 = vsel %vm1501, %v3096, %v3105
      %v3108 = vshrl.u32 %v2995, 16
      %v3110 = vrot.slane %v3108, 4
      %v3111 = vshll.u32 %v2995, 16
      %v3113 = vrot.slane %v3111, 5
      %v3114 = vor.u32 %v3110, %v3113
      %v3115 = vsel %vm1501, %v3105, %v3114
      %v3117 = vshrl.u32 %v2996, 16
      %v3119 = vrot.slane %v3117, 4
      %v3120 = vshll.u32 %v2996, 16
      %v3122 = vrot.slane %v3120, 5
      %v3123 = vor.u32 %v3119, %v3122
      %v3124 = vsel %vm1501, %v3114, %v3123
      %v3126 = vshrl.u32 %v2997, 16
      %v3128 = vrot.slane %v3126, 4
      %v3129 = vshll.u32 %v2997, 16
      %v3131 = vrot.slane %v3129, 5
      %v3132 = vor.u32 %v3128, %v3131
      %v3133 = vsel %vm1501, %v3123, %v3132
      %v3135 = vshrl.u32 %v2998, 16
      %v3137 = vrot.slane %v3135, 4
      %v3138 = vshll.u32 %v2998, 16
      %v3140 = vrot.slane %v3138, 5
      %v3141 = vor.u32 %v3137, %v3140
      %v3142 = vsel %vm1501, %v3132, %v3141
      %v3144 = vshrl.u32 %v2999, 16
      %v3146 = vrot.slane %v3144, 4
      %v3147 = vshll.u32 %v2999, 16
      %v3149 = vrot.slane %v3147, 5
      %v3150 = vor.u32 %v3146, %v3149
      %v3151 = vsel %vm1501, %v3141, %v3150
      %3152 = vrot.lane.b32.xlu0 %v3016, 10
      %v3153 = vpop.permute.xlu0 %3152
      %3154 = vrot.lane.b32.xlu0 %v3025, 10
      %v3155 = vpop.permute.xlu0 %3154
      %3156 = vrot.lane.b32.xlu0 %v3034, 10
      %v3157 = vpop.permute.xlu0 %3156
      %3158 = vrot.lane.b32.xlu0 %v3043, 10
      %v3159 = vpop.permute.xlu0 %3158
      %3160 = vrot.lane.b32.xlu0 %v3052, 10
      %v3161 = vpop.permute.xlu0 %3160
      %3162 = vrot.lane.b32.xlu0 %v3061, 10
      %v3163 = vpop.permute.xlu0 %3162
      %3164 = vrot.lane.b32.xlu0 %v3070, 10
      %v3165 = vpop.permute.xlu0 %3164
      %3166 = vrot.lane.b32.xlu0 %v3079, 10
      %v3167 = vpop.permute.xlu0 %3166
      %3168 = vrot.lane.b32.xlu0 %v3088, 10
      %v3169 = vpop.permute.xlu0 %3168
      %3170 = vrot.lane.b32.xlu0 %v3097, 10
      %v3171 = vpop.permute.xlu0 %3170
      %3172 = vrot.lane.b32.xlu0 %v3106, 10
      %v3173 = vpop.permute.xlu0 %3172
      %3174 = vrot.lane.b32.xlu0 %v3115, 10
      %v3175 = vpop.permute.xlu0 %3174
      %3176 = vrot.lane.b32.xlu0 %v3124, 10
      %v3177 = vpop.permute.xlu0 %3176
      %3178 = vrot.lane.b32.xlu0 %v3133, 10
      %v3179 = vpop.permute.xlu0 %3178
      %3180 = vrot.lane.b32.xlu0 %v3142, 10
      %v3181 = vpop.permute.xlu0 %3180
      %3182 = vrot.lane.b32.xlu0 %v3151, 10
      %v3183 = vpop.permute.xlu0 %3182
      %vm3200 = vcmask 97360
      %3201 = vst.msk [vmem:[#allocation3] sm:$0xff] %vm3200, %v3153
      %3202 = vst.msk [vmem:[#allocation3 + $0x8] sm:$0xff] %vm3200, %v3155
      %3203 = vst.msk [vmem:[#allocation3 + $0x10] sm:$0xff] %vm3200, %v3157
      %3204 = vst.msk [vmem:[#allocation3 + $0x18] sm:$0xff] %vm3200, %v3159
      %3205 = vst.msk [vmem:[#allocation3 + $0x20] sm:$0xff] %vm3200, %v3161
      %3206 = vst.msk [vmem:[#allocation3 + $0x28] sm:$0xff] %vm3200, %v3163
      %3207 = vst.msk [vmem:[#allocation3 + $0x30] sm:$0xff] %vm3200, %v3165
      %3208 = vst.msk [vmem:[#allocation3 + $0x38] sm:$0xff] %vm3200, %v3167
      %3209 = vst.msk [vmem:[#allocation3 + $0x40] sm:$0xff] %vm3200, %v3169
      %3210 = vst.msk [vmem:[#allocation3 + $0x48] sm:$0xff] %vm3200, %v3171
      %3211 = vst.msk [vmem:[#allocation3 + $0x50] sm:$0xff] %vm3200, %v3173
      %3212 = vst.msk [vmem:[#allocation3 + $0x58] sm:$0xff] %vm3200, %v3175
      %3213 = vst.msk [vmem:[#allocation3 + $0x60] sm:$0xff] %vm3200, %v3177
      %3214 = vst.msk [vmem:[#allocation3 + $0x68] sm:$0xff] %vm3200, %v3179
      %3215 = vst.msk [vmem:[#allocation3 + $0x70] sm:$0xff] %vm3200, %v3181
      %3216 = vst.msk [vmem:[#allocation3 + $0x78] sm:$0xff] %vm3200, %v3183
      %v3217 = vld [vmem:[#allocation2 + $0x10] sm:$0xf8]
      %v3218 = vld [vmem:[#allocation2 + $0x18] sm:$0xff]
      %v3219 = vld [vmem:[#allocation2 + $0x20] sm:$0xff]
      %v3220 = vld [vmem:[#allocation2 + $0x28] sm:$0xff]
      %v3221 = vld [vmem:[#allocation2 + $0x30] sm:$0xff]
      %v3222 = vld [vmem:[#allocation2 + $0x38] sm:$0xff]
      %v3223 = vld [vmem:[#allocation2 + $0x40] sm:$0xff]
      %v3224 = vld [vmem:[#allocation2 + $0x48] sm:$0xff]
      %v3225 = vld [vmem:[#allocation2 + $0x50] sm:$0xff]
      %v3226 = vld [vmem:[#allocation2 + $0x58] sm:$0xff]
      %v3227 = vld [vmem:[#allocation2 + $0x60] sm:$0xff]
      %v3228 = vld [vmem:[#allocation2 + $0x68] sm:$0xff]
      %v3229 = vld [vmem:[#allocation2 + $0x70] sm:$0xff]
      %v3230 = vld [vmem:[#allocation2 + $0x78] sm:$0xff]
      %v3231 = vld [vmem:[#allocation2 + $0x80] sm:$0xff]
      %v3232 = vld [vmem:[#allocation2 + $0x88] sm:$0xff]
      %v3233 = vld [vmem:[#allocation2 + $0x90] sm:$0xf]
      %v3234 = vsel %vm1645, %v3217, 0
      %v3235 = vsel %vm1646, %v3218, 0
      %v3236 = vsel %vm1647, %v3219, 0
      %v3237 = vsel %vm1648, %v3220, 0
      %v3238 = vsel %vm1649, %v3221, 0
      %v3239 = vsel %vm1650, %v3222, 0
      %v3240 = vsel %vm1651, %v3223, 0
      %v3241 = vsel %vm1652, %v3224, 0
      %v3242 = vsel %vm1653, %v3225, 0
      %v3243 = vsel %vm1654, %v3226, 0
      %v3244 = vsel %vm1655, %v3227, 0
      %v3245 = vsel %vm1656, %v3228, 0
      %v3246 = vsel %vm1657, %v3229, 0
      %v3247 = vsel %vm1658, %v3230, 0
      %v3248 = vsel %vm1659, %v3231, 0
      %v3249 = vsel %vm1660, %v3232, 0
      %v3250 = vsel %vm1661, %v3233, 0
      %v3252 = vshrl.u32 %v3234, 16
      %v3254 = vrot.slane %v3252, 3
      %v3255 = vshll.u32 %v3234, 16
      %v3257 = vrot.slane %v3255, 4
      %v3258 = vor.u32 %v3254, %v3257
      %v3260 = vshrl.u32 %v3235, 16
      %v3262 = vrot.slane %v3260, 3
      %v3263 = vshll.u32 %v3235, 16
      %v3265 = vrot.slane %v3263, 4
      %v3266 = vor.u32 %v3262, %v3265
      %v3267 = vsel %vm1679, %v3258, %v3266
      %v3269 = vshrl.u32 %v3236, 16
      %v3271 = vrot.slane %v3269, 3
      %v3272 = vshll.u32 %v3236, 16
      %v3274 = vrot.slane %v3272, 4
      %v3275 = vor.u32 %v3271, %v3274
      %v3276 = vsel %vm1679, %v3266, %v3275
      %v3278 = vshrl.u32 %v3237, 16
      %v3280 = vrot.slane %v3278, 3
      %v3281 = vshll.u32 %v3237, 16
      %v3283 = vrot.slane %v3281, 4
      %v3284 = vor.u32 %v3280, %v3283
      %v3285 = vsel %vm1679, %v3275, %v3284
      %v3287 = vshrl.u32 %v3238, 16
      %v3289 = vrot.slane %v3287, 3
      %v3290 = vshll.u32 %v3238, 16
      %v3292 = vrot.slane %v3290, 4
      %v3293 = vor.u32 %v3289, %v3292
      %v3294 = vsel %vm1679, %v3284, %v3293
      %v3296 = vshrl.u32 %v3239, 16
      %v3298 = vrot.slane %v3296, 3
      %v3299 = vshll.u32 %v3239, 16
      %v3301 = vrot.slane %v3299, 4
      %v3302 = vor.u32 %v3298, %v3301
      %v3303 = vsel %vm1679, %v3293, %v3302
      %v3305 = vshrl.u32 %v3240, 16
      %v3307 = vrot.slane %v3305, 3
      %v3308 = vshll.u32 %v3240, 16
      %v3310 = vrot.slane %v3308, 4
      %v3311 = vor.u32 %v3307, %v3310
      %v3312 = vsel %vm1679, %v3302, %v3311
      %v3314 = vshrl.u32 %v3241, 16
      %v3316 = vrot.slane %v3314, 3
      %v3317 = vshll.u32 %v3241, 16
      %v3319 = vrot.slane %v3317, 4
      %v3320 = vor.u32 %v3316, %v3319
      %v3321 = vsel %vm1679, %v3311, %v3320
      %v3323 = vshrl.u32 %v3242, 16
      %v3325 = vrot.slane %v3323, 3
      %v3326 = vshll.u32 %v3242, 16
      %v3328 = vrot.slane %v3326, 4
      %v3329 = vor.u32 %v3325, %v3328
      %v3330 = vsel %vm1679, %v3320, %v3329
      %v3332 = vshrl.u32 %v3243, 16
      %v3334 = vrot.slane %v3332, 3
      %v3335 = vshll.u32 %v3243, 16
      %v3337 = vrot.slane %v3335, 4
      %v3338 = vor.u32 %v3334, %v3337
      %v3339 = vsel %vm1679, %v3329, %v3338
      %v3341 = vshrl.u32 %v3244, 16
      %v3343 = vrot.slane %v3341, 3
      %v3344 = vshll.u32 %v3244, 16
      %v3346 = vrot.slane %v3344, 4
      %v3347 = vor.u32 %v3343, %v3346
      %v3348 = vsel %vm1679, %v3338, %v3347
      %v3350 = vshrl.u32 %v3245, 16
      %v3352 = vrot.slane %v3350, 3
      %v3353 = vshll.u32 %v3245, 16
      %v3355 = vrot.slane %v3353, 4
      %v3356 = vor.u32 %v3352, %v3355
      %v3357 = vsel %vm1679, %v3347, %v3356
      %v3359 = vshrl.u32 %v3246, 16
      %v3361 = vrot.slane %v3359, 3
      %v3362 = vshll.u32 %v3246, 16
      %v3364 = vrot.slane %v3362, 4
      %v3365 = vor.u32 %v3361, %v3364
      %v3366 = vsel %vm1679, %v3356, %v3365
      %v3368 = vshrl.u32 %v3247, 16
      %v3370 = vrot.slane %v3368, 3
      %v3371 = vshll.u32 %v3247, 16
      %v3373 = vrot.slane %v3371, 4
      %v3374 = vor.u32 %v3370, %v3373
      %v3375 = vsel %vm1679, %v3365, %v3374
      %v3377 = vshrl.u32 %v3248, 16
      %v3379 = vrot.slane %v3377, 3
      %v3380 = vshll.u32 %v3248, 16
      %v3382 = vrot.slane %v3380, 4
      %v3383 = vor.u32 %v3379, %v3382
      %v3384 = vsel %vm1679, %v3374, %v3383
      %v3386 = vshrl.u32 %v3249, 16
      %v3388 = vrot.slane %v3386, 3
      %v3389 = vshll.u32 %v3249, 16
      %v3391 = vrot.slane %v3389, 4
      %v3392 = vor.u32 %v3388, %v3391
      %v3393 = vsel %vm1679, %v3383, %v3392
      %v3395 = vshrl.u32 %v3250, 16
      %v3397 = vrot.slane %v3395, 3
      %v3398 = vshll.u32 %v3250, 16
      %v3400 = vrot.slane %v3398, 4
      %v3401 = vor.u32 %v3397, %v3400
      %v3402 = vsel %vm1679, %v3392, %v3401
      %3403 = vrot.lane.b32.xlu0 %v3267, 12
      %v3404 = vpop.permute.xlu0 %3403
      %3405 = vrot.lane.b32.xlu0 %v3276, 12
      %v3406 = vpop.permute.xlu0 %3405
      %3407 = vrot.lane.b32.xlu0 %v3285, 12
      %v3408 = vpop.permute.xlu0 %3407
      %3409 = vrot.lane.b32.xlu0 %v3294, 12
      %v3410 = vpop.permute.xlu0 %3409
      %3411 = vrot.lane.b32.xlu0 %v3303, 12
      %v3412 = vpop.permute.xlu0 %3411
      %3413 = vrot.lane.b32.xlu0 %v3312, 12
      %v3414 = vpop.permute.xlu0 %3413
      %3415 = vrot.lane.b32.xlu0 %v3321, 12
      %v3416 = vpop.permute.xlu0 %3415
      %3417 = vrot.lane.b32.xlu0 %v3330, 12
      %v3418 = vpop.permute.xlu0 %3417
      %3419 = vrot.lane.b32.xlu0 %v3339, 12
      %v3420 = vpop.permute.xlu0 %3419
      %3421 = vrot.lane.b32.xlu0 %v3348, 12
      %v3422 = vpop.permute.xlu0 %3421
      %3423 = vrot.lane.b32.xlu0 %v3357, 12
      %v3424 = vpop.permute.xlu0 %3423
      %3425 = vrot.lane.b32.xlu0 %v3366, 12
      %v3426 = vpop.permute.xlu0 %3425
      %3427 = vrot.lane.b32.xlu0 %v3375, 12
      %v3428 = vpop.permute.xlu0 %3427
      %3429 = vrot.lane.b32.xlu0 %v3384, 12
      %v3430 = vpop.permute.xlu0 %3429
      %3431 = vrot.lane.b32.xlu0 %v3393, 12
      %v3432 = vpop.permute.xlu0 %3431
      %3433 = vrot.lane.b32.xlu0 %v3402, 12
      %v3434 = vpop.permute.xlu0 %3433
      %vm3451 = vcmask 113760
      %3452 = vst.msk [vmem:[#allocation3] sm:$0xff] %vm3451, %v3404
      %3453 = vst.msk [vmem:[#allocation3 + $0x8] sm:$0xff] %vm3451, %v3406
      %3454 = vst.msk [vmem:[#allocation3 + $0x10] sm:$0xff] %vm3451, %v3408
      %3455 = vst.msk [vmem:[#allocation3 + $0x18] sm:$0xff] %vm3451, %v3410
      %3456 = vst.msk [vmem:[#allocation3 + $0x20] sm:$0xff] %vm3451, %v3412
      %3457 = vst.msk [vmem:[#allocation3 + $0x28] sm:$0xff] %vm3451, %v3414
      %3458 = vst.msk [vmem:[#allocation3 + $0x30] sm:$0xff] %vm3451, %v3416
      %3459 = vst.msk [vmem:[#allocation3 + $0x38] sm:$0xff] %vm3451, %v3418
      %3460 = vst.msk [vmem:[#allocation3 + $0x40] sm:$0xff] %vm3451, %v3420
      %3461 = vst.msk [vmem:[#allocation3 + $0x48] sm:$0xff] %vm3451, %v3422
      %3462 = vst.msk [vmem:[#allocation3 + $0x50] sm:$0xff] %vm3451, %v3424
      %3463 = vst.msk [vmem:[#allocation3 + $0x58] sm:$0xff] %vm3451, %v3426
      %3464 = vst.msk [vmem:[#allocation3 + $0x60] sm:$0xff] %vm3451, %v3428
      %3465 = vst.msk [vmem:[#allocation3 + $0x68] sm:$0xff] %vm3451, %v3430
      %3466 = vst.msk [vmem:[#allocation3 + $0x70] sm:$0xff] %vm3451, %v3432
      %3467 = vst.msk [vmem:[#allocation3 + $0x78] sm:$0xff] %vm3451, %v3434
      %v3468 = vld [vmem:[#allocation2 + $0x10] sm:$0xf0]
      %v3469 = vld [vmem:[#allocation2 + $0x18] sm:$0xff]
      %v3470 = vld [vmem:[#allocation2 + $0x20] sm:$0xff]
      %v3471 = vld [vmem:[#allocation2 + $0x28] sm:$0xff]
      %v3472 = vld [vmem:[#allocation2 + $0x30] sm:$0xff]
      %v3473 = vld [vmem:[#allocation2 + $0x38] sm:$0xff]
      %v3474 = vld [vmem:[#allocation2 + $0x40] sm:$0xff]
      %v3475 = vld [vmem:[#allocation2 + $0x48] sm:$0xff]
      %v3476 = vld [vmem:[#allocation2 + $0x50] sm:$0xff]
      %v3477 = vld [vmem:[#allocation2 + $0x58] sm:$0xff]
      %v3478 = vld [vmem:[#allocation2 + $0x60] sm:$0xff]
      %v3479 = vld [vmem:[#allocation2 + $0x68] sm:$0xff]
      %v3480 = vld [vmem:[#allocation2 + $0x70] sm:$0xff]
      %v3481 = vld [vmem:[#allocation2 + $0x78] sm:$0xff]
      %v3482 = vld [vmem:[#allocation2 + $0x80] sm:$0xff]
      %v3483 = vld [vmem:[#allocation2 + $0x88] sm:$0xff]
      %v3484 = vld [vmem:[#allocation2 + $0x90] sm:$0xf]
      %v3502 = vrot.slane %v3468, 4
      %v3503 = vrot.slane %v3469, 4
      %v3504 = vsel %vm761, %v3502, %v3503
      %v3505 = vrot.slane %v3470, 4
      %v3506 = vsel %vm761, %v3503, %v3505
      %v3507 = vrot.slane %v3471, 4
      %v3508 = vsel %vm761, %v3505, %v3507
      %v3509 = vrot.slane %v3472, 4
      %v3510 = vsel %vm761, %v3507, %v3509
      %v3511 = vrot.slane %v3473, 4
      %v3512 = vsel %vm761, %v3509, %v3511
      %v3513 = vrot.slane %v3474, 4
      %v3514 = vsel %vm761, %v3511, %v3513
      %v3515 = vrot.slane %v3475, 4
      %v3516 = vsel %vm761, %v3513, %v3515
      %v3517 = vrot.slane %v3476, 4
      %v3518 = vsel %vm761, %v3515, %v3517
      %v3519 = vrot.slane %v3477, 4
      %v3520 = vsel %vm761, %v3517, %v3519
      %v3521 = vrot.slane %v3478, 4
      %v3522 = vsel %vm761, %v3519, %v3521
      %v3523 = vrot.slane %v3479, 4
      %v3524 = vsel %vm761, %v3521, %v3523
      %v3525 = vrot.slane %v3480, 4
      %v3526 = vsel %vm761, %v3523, %v3525
      %v3527 = vrot.slane %v3481, 4
      %v3528 = vsel %vm761, %v3525, %v3527
      %v3529 = vrot.slane %v3482, 4
      %v3530 = vsel %vm761, %v3527, %v3529
      %v3531 = vrot.slane %v3483, 4
      %v3532 = vsel %vm761, %v3529, %v3531
      %v3533 = vrot.slane %v3484, 4
      %v3534 = vsel %vm761, %v3531, %v3533
      %3535 = vrot.lane.b32.xlu0 %v3504, 14
      %v3536 = vpop.permute.xlu0 %3535
      %3537 = vrot.lane.b32.xlu0 %v3506, 14
      %v3538 = vpop.permute.xlu0 %3537
      %3539 = vrot.lane.b32.xlu0 %v3508, 14
      %v3540 = vpop.permute.xlu0 %3539
      %3541 = vrot.lane.b32.xlu0 %v3510, 14
      %v3542 = vpop.permute.xlu0 %3541
      %3543 = vrot.lane.b32.xlu0 %v3512, 14
      %v3544 = vpop.permute.xlu0 %3543
      %3545 = vrot.lane.b32.xlu0 %v3514, 14
      %v3546 = vpop.permute.xlu0 %3545
      %3547 = vrot.lane.b32.xlu0 %v3516, 14
      %v3548 = vpop.permute.xlu0 %3547
      %3549 = vrot.lane.b32.xlu0 %v3518, 14
      %v3550 = vpop.permute.xlu0 %3549
      %3551 = vrot.lane.b32.xlu0 %v3520, 14
      %v3552 = vpop.permute.xlu0 %3551
      %3553 = vrot.lane.b32.xlu0 %v3522, 14
      %v3554 = vpop.permute.xlu0 %3553
      %3555 = vrot.lane.b32.xlu0 %v3524, 14
      %v3556 = vpop.permute.xlu0 %3555
      %3557 = vrot.lane.b32.xlu0 %v3526, 14
      %v3558 = vpop.permute.xlu0 %3557
      %3559 = vrot.lane.b32.xlu0 %v3528, 14
      %v3560 = vpop.permute.xlu0 %3559
      %3561 = vrot.lane.b32.xlu0 %v3530, 14
      %v3562 = vpop.permute.xlu0 %3561
      %3563 = vrot.lane.b32.xlu0 %v3532, 14
      %v3564 = vpop.permute.xlu0 %3563
      %3565 = vrot.lane.b32.xlu0 %v3534, 14
      %v3566 = vpop.permute.xlu0 %3565
      %vm3583 = vcmask 130160
      %3584 = vst.msk [vmem:[#allocation3] sm:$0xff] %vm3583, %v3536
      %3585 = vst.msk [vmem:[#allocation3 + $0x8] sm:$0xff] %vm3583, %v3538
      %3586 = vst.msk [vmem:[#allocation3 + $0x10] sm:$0xff] %vm3583, %v3540
      %3587 = vst.msk [vmem:[#allocation3 + $0x18] sm:$0xff] %vm3583, %v3542
      %3588 = vst.msk [vmem:[#allocation3 + $0x20] sm:$0xff] %vm3583, %v3544
      %3589 = vst.msk [vmem:[#allocation3 + $0x28] sm:$0xff] %vm3583, %v3546
      %3590 = vst.msk [vmem:[#allocation3 + $0x30] sm:$0xff] %vm3583, %v3548
      %3591 = vst.msk [vmem:[#allocation3 + $0x38] sm:$0xff] %vm3583, %v3550
      %3592 = vst.msk [vmem:[#allocation3 + $0x40] sm:$0xff] %vm3583, %v3552
      %3593 = vst.msk [vmem:[#allocation3 + $0x48] sm:$0xff] %vm3583, %v3554
      %3594 = vst.msk [vmem:[#allocation3 + $0x50] sm:$0xff] %vm3583, %v3556
      %3595 = vst.msk [vmem:[#allocation3 + $0x58] sm:$0xff] %vm3583, %v3558
      %3596 = vst.msk [vmem:[#allocation3 + $0x60] sm:$0xff] %vm3583, %v3560
      %3597 = vst.msk [vmem:[#allocation3 + $0x68] sm:$0xff] %vm3583, %v3562
      %3598 = vst.msk [vmem:[#allocation3 + $0x70] sm:$0xff] %vm3583, %v3564
      %3599 = vst.msk [vmem:[#allocation3 + $0x78] sm:$0xff] %vm3583, %v3566
      %v3600 = vld [vmem:[#allocation2 + $0x10] sm:$0xf0]
      %v3601 = vld [vmem:[#allocation2 + $0x18] sm:$0xff]
      %v3602 = vld [vmem:[#allocation2 + $0x20] sm:$0xff]
      %v3603 = vld [vmem:[#allocation2 + $0x28] sm:$0xff]
      %v3604 = vld [vmem:[#allocation2 + $0x30] sm:$0xff]
      %v3605 = vld [vmem:[#allocation2 + $0x38] sm:$0xff]
      %v3606 = vld [vmem:[#allocation2 + $0x40] sm:$0xff]
      %v3607 = vld [vmem:[#allocation2 + $0x48] sm:$0xff]
      %v3608 = vld [vmem:[#allocation2 + $0x50] sm:$0xff]
      %v3609 = vld [vmem:[#allocation2 + $0x58] sm:$0xff]
      %v3610 = vld [vmem:[#allocation2 + $0x60] sm:$0xff]
      %v3611 = vld [vmem:[#allocation2 + $0x68] sm:$0xff]
      %v3612 = vld [vmem:[#allocation2 + $0x70] sm:$0xff]
      %v3613 = vld [vmem:[#allocation2 + $0x78] sm:$0xff]
      %v3614 = vld [vmem:[#allocation2 + $0x80] sm:$0xff]
      %v3615 = vld [vmem:[#allocation2 + $0x88] sm:$0xff]
      %v3616 = vld [vmem:[#allocation2 + $0x90] sm:$0x1f]
      %v3617 = vsel %vm2332, %v3600, 0
      %v3618 = vsel %vm2333, %v3601, 0
      %v3619 = vsel %vm2334, %v3602, 0
      %v3620 = vsel %vm2335, %v3603, 0
      %v3621 = vsel %vm2336, %v3604, 0
      %v3622 = vsel %vm2337, %v3605, 0
      %v3623 = vsel %vm2338, %v3606, 0
      %v3624 = vsel %vm2339, %v3607, 0
      %v3625 = vsel %vm2340, %v3608, 0
      %v3626 = vsel %vm2341, %v3609, 0
      %v3627 = vsel %vm2342, %v3610, 0
      %v3628 = vsel %vm2343, %v3611, 0
      %v3629 = vsel %vm2344, %v3612, 0
      %v3630 = vsel %vm2345, %v3613, 0
      %v3631 = vsel %vm2346, %v3614, 0
      %v3632 = vsel %vm2347, %v3615, 0
      %v3633 = vsel %vm2348, %v3616, 0
      %v3635 = vshrl.u32 %v3617, 16
      %v3637 = vrot.slane %v3635, 4
      %v3638 = vshll.u32 %v3617, 16
      %v3640 = vrot.slane %v3638, 5
      %v3641 = vor.u32 %v3637, %v3640
      %v3643 = vshrl.u32 %v3618, 16
      %v3645 = vrot.slane %v3643, 4
      %v3646 = vshll.u32 %v3618, 16
      %v3648 = vrot.slane %v3646, 5
      %v3649 = vor.u32 %v3645, %v3648
      %v3650 = vsel %vm1501, %v3641, %v3649
      %v3652 = vshrl.u32 %v3619, 16
      %v3654 = vrot.slane %v3652, 4
      %v3655 = vshll.u32 %v3619, 16
      %v3657 = vrot.slane %v3655, 5
      %v3658 = vor.u32 %v3654, %v3657
      %v3659 = vsel %vm1501, %v3649, %v3658
      %v3661 = vshrl.u32 %v3620, 16
      %v3663 = vrot.slane %v3661, 4
      %v3664 = vshll.u32 %v3620, 16
      %v3666 = vrot.slane %v3664, 5
      %v3667 = vor.u32 %v3663, %v3666
      %v3668 = vsel %vm1501, %v3658, %v3667
      %v3670 = vshrl.u32 %v3621, 16
      %v3672 = vrot.slane %v3670, 4
      %v3673 = vshll.u32 %v3621, 16
      %v3675 = vrot.slane %v3673, 5
      %v3676 = vor.u32 %v3672, %v3675
      %v3677 = vsel %vm1501, %v3667, %v3676
      %v3679 = vshrl.u32 %v3622, 16
      %v3681 = vrot.slane %v3679, 4
      %v3682 = vshll.u32 %v3622, 16
      %v3684 = vrot.slane %v3682, 5
      %v3685 = vor.u32 %v3681, %v3684
      %v3686 = vsel %vm1501, %v3676, %v3685
      %v3688 = vshrl.u32 %v3623, 16
      %v3690 = vrot.slane %v3688, 4
      %v3691 = vshll.u32 %v3623, 16
      %v3693 = vrot.slane %v3691, 5
      %v3694 = vor.u32 %v3690, %v3693
      %v3695 = vsel %vm1501, %v3685, %v3694
      %v3697 = vshrl.u32 %v3624, 16
      %v3699 = vrot.slane %v3697, 4
      %v3700 = vshll.u32 %v3624, 16
      %v3702 = vrot.slane %v3700, 5
      %v3703 = vor.u32 %v3699, %v3702
      %v3704 = vsel %vm1501, %v3694, %v3703
      %v3706 = vshrl.u32 %v3625, 16
      %v3708 = vrot.slane %v3706, 4
      %v3709 = vshll.u32 %v3625, 16
      %v3711 = vrot.slane %v3709, 5
      %v3712 = vor.u32 %v3708, %v3711
      %v3713 = vsel %vm1501, %v3703, %v3712
      %v3715 = vshrl.u32 %v3626, 16
      %v3717 = vrot.slane %v3715, 4
      %v3718 = vshll.u32 %v3626, 16
      %v3720 = vrot.slane %v3718, 5
      %v3721 = vor.u32 %v3717, %v3720
      %v3722 = vsel %vm1501, %v3712, %v3721
      %v3724 = vshrl.u32 %v3627, 16
      %v3726 = vrot.slane %v3724, 4
      %v3727 = vshll.u32 %v3627, 16
      %v3729 = vrot.slane %v3727, 5
      %v3730 = vor.u32 %v3726, %v3729
      %v3731 = vsel %vm1501, %v3721, %v3730
      %v3733 = vshrl.u32 %v3628, 16
      %v3735 = vrot.slane %v3733, 4
      %v3736 = vshll.u32 %v3628, 16
      %v3738 = vrot.slane %v3736, 5
      %v3739 = vor.u32 %v3735, %v3738
      %v3740 = vsel %vm1501, %v3730, %v3739
      %v3742 = vshrl.u32 %v3629, 16
      %v3744 = vrot.slane %v3742, 4
      %v3745 = vshll.u32 %v3629, 16
      %v3747 = vrot.slane %v3745, 5
      %v3748 = vor.u32 %v3744, %v3747
      %v3749 = vsel %vm1501, %v3739, %v3748
      %v3751 = vshrl.u32 %v3630, 16
      %v3753 = vrot.slane %v3751, 4
      %v3754 = vshll.u32 %v3630, 16
      %v3756 = vrot.slane %v3754, 5
      %v3757 = vor.u32 %v3753, %v3756
      %v3758 = vsel %vm1501, %v3748, %v3757
      %v3760 = vshrl.u32 %v3631, 16
      %v3762 = vrot.slane %v3760, 4
      %v3763 = vshll.u32 %v3631, 16
      %v3765 = vrot.slane %v3763, 5
      %v3766 = vor.u32 %v3762, %v3765
      %v3767 = vsel %vm1501, %v3757, %v3766
      %v3769 = vshrl.u32 %v3632, 16
      %v3771 = vrot.slane %v3769, 4
      %v3772 = vshll.u32 %v3632, 16
      %v3774 = vrot.slane %v3772, 5
      %v3775 = vor.u32 %v3771, %v3774
      %v3776 = vsel %vm1501, %v3766, %v3775
      %v3778 = vshrl.u32 %v3633, 16
      %v3780 = vrot.slane %v3778, 4
      %v3781 = vshll.u32 %v3633, 16
      %v3783 = vrot.slane %v3781, 5
      %v3784 = vor.u32 %v3780, %v3783
      %v3785 = vsel %vm1501, %v3775, %v3784
      %3786 = vrot.lane.b32.xlu0 %v3650, 16
      %v3787 = vpop.permute.xlu0 %3786
      %3788 = vrot.lane.b32.xlu0 %v3659, 16
      %v3789 = vpop.permute.xlu0 %3788
      %3790 = vrot.lane.b32.xlu0 %v3668, 16
      %v3791 = vpop.permute.xlu0 %3790
      %3792 = vrot.lane.b32.xlu0 %v3677, 16
      %v3793 = vpop.permute.xlu0 %3792
      %3794 = vrot.lane.b32.xlu0 %v3686, 16
      %v3795 = vpop.permute.xlu0 %3794
      %3796 = vrot.lane.b32.xlu0 %v3695, 16
      %v3797 = vpop.permute.xlu0 %3796
      %3798 = vrot.lane.b32.xlu0 %v3704, 16
      %v3799 = vpop.permute.xlu0 %3798
      %3800 = vrot.lane.b32.xlu0 %v3713, 16
      %v3801 = vpop.permute.xlu0 %3800
      %3802 = vrot.lane.b32.xlu0 %v3722, 16
      %v3803 = vpop.permute.xlu0 %3802
      %3804 = vrot.lane.b32.xlu0 %v3731, 16
      %v3805 = vpop.permute.xlu0 %3804
      %3806 = vrot.lane.b32.xlu0 %v3740, 16
      %v3807 = vpop.permute.xlu0 %3806
      %3808 = vrot.lane.b32.xlu0 %v3749, 16
      %v3809 = vpop.permute.xlu0 %3808
      %3810 = vrot.lane.b32.xlu0 %v3758, 16
      %v3811 = vpop.permute.xlu0 %3810
      %3812 = vrot.lane.b32.xlu0 %v3767, 16
      %v3813 = vpop.permute.xlu0 %3812
      %3814 = vrot.lane.b32.xlu0 %v3776, 16
      %v3815 = vpop.permute.xlu0 %3814
      %3816 = vrot.lane.b32.xlu0 %v3785, 16
      %v3817 = vpop.permute.xlu0 %3816
      %vm3834 = vcmask 146560
      %3835 = vst.msk [vmem:[#allocation3] sm:$0xff] %vm3834, %v3787
      %3836 = vst.msk [vmem:[#allocation3 + $0x8] sm:$0xff] %vm3834, %v3789
      %3837 = vst.msk [vmem:[#allocation3 + $0x10] sm:$0xff] %vm3834, %v3791
      %3838 = vst.msk [vmem:[#allocation3 + $0x18] sm:$0xff] %vm3834, %v3793
      %3839 = vst.msk [vmem:[#allocation3 + $0x20] sm:$0xff] %vm3834, %v3795
      %3840 = vst.msk [vmem:[#allocation3 + $0x28] sm:$0xff] %vm3834, %v3797
      %3841 = vst.msk [vmem:[#allocation3 + $0x30] sm:$0xff] %vm3834, %v3799
      %3842 = vst.msk [vmem:[#allocation3 + $0x38] sm:$0xff] %vm3834, %v3801
      %3843 = vst.msk [vmem:[#allocation3 + $0x40] sm:$0xff] %vm3834, %v3803
      %3844 = vst.msk [vmem:[#allocation3 + $0x48] sm:$0xff] %vm3834, %v3805
      %3845 = vst.msk [vmem:[#allocation3 + $0x50] sm:$0xff] %vm3834, %v3807
      %3846 = vst.msk [vmem:[#allocation3 + $0x58] sm:$0xff] %vm3834, %v3809
      %3847 = vst.msk [vmem:[#allocation3 + $0x60] sm:$0xff] %vm3834, %v3811
      %3848 = vst.msk [vmem:[#allocation3 + $0x68] sm:$0xff] %vm3834, %v3813
      %3849 = vst.msk [vmem:[#allocation3 + $0x70] sm:$0xff] %vm3834, %v3815
      %3850 = vst.msk [vmem:[#allocation3 + $0x78] sm:$0xff] %vm3834, %v3817
      %v3851 = vld [vmem:[#allocation3] sm:$0xff]
      %v3852 = vld [vmem:[#allocation3 + $0x8] sm:$0xff]
      %v3853 = vld [vmem:[#allocation3 + $0x10] sm:$0xff]
      %v3854 = vld [vmem:[#allocation3 + $0x18] sm:$0xff]
      %v3855 = vld [vmem:[#allocation3 + $0x20] sm:$0xff]
      %v3856 = vld [vmem:[#allocation3 + $0x28] sm:$0xff]
      %v3857 = vld [vmem:[#allocation3 + $0x30] sm:$0xff]
      %v3858 = vld [vmem:[#allocation3 + $0x38] sm:$0xff]
      %v3859 = vld [vmem:[#allocation3 + $0x40] sm:$0xff]
      %v3860 = vld [vmem:[#allocation3 + $0x48] sm:$0xff]
      %v3861 = vld [vmem:[#allocation3 + $0x50] sm:$0xff]
      %v3862 = vld [vmem:[#allocation3 + $0x58] sm:$0xff]
      %v3863 = vld [vmem:[#allocation3 + $0x60] sm:$0xff]
      %v3864 = vld [vmem:[#allocation3 + $0x68] sm:$0xff]
      %v3865 = vld [vmem:[#allocation3 + $0x70] sm:$0xff]
      %v3866 = vld [vmem:[#allocation3 + $0x78] sm:$0xff]
      %v3867 = vld [vmem:[%s3] sm:$0xf]
      %v3868 = vld [vmem:[%s3 + $0x4] sm:$0xf]
      %v3869 = vld [vmem:[%s3 + $0x8] sm:$0x1]
      %v3870 = vld [vmem:[%s4] sm:$0x1]
      %v3872 = vlaneseq
      %v3873 = vshrl.u32 %v3872, 7
      %v3874 = vsub.s32 0, %v3873
      %v3875 = vrot.slane %v3870, %v3874
      %v3880 = vunpack.c.l.b16 %v3867
      %v3881 = vunpack.c.l.b16 %v3868
      %v3882 = vunpack.c.l.b16 %v3869
      %v3883 = vpack.c.b16 %v3881, %v3880
      %v3884 = vpack.c.b16 %v3882, %v3882
      %vm3886 = vcmask 146432
      %v3888 = vsel %vm3886, %v3851, 0
      %v3891 = vsel %vm3886, %v3852, 0
      %v3894 = vsel %vm3886, %v3853, 0
      %v3897 = vsel %vm3886, %v3854, 0
      %v3900 = vsel %vm3886, %v3855, 0
      %v3903 = vsel %vm3886, %v3856, 0
      %v3906 = vsel %vm3886, %v3857, 0
      %v3909 = vsel %vm3886, %v3858, 0
      %v3912 = vsel %vm3886, %v3859, 0
      %v3915 = vsel %vm3886, %v3860, 0
      %v3918 = vsel %vm3886, %v3861, 0
      %v3921 = vsel %vm3886, %v3862, 0
      %v3924 = vsel %vm3886, %v3863, 0
      %v3927 = vsel %vm3886, %v3864, 0
      %v3930 = vsel %vm3886, %v3865, 0
      %v3933 = vsel %vm3886, %v3866, 0
      %vm3935 = vcmask 1040384
      %v3937 = vsel %vm3935, %v3884, 0
      %3939 = vmatprep.subr.bf16.mxu0 0
      %3940 = vmatpush1.bf16.msra.mxu0 %v3883
      %3941 = vmatprep.subr.bf16.mxu0 0
      %3942 = vmatpush1.bf16.msra.mxu0 %v3937
      %3943 = vmatprep.subr.bf16.mxu0 0
      %3944 = vmatpush1.bf16.msra.mxu0 0
      %3945 = vmatprep.subr.bf16.mxu0 0
      %3946 = vmatpush1.bf16.msra.mxu0 0
      %3947 = vmatprep.subr.bf16.mxu0 0
      %3948 = vmatpush1.bf16.msra.mxu0 0
      %3949 = vmatprep.subr.bf16.mxu0 0
      %3950 = vmatpush1.bf16.msra.mxu0 0
      %3951 = vmatprep.subr.bf16.mxu0 0
      %3952 = vmatpush1.bf16.msra.mxu0 0
      %3953 = vmatprep.subr.bf16.mxu0 0
      %3954 = vmatpush1.bf16.msra.mxu0 0
      %3955 = vmatprep.subr.bf16.mxu0 0
      %3956 = vmatpush1.bf16.msra.mxu0 0
      %3957 = vmatprep.subr.bf16.mxu0 0
      %3958 = vmatpush1.bf16.msra.mxu0 0
      %3959 = vmatprep.subr.bf16.mxu0 0
      %3960 = vmatpush1.bf16.msra.mxu0 0
      %3961 = vmatprep.subr.bf16.mxu0 0
      %3962 = vmatpush1.bf16.msra.mxu0 0
      %3963 = vmatprep.subr.bf16.mxu0 0
      %3964 = vmatpush1.bf16.msra.mxu0 0
      %3965 = vmatprep.subr.bf16.mxu0 0
      %3966 = vmatpush1.bf16.msra.mxu0 0
      %3967 = vmatprep.subr.bf16.mxu0 0
      %3968 = vmatpush1.bf16.msra.mxu0 0
      %3969 = vmatprep.subr.bf16.mxu0 0
      %3970 = vmatpush1.bf16.msra.mxu0 0
      %3971 = vmatprep.mubr.bf16.mxu0 0
      %3972 = vmatmul.mubr.bf16.gmra.mrb[0].mxu0 %v3888
      %v3973 = vpop.f32.mrb[0].mxu0
      %v3974 = vadd.f32 %v3875, %v3973
      %v3975 = vpop.f32.mrb[0].mxu0
      %v3976 = vpop.f32.mrb[0].mxu0
      %v3977 = vadd.f32 %v3875, %v3976
      %v3978 = vpop.f32.mrb[0].mxu0
      %3979 = vmatprep.mubr.bf16.mxu0 0
      %3980 = vmatmul.mubr.bf16.gmra.mrb[0].mxu0 %v3891
      %v3981 = vpop.f32.mrb[0].mxu0
      %v3982 = vadd.f32 %v3875, %v3981
      %v3983 = vpop.f32.mrb[0].mxu0
      %v3984 = vpop.f32.mrb[0].mxu0
      %v3985 = vadd.f32 %v3875, %v3984
      %v3986 = vpop.f32.mrb[0].mxu0
      %3987 = vmatprep.mubr.bf16.mxu0 0
      %3988 = vmatmul.mubr.bf16.gmra.mrb[0].mxu0 %v3894
      %v3989 = vpop.f32.mrb[0].mxu0
      %v3990 = vadd.f32 %v3875, %v3989
      %v3991 = vpop.f32.mrb[0].mxu0
      %v3992 = vpop.f32.mrb[0].mxu0
      %v3993 = vadd.f32 %v3875, %v3992
      %v3994 = vpop.f32.mrb[0].mxu0
      %3995 = vmatprep.mubr.bf16.mxu0 0
      %3996 = vmatmul.mubr.bf16.gmra.mrb[0].mxu0 %v3897
      %v3997 = vpop.f32.mrb[0].mxu0
      %v3998 = vadd.f32 %v3875, %v3997
      %v3999 = vpop.f32.mrb[0].mxu0
      %v4000 = vpop.f32.mrb[0].mxu0
      %v4001 = vadd.f32 %v3875, %v4000
      %v4002 = vpop.f32.mrb[0].mxu0
      %4003 = vmatprep.mubr.bf16.mxu0 0
      %4004 = vmatmul.mubr.bf16.gmra.mrb[0].mxu0 %v3900
      %v4005 = vpop.f32.mrb[0].mxu0
      %v4006 = vadd.f32 %v3875, %v4005
      %v4007 = vpop.f32.mrb[0].mxu0
      %v4008 = vpop.f32.mrb[0].mxu0
      %v4009 = vadd.f32 %v3875, %v4008
      %v4010 = vpop.f32.mrb[0].mxu0
      %4011 = vmatprep.mubr.bf16.mxu0 0
      %4012 = vmatmul.mubr.bf16.gmra.mrb[0].mxu0 %v3903
      %v4013 = vpop.f32.mrb[0].mxu0
      %v4014 = vadd.f32 %v3875, %v4013
      %v4015 = vpop.f32.mrb[0].mxu0
      %v4016 = vpop.f32.mrb[0].mxu0
      %v4017 = vadd.f32 %v3875, %v4016
      %v4018 = vpop.f32.mrb[0].mxu0
      %4019 = vmatprep.mubr.bf16.mxu0 0
      %4020 = vmatmul.mubr.bf16.gmra.mrb[0].mxu0 %v3906
      %v4021 = vpop.f32.mrb[0].mxu0
      %v4022 = vadd.f32 %v3875, %v4021
      %v4023 = vpop.f32.mrb[0].mxu0
      %v4024 = vpop.f32.mrb[0].mxu0
      %v4025 = vadd.f32 %v3875, %v4024
      %v4026 = vpop.f32.mrb[0].mxu0
      %4027 = vmatprep.mubr.bf16.mxu0 0
      %4028 = vmatmul.mubr.bf16.gmra.mrb[0].mxu0 %v3909
      %v4029 = vpop.f32.mrb[0].mxu0
      %v4030 = vadd.f32 %v3875, %v4029
      %v4031 = vpop.f32.mrb[0].mxu0
      %v4032 = vpop.f32.mrb[0].mxu0
      %v4033 = vadd.f32 %v3875, %v4032
      %v4034 = vpop.f32.mrb[0].mxu0
      %4035 = vmatprep.mubr.bf16.mxu0 0
      %4036 = vmatmul.mubr.bf16.gmra.mrb[0].mxu0 %v3912
      %v4037 = vpop.f32.mrb[0].mxu0
      %v4038 = vadd.f32 %v3875, %v4037
      %v4039 = vpop.f32.mrb[0].mxu0
      %v4040 = vpop.f32.mrb[0].mxu0
      %v4041 = vadd.f32 %v3875, %v4040
      %v4042 = vpop.f32.mrb[0].mxu0
      %4043 = vmatprep.mubr.bf16.mxu0 0
      %4044 = vmatmul.mubr.bf16.gmra.mrb[0].mxu0 %v3915
      %v4045 = vpop.f32.mrb[0].mxu0
      %v4046 = vadd.f32 %v3875, %v4045
      %v4047 = vpop.f32.mrb[0].mxu0
      %v4048 = vpop.f32.mrb[0].mxu0
      %v4049 = vadd.f32 %v3875, %v4048
      %v4050 = vpop.f32.mrb[0].mxu0
      %4051 = vmatprep.mubr.bf16.mxu0 0
      %4052 = vmatmul.mubr.bf16.gmra.mrb[0].mxu0 %v3918
      %v4053 = vpop.f32.mrb[0].mxu0
      %v4054 = vadd.f32 %v3875, %v4053
      %v4055 = vpop.f32.mrb[0].mxu0
      %v4056 = vpop.f32.mrb[0].mxu0
      %v4057 = vadd.f32 %v3875, %v4056
      %v4058 = vpop.f32.mrb[0].mxu0
      %4059 = vmatprep.mubr.bf16.mxu0 0
      %4060 = vmatmul.mubr.bf16.gmra.mrb[0].mxu0 %v3921
      %v4061 = vpop.f32.mrb[0].mxu0
      %v4062 = vadd.f32 %v3875, %v4061
      %v4063 = vpop.f32.mrb[0].mxu0
      %v4064 = vpop.f32.mrb[0].mxu0
      %v4065 = vadd.f32 %v3875, %v4064
      %v4066 = vpop.f32.mrb[0].mxu0
      %4067 = vmatprep.mubr.bf16.mxu0 0
      %4068 = vmatmul.mubr.bf16.gmra.mrb[0].mxu0 %v3924
      %v4069 = vpop.f32.mrb[0].mxu0
      %v4070 = vadd.f32 %v3875, %v4069
      %v4071 = vpop.f32.mrb[0].mxu0
      %v4072 = vpop.f32.mrb[0].mxu0
      %v4073 = vadd.f32 %v3875, %v4072
      %v4074 = vpop.f32.mrb[0].mxu0
      %4075 = vmatprep.mubr.bf16.mxu0 0
      %4076 = vmatmul.mubr.bf16.gmra.mrb[0].mxu0 %v3927
      %v4077 = vpop.f32.mrb[0].mxu0
      %v4078 = vadd.f32 %v3875, %v4077
      %v4079 = vpop.f32.mrb[0].mxu0
      %v4080 = vpop.f32.mrb[0].mxu0
      %v4081 = vadd.f32 %v3875, %v4080
      %v4082 = vpop.f32.mrb[0].mxu0
      %4083 = vmatprep.mubr.bf16.mxu0 0
      %4084 = vmatmul.mubr.bf16.gmra.mrb[0].mxu0 %v3930
      %v4085 = vpop.f32.mrb[0].mxu0
      %v4086 = vadd.f32 %v3875, %v4085
      %v4087 = vpop.f32.mrb[0].mxu0
      %v4088 = vpop.f32.mrb[0].mxu0
      %v4089 = vadd.f32 %v3875, %v4088
      %v4090 = vpop.f32.mrb[0].mxu0
      %4091 = vmatprep.mubr.bf16.mxu0 0
      %4092 = vmatmul.mubr.bf16.gmra.mrb[0].mxu0 %v3933
      %v4093 = vpop.f32.mrb[0].mxu0
      %v4094 = vadd.f32 %v3875, %v4093
      %v4095 = vpop.f32.mrb[0].mxu0
      %v4096 = vpop.f32.mrb[0].mxu0
      %v4097 = vadd.f32 %v3875, %v4096
      %v4098 = vpop.f32.mrb[0].mxu0
      %4099 = vdwg.mxu0
      %v4100 = vxor.u32 %v3974, 2147483648
      %v4101 = vxor.u32 %v3977, 2147483648
      %v4102 = vxor.u32 %v3982, 2147483648
      %v4103 = vxor.u32 %v3985, 2147483648
      %v4104 = vxor.u32 %v3990, 2147483648
      %v4105 = vxor.u32 %v3993, 2147483648
      %v4106 = vxor.u32 %v3998, 2147483648
      %v4107 = vxor.u32 %v4001, 2147483648
      %v4108 = vxor.u32 %v4006, 2147483648
      %v4109 = vxor.u32 %v4009, 2147483648
      %v4110 = vxor.u32 %v4014, 2147483648
      %v4111 = vxor.u32 %v4017, 2147483648
      %v4112 = vxor.u32 %v4022, 2147483648
      %v4113 = vxor.u32 %v4025, 2147483648
      %v4114 = vxor.u32 %v4030, 2147483648
      %v4115 = vxor.u32 %v4033, 2147483648
      %v4116 = vxor.u32 %v4038, 2147483648
      %v4117 = vxor.u32 %v4041, 2147483648
      %v4118 = vxor.u32 %v4046, 2147483648
      %v4119 = vxor.u32 %v4049, 2147483648
      %v4120 = vxor.u32 %v4054, 2147483648
      %v4121 = vxor.u32 %v4057, 2147483648
      %v4122 = vxor.u32 %v4062, 2147483648
      %v4123 = vxor.u32 %v4065, 2147483648
      %v4124 = vxor.u32 %v4070, 2147483648
      %v4125 = vxor.u32 %v4073, 2147483648
      %v4126 = vxor.u32 %v4078, 2147483648
      %v4127 = vxor.u32 %v4081, 2147483648
      %v4128 = vxor.u32 %v4086, 2147483648
      %v4129 = vxor.u32 %v4089, 2147483648
      %v4130 = vxor.u32 %v4094, 2147483648
      %v4131 = vxor.u32 %v4097, 2147483648
      %v4132 = vmul.f32 %v4100, 1.442695
      %v4133 = vpow.pop %v4132
      %v4134 = vmul.f32 %v4101, 1.442695
      %v4135 = vpow.pop %v4134
      %v4136 = vmul.f32 %v4102, 1.442695
      %v4137 = vpow.pop %v4136
      %v4138 = vmul.f32 %v4103, 1.442695
      %v4139 = vpow.pop %v4138
      %v4140 = vmul.f32 %v4104, 1.442695
      %v4141 = vpow.pop %v4140
      %v4142 = vmul.f32 %v4105, 1.442695
      %v4143 = vpow.pop %v4142
      %v4144 = vmul.f32 %v4106, 1.442695
      %v4145 = vpow.pop %v4144
      %v4146 = vmul.f32 %v4107, 1.442695
      %v4147 = vpow.pop %v4146
      %v4148 = vmul.f32 %v4108, 1.442695
      %v4149 = vpow.pop %v4148
      %v4150 = vmul.f32 %v4109, 1.442695
      %v4151 = vpow.pop %v4150
      %v4152 = vmul.f32 %v4110, 1.442695
      %v4153 = vpow.pop %v4152
      %v4154 = vmul.f32 %v4111, 1.442695
      %v4155 = vpow.pop %v4154
      %v4156 = vmul.f32 %v4112, 1.442695
      %v4157 = vpow.pop %v4156
      %v4158 = vmul.f32 %v4113, 1.442695
      %v4159 = vpow.pop %v4158
      %v4160 = vmul.f32 %v4114, 1.442695
      %v4161 = vpow.pop %v4160
      %v4162 = vmul.f32 %v4115, 1.442695
      %v4163 = vpow.pop %v4162
      %v4164 = vmul.f32 %v4116, 1.442695
      %v4165 = vpow.pop %v4164
      %v4166 = vmul.f32 %v4117, 1.442695
      %v4167 = vpow.pop %v4166
      %v4168 = vmul.f32 %v4118, 1.442695
      %v4169 = vpow.pop %v4168
      %v4170 = vmul.f32 %v4119, 1.442695
      %v4171 = vpow.pop %v4170
      %v4172 = vmul.f32 %v4120, 1.442695
      %v4173 = vpow.pop %v4172
      %v4174 = vmul.f32 %v4121, 1.442695
      %v4175 = vpow.pop %v4174
      %v4176 = vmul.f32 %v4122, 1.442695
      %v4177 = vpow.pop %v4176
      %v4178 = vmul.f32 %v4123, 1.442695
      %v4179 = vpow.pop %v4178
      %v4180 = vmul.f32 %v4124, 1.442695
      %v4181 = vpow.pop %v4180
      %v4182 = vmul.f32 %v4125, 1.442695
      %v4183 = vpow.pop %v4182
      %v4184 = vmul.f32 %v4126, 1.442695
      %v4185 = vpow.pop %v4184
      %v4186 = vmul.f32 %v4127, 1.442695
      %v4187 = vpow.pop %v4186
      %v4188 = vmul.f32 %v4128, 1.442695
      %v4189 = vpow.pop %v4188
      %v4190 = vmul.f32 %v4129, 1.442695
      %v4191 = vpow.pop %v4190
      %v4192 = vmul.f32 %v4130, 1.442695
      %v4193 = vpow.pop %v4192
      %v4194 = vmul.f32 %v4131, 1.442695
      %v4195 = vpow.pop %v4194
      %v4196 = vadd.f32 %v4133, 1.0
      %v4197 = vadd.f32 %v4135, 1.0
      %v4198 = vadd.f32 %v4137, 1.0
      %v4199 = vadd.f32 %v4139, 1.0
      %v4200 = vadd.f32 %v4141, 1.0
      %v4201 = vadd.f32 %v4143, 1.0
      %v4202 = vadd.f32 %v4145, 1.0
      %v4203 = vadd.f32 %v4147, 1.0
      %v4204 = vadd.f32 %v4149, 1.0
      %v4205 = vadd.f32 %v4151, 1.0
      %v4206 = vadd.f32 %v4153, 1.0
      %v4207 = vadd.f32 %v4155, 1.0
      %v4208 = vadd.f32 %v4157, 1.0
      %v4209 = vadd.f32 %v4159, 1.0
      %v4210 = vadd.f32 %v4161, 1.0
      %v4211 = vadd.f32 %v4163, 1.0
      %v4212 = vadd.f32 %v4165, 1.0
      %v4213 = vadd.f32 %v4167, 1.0
      %v4214 = vadd.f32 %v4169, 1.0
      %v4215 = vadd.f32 %v4171, 1.0
      %v4216 = vadd.f32 %v4173, 1.0
      %v4217 = vadd.f32 %v4175, 1.0
      %v4218 = vadd.f32 %v4177, 1.0
      %v4219 = vadd.f32 %v4179, 1.0
      %v4220 = vadd.f32 %v4181, 1.0
      %v4221 = vadd.f32 %v4183, 1.0
      %v4222 = vadd.f32 %v4185, 1.0
      %v4223 = vadd.f32 %v4187, 1.0
      %v4224 = vadd.f32 %v4189, 1.0
      %v4225 = vadd.f32 %v4191, 1.0
      %v4226 = vadd.f32 %v4193, 1.0
      %v4227 = vadd.f32 %v4195, 1.0
      %v4228 = vrcp.pop %v4196
      %v4229 = vmul.f32 1.0, %v4228
      %v4230 = vrcp.pop %v4197
      %v4231 = vmul.f32 1.0, %v4230
      %v4232 = vrcp.pop %v4198
      %v4233 = vmul.f32 1.0, %v4232
      %v4234 = vrcp.pop %v4199
      %v4235 = vmul.f32 1.0, %v4234
      %v4236 = vrcp.pop %v4200
      %v4237 = vmul.f32 1.0, %v4236
      %v4238 = vrcp.pop %v4201
      %v4239 = vmul.f32 1.0, %v4238
      %v4240 = vrcp.pop %v4202
      %v4241 = vmul.f32 1.0, %v4240
      %v4242 = vrcp.pop %v4203
      %v4243 = vmul.f32 1.0, %v4242
      %v4244 = vrcp.pop %v4204
      %v4245 = vmul.f32 1.0, %v4244
      %v4246 = vrcp.pop %v4205
      %v4247 = vmul.f32 1.0, %v4246
      %v4248 = vrcp.pop %v4206
      %v4249 = vmul.f32 1.0, %v4248
      %v4250 = vrcp.pop %v4207
      %v4251 = vmul.f32 1.0, %v4250
      %v4252 = vrcp.pop %v4208
      %v4253 = vmul.f32 1.0, %v4252
      %v4254 = vrcp.pop %v4209
      %v4255 = vmul.f32 1.0, %v4254
      %v4256 = vrcp.pop %v4210
      %v4257 = vmul.f32 1.0, %v4256
      %v4258 = vrcp.pop %v4211
      %v4259 = vmul.f32 1.0, %v4258
      %v4260 = vrcp.pop %v4212
      %v4261 = vmul.f32 1.0, %v4260
      %v4262 = vrcp.pop %v4213
      %v4263 = vmul.f32 1.0, %v4262
      %v4264 = vrcp.pop %v4214
      %v4265 = vmul.f32 1.0, %v4264
      %v4266 = vrcp.pop %v4215
      %v4267 = vmul.f32 1.0, %v4266
      %v4268 = vrcp.pop %v4216
      %v4269 = vmul.f32 1.0, %v4268
      %v4270 = vrcp.pop %v4217
      %v4271 = vmul.f32 1.0, %v4270
      %v4272 = vrcp.pop %v4218
      %v4273 = vmul.f32 1.0, %v4272
      %v4274 = vrcp.pop %v4219
      %v4275 = vmul.f32 1.0, %v4274
      %v4276 = vrcp.pop %v4220
      %v4277 = vmul.f32 1.0, %v4276
      %v4278 = vrcp.pop %v4221
      %v4279 = vmul.f32 1.0, %v4278
      %v4280 = vrcp.pop %v4222
      %v4281 = vmul.f32 1.0, %v4280
      %v4282 = vrcp.pop %v4223
      %v4283 = vmul.f32 1.0, %v4282
      %v4284 = vrcp.pop %v4224
      %v4285 = vmul.f32 1.0, %v4284
      %v4286 = vrcp.pop %v4225
      %v4287 = vmul.f32 1.0, %v4286
      %v4288 = vrcp.pop %v4226
      %v4289 = vmul.f32 1.0, %v4288
      %v4290 = vrcp.pop %v4227
      %v4291 = vmul.f32 1.0, %v4290
      %v4292 = vmul.f32 %v3974, %v4229
      %v4293 = vmul.f32 %v3977, %v4231
      %v4294 = vmul.f32 %v3982, %v4233
      %v4295 = vmul.f32 %v3985, %v4235
      %v4296 = vmul.f32 %v3990, %v4237
      %v4297 = vmul.f32 %v3993, %v4239
      %v4298 = vmul.f32 %v3998, %v4241
      %v4299 = vmul.f32 %v4001, %v4243
      %v4300 = vmul.f32 %v4006, %v4245
      %v4301 = vmul.f32 %v4009, %v4247
      %v4302 = vmul.f32 %v4014, %v4249
      %v4303 = vmul.f32 %v4017, %v4251
      %v4304 = vmul.f32 %v4022, %v4253
      %v4305 = vmul.f32 %v4025, %v4255
      %v4306 = vmul.f32 %v4030, %v4257
      %v4307 = vmul.f32 %v4033, %v4259
      %v4308 = vmul.f32 %v4038, %v4261
      %v4309 = vmul.f32 %v4041, %v4263
      %v4310 = vmul.f32 %v4046, %v4265
      %v4311 = vmul.f32 %v4049, %v4267
      %v4312 = vmul.f32 %v4054, %v4269
      %v4313 = vmul.f32 %v4057, %v4271
      %v4314 = vmul.f32 %v4062, %v4273
      %v4315 = vmul.f32 %v4065, %v4275
      %v4316 = vmul.f32 %v4070, %v4277
      %v4317 = vmul.f32 %v4073, %v4279
      %v4318 = vmul.f32 %v4078, %v4281
      %v4319 = vmul.f32 %v4081, %v4283
      %v4320 = vmul.f32 %v4086, %v4285
      %v4321 = vmul.f32 %v4089, %v4287
      %v4322 = vmul.f32 %v4094, %v4289
      %v4323 = vmul.f32 %v4097, %v4291
      %v4324 = vadd.f32 %v4292, %v228
      %v4325 = vadd.f32 %v4293, %v229
      %v4326 = vadd.f32 %v4294, %v230
      %v4327 = vadd.f32 %v4295, %v231
      %v4328 = vadd.f32 %v4296, %v232
      %v4329 = vadd.f32 %v4297, %v233
      %v4330 = vadd.f32 %v4298, %v234
      %v4331 = vadd.f32 %v4299, %v235
      %v4332 = vadd.f32 %v4300, %v236
      %v4333 = vadd.f32 %v4301, %v237
      %v4334 = vadd.f32 %v4302, %v238
      %v4335 = vadd.f32 %v4303, %v239
      %v4336 = vadd.f32 %v4304, %v240
      %v4337 = vadd.f32 %v4305, %v241
      %v4338 = vadd.f32 %v4306, %v242
      %v4339 = vadd.f32 %v4307, %v243
      %v4340 = vadd.f32 %v4308, %v244
      %v4341 = vadd.f32 %v4309, %v245
      %v4342 = vadd.f32 %v4310, %v246
      %v4343 = vadd.f32 %v4311, %v247
      %v4344 = vadd.f32 %v4312, %v248
      %v4345 = vadd.f32 %v4313, %v249
      %v4346 = vadd.f32 %v4314, %v250
      %v4347 = vadd.f32 %v4315, %v251
      %v4348 = vadd.f32 %v4316, %v252
      %v4349 = vadd.f32 %v4317, %v253
      %v4350 = vadd.f32 %v4318, %v254
      %v4351 = vadd.f32 %v4319, %v255
      %v4352 = vadd.f32 %v4320, %v256
      %v4353 = vadd.f32 %v4321, %v257
      %v4354 = vadd.f32 %v4322, %v258
      %v4355 = vadd.f32 %v4323, %v259
      %4356 = vst.msk [vmem:[%s224] sm:$0xff] %vm284, %v4324
      %4357 = vst.msk [vmem:[%s224 + $0x8] sm:$0xff] %vm284, %v4325
      %4358 = vst.msk [vmem:[%s224 + $0x10] sm:$0xff] %vm284, %v4326
      %4359 = vst.msk [vmem:[%s224 + $0x18] sm:$0xff] %vm284, %v4327
      %4360 = vst.msk [vmem:[%s224 + $0x20] sm:$0xff] %vm284, %v4328
      %4361 = vst.msk [vmem:[%s224 + $0x28] sm:$0xff] %vm284, %v4329
      %4362 = vst.msk [vmem:[%s224 + $0x30] sm:$0xff] %vm284, %v4330
      %4363 = vst.msk [vmem:[%s224 + $0x38] sm:$0xff] %vm284, %v4331
      %4364 = vst.msk [vmem:[%s224 + $0x40] sm:$0xff] %vm284, %v4332
      %4365 = vst.msk [vmem:[%s224 + $0x48] sm:$0xff] %vm284, %v4333
      %4366 = vst.msk [vmem:[%s224 + $0x50] sm:$0xff] %vm284, %v4334
      %4367 = vst.msk [vmem:[%s224 + $0x58] sm:$0xff] %vm284, %v4335
      %4368 = vst.msk [vmem:[%s224 + $0x60] sm:$0xff] %vm284, %v4336
      %4369 = vst.msk [vmem:[%s224 + $0x68] sm:$0xff] %vm284, %v4337
      %4370 = vst.msk [vmem:[%s224 + $0x70] sm:$0xff] %vm284, %v4338
      %4371 = vst.msk [vmem:[%s224 + $0x78] sm:$0xff] %vm284, %v4339
      %4372 = vst.msk [vmem:[%s224 + $0x80] sm:$0xff] %vm284, %v4340
      %4373 = vst.msk [vmem:[%s224 + $0x88] sm:$0xff] %vm284, %v4341
      %4374 = vst.msk [vmem:[%s224 + $0x90] sm:$0xff] %vm284, %v4342
      %4375 = vst.msk [vmem:[%s224 + $0x98] sm:$0xff] %vm284, %v4343
      %4376 = vst.msk [vmem:[%s224 + $0xa0] sm:$0xff] %vm284, %v4344
      %4377 = vst.msk [vmem:[%s224 + $0xa8] sm:$0xff] %vm284, %v4345
      %4378 = vst.msk [vmem:[%s224 + $0xb0] sm:$0xff] %vm284, %v4346
      %4379 = vst.msk [vmem:[%s224 + $0xb8] sm:$0xff] %vm284, %v4347
      %4380 = vst.msk [vmem:[%s224 + $0xc0] sm:$0xff] %vm284, %v4348
      %4381 = vst.msk [vmem:[%s224 + $0xc8] sm:$0xff] %vm284, %v4349
      %4382 = vst.msk [vmem:[%s224 + $0xd0] sm:$0xff] %vm284, %v4350
      %4383 = vst.msk [vmem:[%s224 + $0xd8] sm:$0xff] %vm284, %v4351
      %4384 = vst.msk [vmem:[%s224 + $0xe0] sm:$0xff] %vm284, %v4352
      %4385 = vst.msk [vmem:[%s224 + $0xe8] sm:$0xff] %vm284, %v4353
      %4386 = vst.msk [vmem:[%s224 + $0xf0] sm:$0xff] %vm284, %v4354
      %4387 = vst.msk [vmem:[%s224 + $0xf8] sm:$0xff] %vm284, %v4355
      %p4388 = scmp.lt.s32.totalorder %s16, 1
      %s4389 = scalar_select %p4388, %s16, 1
      %s4390 = smul.addr %s4389, 32
      %s4391 = smul.addr %s4390, 8
      %s4392 = scalar_lea.vmem %s5, %s4391
      // Predicated region
      $region41: #{tpu_custom_call.1} parent=39 // pred_check
        %p4393 = pneg %p144
      $region42: #{tpu_custom_call.1} parent=39 // pred_check_branch
        %4395 = sbr.rel (%p4393) target = $region44
      $region43: #{tpu_custom_call.1} parent=39 // pred_region
        _
      $region44: #{tpu_custom_call.1} parent=39 // pred_fallthru
        _
    $region40: #{tpu_custom_call.1} parent=5 // pred_fallthru
      _
    %p4396 = scmp.le.s32.totalorder 2, %s11
    // Predicated region
    $region45: #{tpu_custom_call.1} parent=5 // pred_check
      %p4397 = pneg %p4396
    $region46: #{tpu_custom_call.1} parent=5 // pred_check_branch
      %4399 = sbr.rel (%p4397) target = $region48
    $region47: #{tpu_custom_call.1} parent=5 // pred_region
      %s4400 = ssub.s32 %s11, 2
      // Predicated region
      $region49: #{tpu_custom_call.1} parent=47 // pred_check
        %p4401 = pneg %p150
      $region50: #{tpu_custom_call.1} parent=47 // pred_check_branch
        %4403 = sbr.rel (%p4401) target = $region52
      $region51: #{tpu_custom_call.1} parent=47 // pred_region
        %p4404 = scmp.lt.s32.totalorder %s17, 1
        %s4405 = scalar_select %p4404, %s17, 1
        %s4406 = smul.addr %s4405, 32
        %s4407 = smul.addr %s4406, 8
        %s4408 = scalar_lea.vmem %s5, %s4407
      $region52: #{tpu_custom_call.1} parent=47 // pred_fallthru
        _
    $region48: #{tpu_custom_call.1} parent=5 // pred_fallthru
      _
  $region6: #{tpu_custom_call.1} parent=0 // loop_footer
    %s15 = sadd.s32 1, %s11
  $region7: #{tpu_custom_call.1} parent=0 // loop_footer_branch
    %10 = sbr.rel target = $region3
  $region8: #{tpu_custom_call.1} parent=0 // loop_exit
    _

</llo_original>
